<compile_context>
chip_gen: v7x
topology: tpu7x:2x2x1
jax: 0.10.0
libtpu: 0.0.40
codegen_flags: <defaults>
</compile_context>

<pallas_src>
import functools

import jax
import jax.numpy as jnp
from jax.experimental import pallas as pl
from jax.experimental.pallas import tpu as pltpu

HIDDEN = 1024          # cls_fc: Linear(1024, 1024)
INSTANCE_NUM = 81      # cfg.MODEL.RELATION_HEADS.INSTANCE_NUM (COCO-ish)
C_PAD = 128            # instance_num padded to lane width for the kernel
NEG_INF = -1e30


def _instance_encoder_kernel(x_ref, w1_ref, b1_ref, w2_ref, b2_ref,
                             feat_ref, logit_ref):
    # x_ref:  (TM, 1024)  bf16      w1_ref: (1024, 1024) bf16   b1_ref: (1, 1024) f32
    # w2_ref: (1024, C_PAD) bf16    b2_ref: (1, C_PAD)   f32
    x = x_ref[...]

    # cls_fc + ReLU  (bf16 MXU, f32 accumulation, bias added in f32)
    h = jnp.dot(x, w1_ref[...], preferred_element_type=jnp.float32) + b1_ref[...]
    h = jnp.maximum(h, 0.0)
    feat_ref[...] = h.astype(feat_ref.dtype)

    # cls_score: padded class columns of W2 are zero and their bias is -1e30,
    # so they die under softmax without any in-kernel masking.
    p = jnp.dot(h.astype(jnp.bfloat16), w2_ref[...],
                preferred_element_type=jnp.float32) + b2_ref[...]

    # softmax over classes (dim=1); divide goes to the EUP slot.
    m = jnp.max(p, axis=-1, keepdims=True)
    e = jnp.exp(p - m)
    s = jnp.sum(e, axis=-1, keepdims=True)
    logit_ref[...] = (e * pl.reciprocal(s, approx=True)).astype(logit_ref.dtype)


@functools.partial(jax.jit, static_argnames=("tm",))
def instance_encoder_pallas(x_pad, w1, b1, w2_pad, b2_pad, *, tm):
    n_pad = x_pad.shape[0]
    grid = (n_pad // tm,)
    feat, logits = pl.pallas_call(
        _instance_encoder_kernel,
        out_shape=(
            jax.ShapeDtypeStruct((n_pad, HIDDEN), jnp.bfloat16),
            jax.ShapeDtypeStruct((n_pad, C_PAD), jnp.float32),
        ),
        grid_spec=pltpu.PrefetchScalarGridSpec(
            num_scalar_prefetch=0,
            grid=grid,
            in_specs=[
                pl.BlockSpec((tm, HIDDEN), lambda i: (i, 0)),        # x rows
                pl.BlockSpec((HIDDEN, HIDDEN), lambda i: (0, 0)),    # W1 (resident)
                pl.BlockSpec((1, HIDDEN), lambda i: (0, 0)),         # b1 (resident)
                pl.BlockSpec((HIDDEN, C_PAD), lambda i: (0, 0)),     # W2 (resident)
                pl.BlockSpec((1, C_PAD), lambda i: (0, 0)),          # b2 (resident)
            ],
            out_specs=[
                pl.BlockSpec((tm, HIDDEN), lambda i: (i, 0)),        # feat
                pl.BlockSpec((tm, C_PAD), lambda i: (i, 0)),         # softmax logits
            ],
        ),
        compiler_params=pltpu.CompilerParams(
            # row-parallel grid: megacore splits the row tiles across v7x's 2 TCs
            dimension_semantics=("parallel",),
        ),
    )(x_pad, w1, b1, w2_pad, b2_pad)
    return feat, logits


def init_params(key):
    """Deterministic nn.Linear-style init (uniform(-1/sqrt(fan_in), 1/sqrt(fan_in)))."""
    k1, k2, k3, k4 = jax.random.split(key, 4)
    lim1 = 1.0 / jnp.sqrt(jnp.float32(HIDDEN))
    w1 = jax.random.uniform(k1, (HIDDEN, HIDDEN), jnp.float32, -lim1, lim1)
    b1 = jax.random.uniform(k2, (1, HIDDEN), jnp.float32, -lim1, lim1)
    w2 = jax.random.uniform(k3, (HIDDEN, INSTANCE_NUM), jnp.float32, -lim1, lim1)
    b2 = jax.random.uniform(k4, (1, INSTANCE_NUM), jnp.float32, -lim1, lim1)
    # bf16 weights for the MXU; f32 biases (added post-accumulation).
    # Padded class columns: W2 = 0, bias = -1e30, so padded logits vanish in softmax.
    w1_b = w1.astype(jnp.bfloat16)
    w2_pad = (jnp.zeros((HIDDEN, C_PAD), jnp.float32)
              .at[:, :INSTANCE_NUM].set(w2)).astype(jnp.bfloat16)
    b2_pad = jnp.full((1, C_PAD), NEG_INF, jnp.float32).at[:, :INSTANCE_NUM].set(b2)
    return w1_b, b1, w2_pad, b2_pad


def instance_encoder_forward(params, pred_instance_box_features, pred_classes_list,
                             pred_gt_classes_list, training=True):
    """Mirrors InstanceEncoder1.forward (mask_on=False branch)."""
    w1, b1, w2_pad, b2_pad = params
    pred_instance_nums = [int(f.shape[0]) for f in pred_instance_box_features]
    x_mix = jnp.concatenate(pred_instance_box_features, axis=0)
    n = x_mix.shape[0]

    # Row tile: 128 keeps >= 2 parallel grid steps at modest N (uses both v7x TCs);
    # 256 matches the 256-wide v6e/v7x MXU once N is large.
    tm = 256 if n > 512 else 128
    n_pad = ((n + tm - 1) // tm) * tm
    x_pad = jnp.zeros((n_pad, HIDDEN), jnp.bfloat16).at[:n].set(
        x_mix.astype(jnp.bfloat16))

    feat_pad, logits_pad = instance_encoder_pallas(x_pad, w1, b1, w2_pad, b2_pad, tm=tm)
    feat_mix = feat_pad[:n]
    logits_mix = logits_pad[:n, :INSTANCE_NUM]   # softmax(cls_score(relu(cls_fc(x))))

    losses, metrics = {}, {}
    if training:
        pred_classes_mix = jnp.concatenate(pred_classes_list).astype(jnp.int32)
        pred_gt_classes_mix = jnp.concatenate(pred_gt_classes_list).astype(jnp.int32)
        # nn.CrossEntropyLoss applied to the already-softmaxed logits (as in the
        # PyTorch module): it re-applies log_softmax internally.
        log_probs = jax.nn.log_softmax(logits_mix, axis=1)
        nll = -jnp.take_along_axis(log_probs, pred_gt_classes_mix[:, None], axis=1)[:, 0]
        losses["pred_class_loss"] = jnp.mean(nll)
        pred_instance_score_mix = jnp.argmax(logits_mix, axis=1).astype(jnp.int32)
        # metrics stay as device arrays: no device->host sync in the hot path.
        metrics["pred_class_tp"] = jnp.sum(pred_instance_score_mix == pred_gt_classes_mix)
        metrics["pred_class_p"] = pred_gt_classes_mix.shape[0]
        metrics["raw_pred_class_tp"] = jnp.sum(pred_classes_mix == pred_gt_classes_mix)
        metrics["raw_pred_class_p"] = pred_gt_classes_mix.shape[0]

    # split back per image, like tensor.split(pred_instance_nums); offsets are Python
    # ints so slicing does not force any device->host sync.
    offsets = [0]
    for k in pred_instance_nums:
        offsets.append(offsets[-1] + k)
    feats_split = tuple(feat_mix[offsets[i]:offsets[i + 1]]
                        for i in range(len(pred_instance_nums)))
    logits_split = tuple(logits_mix[offsets[i]:offsets[i + 1]]
                         for i in range(len(pred_instance_nums)))
    return feats_split, logits_split, losses, metrics
    # TODO(synk): mask_on branch (mask_fc1/mask_fc2/feature_fc1) is defined in __init__
    # but never used in this forward; not implemented.


if __name__ == "__main__":
    key = jax.random.PRNGKey(0)
    kp, kx, kc, kg = jax.random.split(key, 4)
    params = init_params(kp)

    # two "images" with 5 and 3 predicted instances, each with 1024-d box features
    nums = [5, 3]
    feats_all = jax.random.normal(kx, (sum(nums), HIDDEN), jnp.float32)
    box_feats = [feats_all[:nums[0]], feats_all[nums[0]:]]
    classes_all = jax.random.randint(kc, (sum(nums),), 0, INSTANCE_NUM)
    gt_all = jax.random.randint(kg, (sum(nums),), 0, INSTANCE_NUM)
    pred_classes = [classes_all[:nums[0]], classes_all[nums[0]:]]
    pred_gt_classes = [gt_all[:nums[0]], gt_all[nums[0]:]]

    feats, logits, losses, metrics = instance_encoder_forward(
        params, box_feats, pred_classes, pred_gt_classes, training=True)

    jax.block_until_ready(feats)
    jax.block_until_ready(logits)
    jax.block_until_ready(losses["pred_class_loss"])
    jax.block_until_ready(metrics["pred_class_tp"])

    # sanity check vs. a bf16-matmul / f32-accumulate pure-JAX reference
    w1, b1, w2_pad, b2_pad = params
    x_bf = jnp.concatenate(box_feats, axis=0).astype(jnp.bfloat16)
    h_ref = jnp.maximum(
        jnp.dot(x_bf, w1, preferred_element_type=jnp.float32) + b1, 0.0)
    p_ref = jnp.dot(h_ref.astype(jnp.bfloat16), w2_pad[:, :INSTANCE_NUM],
                    preferred_element_type=jnp.float32) + b2_pad[:, :INSTANCE_NUM]
    l_ref = jax.nn.softmax(p_ref, axis=1)

    feat_out = jnp.concatenate(feats).astype(jnp.float32)
    logit_out = jnp.concatenate(logits)
    assert jnp.allclose(feat_out, h_ref, atol=3e-2, rtol=3e-2), "feat mismatch"
    assert jnp.allclose(logit_out, l_ref, atol=3e-2, rtol=3e-2), "logit mismatch"
    assert jnp.allclose(jnp.sum(logit_out, axis=1), 1.0, atol=1e-2), "softmax norm"

    print("KERNEL_OK")
</pallas_src>

<mosaic_0001>
module attributes {stable_mosaic.version = 11 : i64} {
  func.func @_instance_encoder_kernel(%arg0: i32, %arg1: memref<128x1024xbf16, #tpu.memory_space<vmem>>, %arg2: memref<1024x1024xbf16, #tpu.memory_space<vmem>>, %arg3: memref<1x1024xf32, #tpu.memory_space<vmem>>, %arg4: memref<1024x128xbf16, #tpu.memory_space<vmem>>, %arg5: memref<1x128xf32, #tpu.memory_space<vmem>>, %arg6: memref<128x1024xbf16, #tpu.memory_space<vmem>>, %arg7: memref<128x128xf32, #tpu.memory_space<vmem>>) attributes {dimension_semantics = [#tpu.dimension_semantics<parallel>], iteration_bounds = array<i64: 1>, scalar_prefetch = 0 : i64, scratch_operands = 0 : i64, tpu.core_type = #tpu.core_type<tc>, window_params = [{transform_indices = @transform_0, window_bounds = array<i64: 128, 1024>}, {pipeline_mode = #tpu.pipeline_mode<synchronous>, transform_indices = @transform_1, window_bounds = array<i64: 1024, 1024>}, {pipeline_mode = #tpu.pipeline_mode<synchronous>, transform_indices = @transform_2, window_bounds = array<i64: 1, 1024>}, {pipeline_mode = #tpu.pipeline_mode<synchronous>, transform_indices = @transform_3, window_bounds = array<i64: 1024, 128>}, {pipeline_mode = #tpu.pipeline_mode<synchronous>, transform_indices = @transform_4, window_bounds = array<i64: 1, 128>}, {transform_indices = @transform_5, window_bounds = array<i64: 128, 1024>}, {transform_indices = @transform_6, window_bounds = array<i64: 128, 128>}]} {
    %c0 = arith.constant 0 : index
    %c0_0 = arith.constant 0 : index
    %0 = vector.load %arg1[%c0, %c0_0] : memref<128x1024xbf16, #tpu.memory_space<vmem>>, vector<128x1024xbf16>
    %c0_1 = arith.constant 0 : index
    %c0_2 = arith.constant 0 : index
    %1 = vector.load %arg2[%c0_1, %c0_2] : memref<1024x1024xbf16, #tpu.memory_space<vmem>>, vector<1024x1024xbf16>
    %cst = arith.constant dense<0.000000e+00> : vector<128x1024xf32>
    %2 = tpu.matmul %0, %1, %cst {dimension_numbers = #tpu.dot_dimension_numbers<[1], [0], [0], [1], [0, 0, 1, 1], [], []>} : vector<128x1024xbf16>, vector<1024x1024xbf16>, vector<128x1024xf32> -> vector<128x1024xf32>
    %c0_3 = arith.constant 0 : index
    %c0_4 = arith.constant 0 : index
    %3 = vector.load %arg3[%c0_3, %c0_4] : memref<1x1024xf32, #tpu.memory_space<vmem>>, vector<1x1024xf32>
    %4 = vector.broadcast %3 : vector<1x1024xf32> to vector<128x1024xf32>
    %5 = arith.addf %2, %4 : vector<128x1024xf32>
    %cst_5 = arith.constant 0.000000e+00 : f32
    %6 = vector.broadcast %cst_5 : f32 to vector<128x1024xf32>
    %7 = arith.maximumf %5, %6 : vector<128x1024xf32>
    %8 = arith.truncf %7 : vector<128x1024xf32> to vector<128x1024xbf16>
    %c0_6 = arith.constant 0 : index
    %c0_7 = arith.constant 0 : index
    %9 = vector.load %arg6[%c0_6, %c0_7] : memref<128x1024xbf16, #tpu.memory_space<vmem>>, vector<128x1024xbf16>
    tpu.vector_store %arg6[%c0_6, %c0_7], %8 {strides = array<i32>} : memref<128x1024xbf16, #tpu.memory_space<vmem>>, vector<128x1024xbf16>,
    %10 = arith.truncf %7 : vector<128x1024xf32> to vector<128x1024xbf16>
    %c0_8 = arith.constant 0 : index
    %c0_9 = arith.constant 0 : index
    %11 = vector.load %arg4[%c0_8, %c0_9] : memref<1024x128xbf16, #tpu.memory_space<vmem>>, vector<1024x128xbf16>
    %cst_10 = arith.constant dense<0.000000e+00> : vector<128x128xf32>
    %12 = tpu.matmul %10, %11, %cst_10 {dimension_numbers = #tpu.dot_dimension_numbers<[1], [0], [0], [1], [0, 0, 1, 1], [], []>} : vector<128x1024xbf16>, vector<1024x128xbf16>, vector<128x128xf32> -> vector<128x128xf32>
    %c0_11 = arith.constant 0 : index
    %c0_12 = arith.constant 0 : index
    %13 = vector.load %arg5[%c0_11, %c0_12] : memref<1x128xf32, #tpu.memory_space<vmem>>, vector<1x128xf32>
    %14 = vector.broadcast %13 : vector<1x128xf32> to vector<128x128xf32>
    %15 = arith.addf %12, %14 : vector<128x128xf32>
    %cst_13 = arith.constant dense<0xFF800000> : vector<128xf32>
    %16 = vector.multi_reduction <maximumf>, %15, %cst_13 [1] : vector<128x128xf32> to vector<128xf32>
    %17 = vector.shape_cast %16 : vector<128xf32> to vector<128x1xf32>
    %18 = vector.broadcast %17 : vector<128x1xf32> to vector<128x128xf32>
    %19 = arith.subf %15, %18 : vector<128x128xf32>
    %20 = math.exp %19 : vector<128x128xf32>
    %cst_14 = arith.constant dense<0.000000e+00> : vector<128xf32>
    %21 = vector.multi_reduction <add>, %20, %cst_14 [1] : vector<128x128xf32> to vector<128xf32>
    %22 = vector.shape_cast %21 : vector<128xf32> to vector<128x1xf32>
    %23 = tpu.reciprocal %22 {approx = true} : vector<128x1xf32> -> vector<128x1xf32>
    %24 = vector.broadcast %23 : vector<128x1xf32> to vector<128x128xf32>
    %25 = arith.mulf %20, %24 : vector<128x128xf32>
    %c0_15 = arith.constant 0 : index
    %c0_16 = arith.constant 0 : index
    %26 = vector.load %arg7[%c0_15, %c0_16] : memref<128x128xf32, #tpu.memory_space<vmem>>, vector<128x128xf32>
    tpu.vector_store %arg7[%c0_15, %c0_16], %25 {strides = array<i32>} : memref<128x128xf32, #tpu.memory_space<vmem>>, vector<128x128xf32>,
    return
  }
  func.func @transform_0(%arg0: i32) -> (i32, i32) {
    %c0_i32 = arith.constant 0 : i32
    %c0_i32_0 = arith.constant 0 : i32
    return %arg0, %c0_i32 : i32, i32
  }
  func.func @transform_1(%arg0: i32) -> (i32, i32) {
    %c0_i32 = arith.constant 0 : i32
    %c0_i32_0 = arith.constant 0 : i32
    %c0_i32_1 = arith.constant 0 : i32
    return %c0_i32, %c0_i32_0 : i32, i32
  }
  func.func @transform_2(%arg0: i32) -> (i32, i32) {
    %c0_i32 = arith.constant 0 : i32
    %c0_i32_0 = arith.constant 0 : i32
    %c0_i32_1 = arith.constant 0 : i32
    return %c0_i32, %c0_i32_0 : i32, i32
  }
  func.func @transform_3(%arg0: i32) -> (i32, i32) {
    %c0_i32 = arith.constant 0 : i32
    %c0_i32_0 = arith.constant 0 : i32
    %c0_i32_1 = arith.constant 0 : i32
    return %c0_i32, %c0_i32_0 : i32, i32
  }
  func.func @transform_4(%arg0: i32) -> (i32, i32) {
    %c0_i32 = arith.constant 0 : i32
    %c0_i32_0 = arith.constant 0 : i32
    %c0_i32_1 = arith.constant 0 : i32
    return %c0_i32, %c0_i32_0 : i32, i32
  }
  func.func @transform_5(%arg0: i32) -> (i32, i32) {
    %c0_i32 = arith.constant 0 : i32
    %c0_i32_0 = arith.constant 0 : i32
    return %arg0, %c0_i32 : i32, i32
  }
  func.func @transform_6(%arg0: i32) -> (i32, i32) {
    %c0_i32 = arith.constant 0 : i32
    %c0_i32_0 = arith.constant 0 : i32
    return %arg0, %c0_i32 : i32, i32
  }
}

</mosaic_0001>

<llo_original>
// kernel: instance_encoder_pallas.1
$region0: #{instance_encoder_pallas.1}
  #allocation0 [shape = 'u32[]', space=smem, size = 0x4, offset = 0x4, fixed_abs, tag = 'smem constant byte address 0x4 - core index']
  #allocation1 [shape = 'u32[144,128]{1,0:T(1,128)}', space=vmem, size = 0x12000, scoped, tag = 'internal scratch']
  %s0 = inlined_call_operand.hbm [shape: bf16[128,1024], index: 0, kind: input, shape index: {}]
  %s1 = inlined_call_operand.hbm [shape: bf16[1024,1024], index: 1, kind: input, shape index: {}]
  %s2 = inlined_call_operand.hbm [shape: f32[1,1024], index: 2, kind: input, shape index: {}]
  %s3 = inlined_call_operand.hbm [shape: bf16[1024,128], index: 3, kind: input, shape index: {}]
  %s4 = inlined_call_operand.hbm [shape: f32[1,128], index: 4, kind: input, shape index: {}]
  %s5 = inlined_call_operand.hbm [shape: bf16[128,1024], index: 5, kind: output, shape index: {0}]
  %s6 = inlined_call_operand.hbm [shape: f32[128,128], index: 6, kind: output, shape index: {1}]
  %7 = xla_tuple %s5, %s6
  %s8 = sld [smem:[#allocation0]]
  $region58: #{instance_encoder_pallas.1} parent=0
    _
  %s10 = ssub.s32 1, %s8
  %s11 = scalar_select 0, %s10, %s8
  $region1: #{instance_encoder_pallas.1} parent=0
    #allocation2 [shape = 'u8[262144]{0}', space=vmem, size = 0x40000, scoped, tag = 'input window, operand 0, single buffered']
    #allocation3 [shape = 's32[1]{0}', space=sflag, size = 0x4, scoped, tag = 'scoped memory for instance_encoder_pallas.1']
    #allocation4 [shape = 's32[1]{0}', space=sflag, size = 0x4, scoped, tag = 'scoped memory for instance_encoder_pallas.1']
    #allocation5 [shape = 'u8[2097152]{0}', space=vmem, size = 0x200000, scoped, tag = 'input window, operand 1, single buffered']
    #allocation6 [shape = 's32[1]{0}', space=sflag, size = 0x4, scoped, tag = 'scoped memory for instance_encoder_pallas.1']
    #allocation7 [shape = 'u8[4096]{0}', space=vmem, size = 0x1000, scoped, tag = 'input window, operand 2, single buffered']
    #allocation8 [shape = 'u8[262144]{0}', space=vmem, size = 0x40000, scoped, tag = 'input window, operand 3, single buffered']
    #allocation9 [shape = 's32[1]{0}', space=sflag, size = 0x4, scoped, tag = 'scoped memory for instance_encoder_pallas.1']
    #allocation10 [shape = 'u8[512]{0}', space=vmem, size = 0x400, scoped, tag = 'input window, operand 4, single buffered']
    #allocation11 [shape = 'u8[262144]{0}', space=vmem, size = 0x40000, scoped, tag = 'output window, operand 0, single buffered']
    #allocation12 [shape = 'u8[65536]{0}', space=vmem, size = 0x10000, scoped, tag = 'output window, operand 1, single buffered']
    #allocation13 [shape = 's32[1]{0}', space=sflag, size = 0x4, scoped, tag = 'scoped memory for instance_encoder_pallas.1']
    %12 = vsyncpa [#allocation3], 0
    %13 = vsyncpa [#allocation6], 0
    %14 = vsyncpa [#allocation9], 0
    %15 = vsyncpa [#allocation4], 0
    %16 = vsyncpa [#allocation13], 0
    // Predicated region
    $region2: #{instance_encoder_pallas.1} parent=1 // pred_check
      _
    $region3: #{instance_encoder_pallas.1} parent=1 // pred_check_branch
      %18 = sbr.rel (0) target = $region5
    $region4: #{instance_encoder_pallas.1} parent=1 // pred_region
      %s20 = ssub.s32 8192, 8192
      %21 = vsyncadd [#allocation3], %s20
      %s22 = sshll.u32 [#allocation2], 4
      %s23 = int_to_ptr.vmem [resolvable:$true] %s22
      %28 = dma.hbm_to_vmem [thread:$0]  %s0, 8192, %s23, [#allocation3], 512, 512, 32
    $region5: #{instance_encoder_pallas.1} parent=1 // pred_fallthru
      _
    // Predicated region
    $region6: #{instance_encoder_pallas.1} parent=1 // pred_check
      _
    $region7: #{instance_encoder_pallas.1} parent=1 // pred_check_branch
      %30 = sbr.rel (0) target = $region9
    $region8: #{instance_encoder_pallas.1} parent=1 // pred_region
      %s32 = ssub.s32 65536, 65536
      %33 = vsyncadd [#allocation6], %s32
      %s34 = sshll.u32 [#allocation5], 4
      %s35 = int_to_ptr.vmem [resolvable:$true] %s34
      %40 = dma.hbm_to_vmem [thread:$0]  %s1, 65536, %s35, [#allocation6], 512, 512, 32
    $region9: #{instance_encoder_pallas.1} parent=1 // pred_fallthru
      _
    // Predicated region
    $region10: #{instance_encoder_pallas.1} parent=1 // pred_check
      _
    $region11: #{instance_encoder_pallas.1} parent=1 // pred_check_branch
      %42 = sbr.rel (0) target = $region13
    $region12: #{instance_encoder_pallas.1} parent=1 // pred_region
      %s44 = ssub.s32 128, 128
      %45 = vsyncadd [#allocation6], %s44
      %s47 = sshll.u32 [#allocation7], 4
      %s48 = int_to_ptr.vmem [resolvable:$true] %s47
      %50 = dma.hbm_to_vmem [thread:$0]  %s2, 128, %s48, [#allocation6]
    $region13: #{instance_encoder_pallas.1} parent=1 // pred_fallthru
      _
    // Predicated region
    $region14: #{instance_encoder_pallas.1} parent=1 // pred_check
      _
    $region15: #{instance_encoder_pallas.1} parent=1 // pred_check_branch
      %52 = sbr.rel (0) target = $region17
    $region16: #{instance_encoder_pallas.1} parent=1 // pred_region
      %s54 = ssub.s32 8192, 8192
      %55 = vsyncadd [#allocation9], %s54
      %s56 = sshll.u32 [#allocation8], 4
      %s57 = int_to_ptr.vmem [resolvable:$true] %s56
      %62 = dma.hbm_to_vmem [thread:$0]  %s3, 8192, %s57, [#allocation9], 64, 64, 4
    $region17: #{instance_encoder_pallas.1} parent=1 // pred_fallthru
      _
    // Predicated region
    $region18: #{instance_encoder_pallas.1} parent=1 // pred_check
      _
    $region19: #{instance_encoder_pallas.1} parent=1 // pred_check_branch
      %64 = sbr.rel (0) target = $region21
    $region20: #{instance_encoder_pallas.1} parent=1 // pred_region
      %s66 = ssub.s32 16, 16
      %67 = vsyncadd [#allocation9], %s66
      %s69 = sshll.u32 [#allocation10], 4
      %s70 = int_to_ptr.vmem [resolvable:$true] %s69
      %72 = dma.hbm_to_vmem [thread:$0]  %s4, 16, %s70, [#allocation9]
    $region21: #{instance_encoder_pallas.1} parent=1 // pred_fallthru
      _
    // Predicated region
    $region22: #{instance_encoder_pallas.1} parent=1 // pred_check
      _
    $region23: #{instance_encoder_pallas.1} parent=1 // pred_check_branch
      %74 = sbr.rel (0) target = $region25
    $region24: #{instance_encoder_pallas.1} parent=1 // pred_region
      %75 = dma.done [#allocation3], 8192
    $region25: #{instance_encoder_pallas.1} parent=1 // pred_fallthru
      _
    // Predicated region
    $region26: #{instance_encoder_pallas.1} parent=1 // pred_check
      _
    $region27: #{instance_encoder_pallas.1} parent=1 // pred_check_branch
      %77 = sbr.rel (0) target = $region29
    $region28: #{instance_encoder_pallas.1} parent=1 // pred_region
      %78 = dma.done [#allocation6], 65536
    $region29: #{instance_encoder_pallas.1} parent=1 // pred_fallthru
      _
    // Predicated region
    $region30: #{instance_encoder_pallas.1} parent=1 // pred_check
      _
    $region31: #{instance_encoder_pallas.1} parent=1 // pred_check_branch
      %80 = sbr.rel (0) target = $region33
    $region32: #{instance_encoder_pallas.1} parent=1 // pred_region
      %81 = dma.done [#allocation6], 128
    $region33: #{instance_encoder_pallas.1} parent=1 // pred_fallthru
      _
    // Predicated region
    $region34: #{instance_encoder_pallas.1} parent=1 // pred_check
      _
    $region35: #{instance_encoder_pallas.1} parent=1 // pred_check_branch
      %83 = sbr.rel (0) target = $region37
    $region36: #{instance_encoder_pallas.1} parent=1 // pred_region
      %84 = dma.done [#allocation9], 8192
    $region37: #{instance_encoder_pallas.1} parent=1 // pred_fallthru
      _
    // Predicated region
    $region38: #{instance_encoder_pallas.1} parent=1 // pred_check
      _
    $region39: #{instance_encoder_pallas.1} parent=1 // pred_check_branch
      %86 = sbr.rel (0) target = $region41
    $region40: #{instance_encoder_pallas.1} parent=1 // pred_region
      %87 = dma.done [#allocation9], 16
    $region41: #{instance_encoder_pallas.1} parent=1 // pred_fallthru
      _
    %v89 = vld [vmem:[#allocation2] sm:$0xff]
    %v90 = vld [vmem:[#allocation2 + $0x8] sm:$0xff]
    %v91 = vld [vmem:[#allocation2 + $0x10] sm:$0xff]
    %v92 = vld [vmem:[#allocation2 + $0x18] sm:$0xff]
    %v93 = vld [vmem:[#allocation2 + $0x20] sm:$0xff]
    %v94 = vld [vmem:[#allocation2 + $0x28] sm:$0xff]
    %v95 = vld [vmem:[#allocation2 + $0x30] sm:$0xff]
    %v96 = vld [vmem:[#allocation2 + $0x38] sm:$0xff]
    %v97 = vld [vmem:[#allocation2 + $0x40] sm:$0xff]
    %v98 = vld [vmem:[#allocation2 + $0x48] sm:$0xff]
    %v99 = vld [vmem:[#allocation2 + $0x50] sm:$0xff]
    %v100 = vld [vmem:[#allocation2 + $0x58] sm:$0xff]
    %v101 = vld [vmem:[#allocation2 + $0x60] sm:$0xff]
    %v102 = vld [vmem:[#allocation2 + $0x68] sm:$0xff]
    %v103 = vld [vmem:[#allocation2 + $0x70] sm:$0xff]
    %v104 = vld [vmem:[#allocation2 + $0x78] sm:$0xff]
    %v105 = vld [vmem:[#allocation2 + $0x80] sm:$0xff]
    %v106 = vld [vmem:[#allocation2 + $0x88] sm:$0xff]
    %v107 = vld [vmem:[#allocation2 + $0x90] sm:$0xff]
    %v108 = vld [vmem:[#allocation2 + $0x98] sm:$0xff]
    %v109 = vld [vmem:[#allocation2 + $0xa0] sm:$0xff]
    %v110 = vld [vmem:[#allocation2 + $0xa8] sm:$0xff]
    %v111 = vld [vmem:[#allocation2 + $0xb0] sm:$0xff]
    %v112 = vld [vmem:[#allocation2 + $0xb8] sm:$0xff]
    %v113 = vld [vmem:[#allocation2 + $0xc0] sm:$0xff]
    %v114 = vld [vmem:[#allocation2 + $0xc8] sm:$0xff]
    %v115 = vld [vmem:[#allocation2 + $0xd0] sm:$0xff]
    %v116 = vld [vmem:[#allocation2 + $0xd8] sm:$0xff]
    %v117 = vld [vmem:[#allocation2 + $0xe0] sm:$0xff]
    %v118 = vld [vmem:[#allocation2 + $0xe8] sm:$0xff]
    %v119 = vld [vmem:[#allocation2 + $0xf0] sm:$0xff]
    %v120 = vld [vmem:[#allocation2 + $0xf8] sm:$0xff]
    %v121 = vld [vmem:[#allocation2 + $0x100] sm:$0xff]
    %v122 = vld [vmem:[#allocation2 + $0x108] sm:$0xff]
    %v123 = vld [vmem:[#allocation2 + $0x110] sm:$0xff]
    %v124 = vld [vmem:[#allocation2 + $0x118] sm:$0xff]
    %v125 = vld [vmem:[#allocation2 + $0x120] sm:$0xff]
    %v126 = vld [vmem:[#allocation2 + $0x128] sm:$0xff]
    %v127 = vld [vmem:[#allocation2 + $0x130] sm:$0xff]
    %v128 = vld [vmem:[#allocation2 + $0x138] sm:$0xff]
    %v129 = vld [vmem:[#allocation2 + $0x140] sm:$0xff]
    %v130 = vld [vmem:[#allocation2 + $0x148] sm:$0xff]
    %v131 = vld [vmem:[#allocation2 + $0x150] sm:$0xff]
    %v132 = vld [vmem:[#allocation2 + $0x158] sm:$0xff]
    %v133 = vld [vmem:[#allocation2 + $0x160] sm:$0xff]
    %v134 = vld [vmem:[#allocation2 + $0x168] sm:$0xff]
    %v135 = vld [vmem:[#allocation2 + $0x170] sm:$0xff]
    %v136 = vld [vmem:[#allocation2 + $0x178] sm:$0xff]
    %v137 = vld [vmem:[#allocation2 + $0x180] sm:$0xff]
    %v138 = vld [vmem:[#allocation2 + $0x188] sm:$0xff]
    %v139 = vld [vmem:[#allocation2 + $0x190] sm:$0xff]
    %v140 = vld [vmem:[#allocation2 + $0x198] sm:$0xff]
    %v141 = vld [vmem:[#allocation2 + $0x1a0] sm:$0xff]
    %v142 = vld [vmem:[#allocation2 + $0x1a8] sm:$0xff]
    %v143 = vld [vmem:[#allocation2 + $0x1b0] sm:$0xff]
    %v144 = vld [vmem:[#allocation2 + $0x1b8] sm:$0xff]
    %v145 = vld [vmem:[#allocation2 + $0x1c0] sm:$0xff]
    %v146 = vld [vmem:[#allocation2 + $0x1c8] sm:$0xff]
    %v147 = vld [vmem:[#allocation2 + $0x1d0] sm:$0xff]
    %v148 = vld [vmem:[#allocation2 + $0x1d8] sm:$0xff]
    %v149 = vld [vmem:[#allocation2 + $0x1e0] sm:$0xff]
    %v150 = vld [vmem:[#allocation2 + $0x1e8] sm:$0xff]
    %v151 = vld [vmem:[#allocation2 + $0x1f0] sm:$0xff]
    %v152 = vld [vmem:[#allocation2 + $0x1f8] sm:$0xff]
    %v153 = vld [vmem:[#allocation5] sm:$0xff]
    %v154 = vld [vmem:[#allocation5 + $0x8] sm:$0xff]
    %v155 = vld [vmem:[#allocation5 + $0x10] sm:$0xff]
    %v156 = vld [vmem:[#allocation5 + $0x18] sm:$0xff]
    %v157 = vld [vmem:[#allocation5 + $0x20] sm:$0xff]
    %v158 = vld [vmem:[#allocation5 + $0x28] sm:$0xff]
    %v159 = vld [vmem:[#allocation5 + $0x30] sm:$0xff]
    %v160 = vld [vmem:[#allocation5 + $0x38] sm:$0xff]
    %v161 = vld [vmem:[#allocation5 + $0x40] sm:$0xff]
    %v162 = vld [vmem:[#allocation5 + $0x48] sm:$0xff]
    %v163 = vld [vmem:[#allocation5 + $0x50] sm:$0xff]
    %v164 = vld [vmem:[#allocation5 + $0x58] sm:$0xff]
    %v165 = vld [vmem:[#allocation5 + $0x60] sm:$0xff]
    %v166 = vld [vmem:[#allocation5 + $0x68] sm:$0xff]
    %v167 = vld [vmem:[#allocation5 + $0x70] sm:$0xff]
    %v168 = vld [vmem:[#allocation5 + $0x78] sm:$0xff]
    %v169 = vld [vmem:[#allocation5 + $0x80] sm:$0xff]
    %v170 = vld [vmem:[#allocation5 + $0x88] sm:$0xff]
    %v171 = vld [vmem:[#allocation5 + $0x90] sm:$0xff]
    %v172 = vld [vmem:[#allocation5 + $0x98] sm:$0xff]
    %v173 = vld [vmem:[#allocation5 + $0xa0] sm:$0xff]
    %v174 = vld [vmem:[#allocation5 + $0xa8] sm:$0xff]
    %v175 = vld [vmem:[#allocation5 + $0xb0] sm:$0xff]
    %v176 = vld [vmem:[#allocation5 + $0xb8] sm:$0xff]
    %v177 = vld [vmem:[#allocation5 + $0xc0] sm:$0xff]
    %v178 = vld [vmem:[#allocation5 + $0xc8] sm:$0xff]
    %v179 = vld [vmem:[#allocation5 + $0xd0] sm:$0xff]
    %v180 = vld [vmem:[#allocation5 + $0xd8] sm:$0xff]
    %v181 = vld [vmem:[#allocation5 + $0xe0] sm:$0xff]
    %v182 = vld [vmem:[#allocation5 + $0xe8] sm:$0xff]
    %v183 = vld [vmem:[#allocation5 + $0xf0] sm:$0xff]
    %v184 = vld [vmem:[#allocation5 + $0xf8] sm:$0xff]
    %v185 = vld [vmem:[#allocation5 + $0x100] sm:$0xff]
    %v186 = vld [vmem:[#allocation5 + $0x108] sm:$0xff]
    %v187 = vld [vmem:[#allocation5 + $0x110] sm:$0xff]
    %v188 = vld [vmem:[#allocation5 + $0x118] sm:$0xff]
    %v189 = vld [vmem:[#allocation5 + $0x120] sm:$0xff]
    %v190 = vld [vmem:[#allocation5 + $0x128] sm:$0xff]
    %v191 = vld [vmem:[#allocation5 + $0x130] sm:$0xff]
    %v192 = vld [vmem:[#allocation5 + $0x138] sm:$0xff]
    %v193 = vld [vmem:[#allocation5 + $0x140] sm:$0xff]
    %v194 = vld [vmem:[#allocation5 + $0x148] sm:$0xff]
    %v195 = vld [vmem:[#allocation5 + $0x150] sm:$0xff]
    %v196 = vld [vmem:[#allocation5 + $0x158] sm:$0xff]
    %v197 = vld [vmem:[#allocation5 + $0x160] sm:$0xff]
    %v198 = vld [vmem:[#allocation5 + $0x168] sm:$0xff]
    %v199 = vld [vmem:[#allocation5 + $0x170] sm:$0xff]
    %v200 = vld [vmem:[#allocation5 + $0x178] sm:$0xff]
    %v201 = vld [vmem:[#allocation5 + $0x180] sm:$0xff]
    %v202 = vld [vmem:[#allocation5 + $0x188] sm:$0xff]
    %v203 = vld [vmem:[#allocation5 + $0x190] sm:$0xff]
    %v204 = vld [vmem:[#allocation5 + $0x198] sm:$0xff]
    %v205 = vld [vmem:[#allocation5 + $0x1a0] sm:$0xff]
    %v206 = vld [vmem:[#allocation5 + $0x1a8] sm:$0xff]
    %v207 = vld [vmem:[#allocation5 + $0x1b0] sm:$0xff]
    %v208 = vld [vmem:[#allocation5 + $0x1b8] sm:$0xff]
    %v209 = vld [vmem:[#allocation5 + $0x1c0] sm:$0xff]
    %v210 = vld [vmem:[#allocation5 + $0x1c8] sm:$0xff]
    %v211 = vld [vmem:[#allocation5 + $0x1d0] sm:$0xff]
    %v212 = vld [vmem:[#allocation5 + $0x1d8] sm:$0xff]
    %v213 = vld [vmem:[#allocation5 + $0x1e0] sm:$0xff]
    %v214 = vld [vmem:[#allocation5 + $0x1e8] sm:$0xff]
    %v215 = vld [vmem:[#allocation5 + $0x1f0] sm:$0xff]
    %v216 = vld [vmem:[#allocation5 + $0x1f8] sm:$0xff]
    %v217 = vld [vmem:[#allocation5 + $0x200] sm:$0xff]
    %v218 = vld [vmem:[#allocation5 + $0x208] sm:$0xff]
    %v219 = vld [vmem:[#allocation5 + $0x210] sm:$0xff]
    %v220 = vld [vmem:[#allocation5 + $0x218] sm:$0xff]
    %v221 = vld [vmem:[#allocation5 + $0x220] sm:$0xff]
    %v222 = vld [vmem:[#allocation5 + $0x228] sm:$0xff]
    %v223 = vld [vmem:[#allocation5 + $0x230] sm:$0xff]
    %v224 = vld [vmem:[#allocation5 + $0x238] sm:$0xff]
    %v225 = vld [vmem:[#allocation5 + $0x240] sm:$0xff]
    %v226 = vld [vmem:[#allocation5 + $0x248] sm:$0xff]
    %v227 = vld [vmem:[#allocation5 + $0x250] sm:$0xff]
    %v228 = vld [vmem:[#allocation5 + $0x258] sm:$0xff]
    %v229 = vld [vmem:[#allocation5 + $0x260] sm:$0xff]
    %v230 = vld [vmem:[#allocation5 + $0x268] sm:$0xff]
    %v231 = vld [vmem:[#allocation5 + $0x270] sm:$0xff]
    %v232 = vld [vmem:[#allocation5 + $0x278] sm:$0xff]
    %v233 = vld [vmem:[#allocation5 + $0x280] sm:$0xff]
    %v234 = vld [vmem:[#allocation5 + $0x288] sm:$0xff]
    %v235 = vld [vmem:[#allocation5 + $0x290] sm:$0xff]
    %v236 = vld [vmem:[#allocation5 + $0x298] sm:$0xff]
    %v237 = vld [vmem:[#allocation5 + $0x2a0] sm:$0xff]
    %v238 = vld [vmem:[#allocation5 + $0x2a8] sm:$0xff]
    %v239 = vld [vmem:[#allocation5 + $0x2b0] sm:$0xff]
    %v240 = vld [vmem:[#allocation5 + $0x2b8] sm:$0xff]
    %v241 = vld [vmem:[#allocation5 + $0x2c0] sm:$0xff]
    %v242 = vld [vmem:[#allocation5 + $0x2c8] sm:$0xff]
    %v243 = vld [vmem:[#allocation5 + $0x2d0] sm:$0xff]
    %v244 = vld [vmem:[#allocation5 + $0x2d8] sm:$0xff]
    %v245 = vld [vmem:[#allocation5 + $0x2e0] sm:$0xff]
    %v246 = vld [vmem:[#allocation5 + $0x2e8] sm:$0xff]
    %v247 = vld [vmem:[#allocation5 + $0x2f0] sm:$0xff]
    %v248 = vld [vmem:[#allocation5 + $0x2f8] sm:$0xff]
    %v249 = vld [vmem:[#allocation5 + $0x300] sm:$0xff]
    %v250 = vld [vmem:[#allocation5 + $0x308] sm:$0xff]
    %v251 = vld [vmem:[#allocation5 + $0x310] sm:$0xff]
    %v252 = vld [vmem:[#allocation5 + $0x318] sm:$0xff]
    %v253 = vld [vmem:[#allocation5 + $0x320] sm:$0xff]
    %v254 = vld [vmem:[#allocation5 + $0x328] sm:$0xff]
    %v255 = vld [vmem:[#allocation5 + $0x330] sm:$0xff]
    %v256 = vld [vmem:[#allocation5 + $0x338] sm:$0xff]
    %v257 = vld [vmem:[#allocation5 + $0x340] sm:$0xff]
    %v258 = vld [vmem:[#allocation5 + $0x348] sm:$0xff]
    %v259 = vld [vmem:[#allocation5 + $0x350] sm:$0xff]
    %v260 = vld [vmem:[#allocation5 + $0x358] sm:$0xff]
    %v261 = vld [vmem:[#allocation5 + $0x360] sm:$0xff]
    %v262 = vld [vmem:[#allocation5 + $0x368] sm:$0xff]
    %v263 = vld [vmem:[#allocation5 + $0x370] sm:$0xff]
    %v264 = vld [vmem:[#allocation5 + $0x378] sm:$0xff]
    %v265 = vld [vmem:[#allocation5 + $0x380] sm:$0xff]
    %v266 = vld [vmem:[#allocation5 + $0x388] sm:$0xff]
    %v267 = vld [vmem:[#allocation5 + $0x390] sm:$0xff]
    %v268 = vld [vmem:[#allocation5 + $0x398] sm:$0xff]
    %v269 = vld [vmem:[#allocation5 + $0x3a0] sm:$0xff]
    %v270 = vld [vmem:[#allocation5 + $0x3a8] sm:$0xff]
    %v271 = vld [vmem:[#allocation5 + $0x3b0] sm:$0xff]
    %v272 = vld [vmem:[#allocation5 + $0x3b8] sm:$0xff]
    %v273 = vld [vmem:[#allocation5 + $0x3c0] sm:$0xff]
    %v274 = vld [vmem:[#allocation5 + $0x3c8] sm:$0xff]
    %v275 = vld [vmem:[#allocation5 + $0x3d0] sm:$0xff]
    %v276 = vld [vmem:[#allocation5 + $0x3d8] sm:$0xff]
    %v277 = vld [vmem:[#allocation5 + $0x3e0] sm:$0xff]
    %v278 = vld [vmem:[#allocation5 + $0x3e8] sm:$0xff]
    %v279 = vld [vmem:[#allocation5 + $0x3f0] sm:$0xff]
    %v280 = vld [vmem:[#allocation5 + $0x3f8] sm:$0xff]
    %v281 = vld [vmem:[#allocation5 + $0x400] sm:$0xff]
    %v282 = vld [vmem:[#allocation5 + $0x408] sm:$0xff]
    %v283 = vld [vmem:[#allocation5 + $0x410] sm:$0xff]
    %v284 = vld [vmem:[#allocation5 + $0x418] sm:$0xff]
    %v285 = vld [vmem:[#allocation5 + $0x420] sm:$0xff]
    %v286 = vld [vmem:[#allocation5 + $0x428] sm:$0xff]
    %v287 = vld [vmem:[#allocation5 + $0x430] sm:$0xff]
    %v288 = vld [vmem:[#allocation5 + $0x438] sm:$0xff]
    %v289 = vld [vmem:[#allocation5 + $0x440] sm:$0xff]
    %v290 = vld [vmem:[#allocation5 + $0x448] sm:$0xff]
    %v291 = vld [vmem:[#allocation5 + $0x450] sm:$0xff]
    %v292 = vld [vmem:[#allocation5 + $0x458] sm:$0xff]
    %v293 = vld [vmem:[#allocation5 + $0x460] sm:$0xff]
    %v294 = vld [vmem:[#allocation5 + $0x468] sm:$0xff]
    %v295 = vld [vmem:[#allocation5 + $0x470] sm:$0xff]
    %v296 = vld [vmem:[#allocation5 + $0x478] sm:$0xff]
    %v297 = vld [vmem:[#allocation5 + $0x480] sm:$0xff]
    %v298 = vld [vmem:[#allocation5 + $0x488] sm:$0xff]
    %v299 = vld [vmem:[#allocation5 + $0x490] sm:$0xff]
    %v300 = vld [vmem:[#allocation5 + $0x498] sm:$0xff]
    %v301 = vld [vmem:[#allocation5 + $0x4a0] sm:$0xff]
    %v302 = vld [vmem:[#allocation5 + $0x4a8] sm:$0xff]
    %v303 = vld [vmem:[#allocation5 + $0x4b0] sm:$0xff]
    %v304 = vld [vmem:[#allocation5 + $0x4b8] sm:$0xff]
    %v305 = vld [vmem:[#allocation5 + $0x4c0] sm:$0xff]
    %v306 = vld [vmem:[#allocation5 + $0x4c8] sm:$0xff]
    %v307 = vld [vmem:[#allocation5 + $0x4d0] sm:$0xff]
    %v308 = vld [vmem:[#allocation5 + $0x4d8] sm:$0xff]
    %v309 = vld [vmem:[#allocation5 + $0x4e0] sm:$0xff]
    %v310 = vld [vmem:[#allocation5 + $0x4e8] sm:$0xff]
    %v311 = vld [vmem:[#allocation5 + $0x4f0] sm:$0xff]
    %v312 = vld [vmem:[#allocation5 + $0x4f8] sm:$0xff]
    %v313 = vld [vmem:[#allocation5 + $0x500] sm:$0xff]
    %v314 = vld [vmem:[#allocation5 + $0x508] sm:$0xff]
    %v315 = vld [vmem:[#allocation5 + $0x510] sm:$0xff]
    %v316 = vld [vmem:[#allocation5 + $0x518] sm:$0xff]
    %v317 = vld [vmem:[#allocation5 + $0x520] sm:$0xff]
    %v318 = vld [vmem:[#allocation5 + $0x528] sm:$0xff]
    %v319 = vld [vmem:[#allocation5 + $0x530] sm:$0xff]
    %v320 = vld [vmem:[#allocation5 + $0x538] sm:$0xff]
    %v321 = vld [vmem:[#allocation5 + $0x540] sm:$0xff]
    %v322 = vld [vmem:[#allocation5 + $0x548] sm:$0xff]
    %v323 = vld [vmem:[#allocation5 + $0x550] sm:$0xff]
    %v324 = vld [vmem:[#allocation5 + $0x558] sm:$0xff]
    %v325 = vld [vmem:[#allocation5 + $0x560] sm:$0xff]
    %v326 = vld [vmem:[#allocation5 + $0x568] sm:$0xff]
    %v327 = vld [vmem:[#allocation5 + $0x570] sm:$0xff]
    %v328 = vld [vmem:[#allocation5 + $0x578] sm:$0xff]
    %v329 = vld [vmem:[#allocation5 + $0x580] sm:$0xff]
    %v330 = vld [vmem:[#allocation5 + $0x588] sm:$0xff]
    %v331 = vld [vmem:[#allocation5 + $0x590] sm:$0xff]
    %v332 = vld [vmem:[#allocation5 + $0x598] sm:$0xff]
    %v333 = vld [vmem:[#allocation5 + $0x5a0] sm:$0xff]
    %v334 = vld [vmem:[#allocation5 + $0x5a8] sm:$0xff]
    %v335 = vld [vmem:[#allocation5 + $0x5b0] sm:$0xff]
    %v336 = vld [vmem:[#allocation5 + $0x5b8] sm:$0xff]
    %v337 = vld [vmem:[#allocation5 + $0x5c0] sm:$0xff]
    %v338 = vld [vmem:[#allocation5 + $0x5c8] sm:$0xff]
    %v339 = vld [vmem:[#allocation5 + $0x5d0] sm:$0xff]
    %v340 = vld [vmem:[#allocation5 + $0x5d8] sm:$0xff]
    %v341 = vld [vmem:[#allocation5 + $0x5e0] sm:$0xff]
    %v342 = vld [vmem:[#allocation5 + $0x5e8] sm:$0xff]
    %v343 = vld [vmem:[#allocation5 + $0x5f0] sm:$0xff]
    %v344 = vld [vmem:[#allocation5 + $0x5f8] sm:$0xff]
    %v345 = vld [vmem:[#allocation5 + $0x600] sm:$0xff]
    %v346 = vld [vmem:[#allocation5 + $0x608] sm:$0xff]
    %v347 = vld [vmem:[#allocation5 + $0x610] sm:$0xff]
    %v348 = vld [vmem:[#allocation5 + $0x618] sm:$0xff]
    %v349 = vld [vmem:[#allocation5 + $0x620] sm:$0xff]
    %v350 = vld [vmem:[#allocation5 + $0x628] sm:$0xff]
    %v351 = vld [vmem:[#allocation5 + $0x630] sm:$0xff]
    %v352 = vld [vmem:[#allocation5 + $0x638] sm:$0xff]
    %v353 = vld [vmem:[#allocation5 + $0x640] sm:$0xff]
    %v354 = vld [vmem:[#allocation5 + $0x648] sm:$0xff]
    %v355 = vld [vmem:[#allocation5 + $0x650] sm:$0xff]
    %v356 = vld [vmem:[#allocation5 + $0x658] sm:$0xff]
    %v357 = vld [vmem:[#allocation5 + $0x660] sm:$0xff]
    %v358 = vld [vmem:[#allocation5 + $0x668] sm:$0xff]
    %v359 = vld [vmem:[#allocation5 + $0x670] sm:$0xff]
    %v360 = vld [vmem:[#allocation5 + $0x678] sm:$0xff]
    %v361 = vld [vmem:[#allocation5 + $0x680] sm:$0xff]
    %v362 = vld [vmem:[#allocation5 + $0x688] sm:$0xff]
    %v363 = vld [vmem:[#allocation5 + $0x690] sm:$0xff]
    %v364 = vld [vmem:[#allocation5 + $0x698] sm:$0xff]
    %v365 = vld [vmem:[#allocation5 + $0x6a0] sm:$0xff]
    %v366 = vld [vmem:[#allocation5 + $0x6a8] sm:$0xff]
    %v367 = vld [vmem:[#allocation5 + $0x6b0] sm:$0xff]
    %v368 = vld [vmem:[#allocation5 + $0x6b8] sm:$0xff]
    %v369 = vld [vmem:[#allocation5 + $0x6c0] sm:$0xff]
    %v370 = vld [vmem:[#allocation5 + $0x6c8] sm:$0xff]
    %v371 = vld [vmem:[#allocation5 + $0x6d0] sm:$0xff]
    %v372 = vld [vmem:[#allocation5 + $0x6d8] sm:$0xff]
    %v373 = vld [vmem:[#allocation5 + $0x6e0] sm:$0xff]
    %v374 = vld [vmem:[#allocation5 + $0x6e8] sm:$0xff]
    %v375 = vld [vmem:[#allocation5 + $0x6f0] sm:$0xff]
    %v376 = vld [vmem:[#allocation5 + $0x6f8] sm:$0xff]
    %v377 = vld [vmem:[#allocation5 + $0x700] sm:$0xff]
    %v378 = vld [vmem:[#allocation5 + $0x708] sm:$0xff]
    %v379 = vld [vmem:[#allocation5 + $0x710] sm:$0xff]
    %v380 = vld [vmem:[#allocation5 + $0x718] sm:$0xff]
    %v381 = vld [vmem:[#allocation5 + $0x720] sm:$0xff]
    %v382 = vld [vmem:[#allocation5 + $0x728] sm:$0xff]
    %v383 = vld [vmem:[#allocation5 + $0x730] sm:$0xff]
    %v384 = vld [vmem:[#allocation5 + $0x738] sm:$0xff]
    %v385 = vld [vmem:[#allocation5 + $0x740] sm:$0xff]
    %v386 = vld [vmem:[#allocation5 + $0x748] sm:$0xff]
    %v387 = vld [vmem:[#allocation5 + $0x750] sm:$0xff]
    %v388 = vld [vmem:[#allocation5 + $0x758] sm:$0xff]
    %v389 = vld [vmem:[#allocation5 + $0x760] sm:$0xff]
    %v390 = vld [vmem:[#allocation5 + $0x768] sm:$0xff]
    %v391 = vld [vmem:[#allocation5 + $0x770] sm:$0xff]
    %v392 = vld [vmem:[#allocation5 + $0x778] sm:$0xff]
    %v393 = vld [vmem:[#allocation5 + $0x780] sm:$0xff]
    %v394 = vld [vmem:[#allocation5 + $0x788] sm:$0xff]
    %v395 = vld [vmem:[#allocation5 + $0x790] sm:$0xff]
    %v396 = vld [vmem:[#allocation5 + $0x798] sm:$0xff]
    %v397 = vld [vmem:[#allocation5 + $0x7a0] sm:$0xff]
    %v398 = vld [vmem:[#allocation5 + $0x7a8] sm:$0xff]
    %v399 = vld [vmem:[#allocation5 + $0x7b0] sm:$0xff]
    %v400 = vld [vmem:[#allocation5 + $0x7b8] sm:$0xff]
    %v401 = vld [vmem:[#allocation5 + $0x7c0] sm:$0xff]
    %v402 = vld [vmem:[#allocation5 + $0x7c8] sm:$0xff]
    %v403 = vld [vmem:[#allocation5 + $0x7d0] sm:$0xff]
    %v404 = vld [vmem:[#allocation5 + $0x7d8] sm:$0xff]
    %v405 = vld [vmem:[#allocation5 + $0x7e0] sm:$0xff]
    %v406 = vld [vmem:[#allocation5 + $0x7e8] sm:$0xff]
    %v407 = vld [vmem:[#allocation5 + $0x7f0] sm:$0xff]
    %v408 = vld [vmem:[#allocation5 + $0x7f8] sm:$0xff]
    %v409 = vld [vmem:[#allocation5 + $0x800] sm:$0xff]
    %v410 = vld [vmem:[#allocation5 + $0x808] sm:$0xff]
    %v411 = vld [vmem:[#allocation5 + $0x810] sm:$0xff]
    %v412 = vld [vmem:[#allocation5 + $0x818] sm:$0xff]
    %v413 = vld [vmem:[#allocation5 + $0x820] sm:$0xff]
    %v414 = vld [vmem:[#allocation5 + $0x828] sm:$0xff]
    %v415 = vld [vmem:[#allocation5 + $0x830] sm:$0xff]
    %v416 = vld [vmem:[#allocation5 + $0x838] sm:$0xff]
    %v417 = vld [vmem:[#allocation5 + $0x840] sm:$0xff]
    %v418 = vld [vmem:[#allocation5 + $0x848] sm:$0xff]
    %v419 = vld [vmem:[#allocation5 + $0x850] sm:$0xff]
    %v420 = vld [vmem:[#allocation5 + $0x858] sm:$0xff]
    %v421 = vld [vmem:[#allocation5 + $0x860] sm:$0xff]
    %v422 = vld [vmem:[#allocation5 + $0x868] sm:$0xff]
    %v423 = vld [vmem:[#allocation5 + $0x870] sm:$0xff]
    %v424 = vld [vmem:[#allocation5 + $0x878] sm:$0xff]
    %v425 = vld [vmem:[#allocation5 + $0x880] sm:$0xff]
    %v426 = vld [vmem:[#allocation5 + $0x888] sm:$0xff]
    %v427 = vld [vmem:[#allocation5 + $0x890] sm:$0xff]
    %v428 = vld [vmem:[#allocation5 + $0x898] sm:$0xff]
    %v429 = vld [vmem:[#allocation5 + $0x8a0] sm:$0xff]
    %v430 = vld [vmem:[#allocation5 + $0x8a8] sm:$0xff]
    %v431 = vld [vmem:[#allocation5 + $0x8b0] sm:$0xff]
    %v432 = vld [vmem:[#allocation5 + $0x8b8] sm:$0xff]
    %v433 = vld [vmem:[#allocation5 + $0x8c0] sm:$0xff]
    %v434 = vld [vmem:[#allocation5 + $0x8c8] sm:$0xff]
    %v435 = vld [vmem:[#allocation5 + $0x8d0] sm:$0xff]
    %v436 = vld [vmem:[#allocation5 + $0x8d8] sm:$0xff]
    %v437 = vld [vmem:[#allocation5 + $0x8e0] sm:$0xff]
    %v438 = vld [vmem:[#allocation5 + $0x8e8] sm:$0xff]
    %v439 = vld [vmem:[#allocation5 + $0x8f0] sm:$0xff]
    %v440 = vld [vmem:[#allocation5 + $0x8f8] sm:$0xff]
    %v441 = vld [vmem:[#allocation5 + $0x900] sm:$0xff]
    %v442 = vld [vmem:[#allocation5 + $0x908] sm:$0xff]
    %v443 = vld [vmem:[#allocation5 + $0x910] sm:$0xff]
    %v444 = vld [vmem:[#allocation5 + $0x918] sm:$0xff]
    %v445 = vld [vmem:[#allocation5 + $0x920] sm:$0xff]
    %v446 = vld [vmem:[#allocation5 + $0x928] sm:$0xff]
    %v447 = vld [vmem:[#allocation5 + $0x930] sm:$0xff]
    %v448 = vld [vmem:[#allocation5 + $0x938] sm:$0xff]
    %v449 = vld [vmem:[#allocation5 + $0x940] sm:$0xff]
    %v450 = vld [vmem:[#allocation5 + $0x948] sm:$0xff]
    %v451 = vld [vmem:[#allocation5 + $0x950] sm:$0xff]
    %v452 = vld [vmem:[#allocation5 + $0x958] sm:$0xff]
    %v453 = vld [vmem:[#allocation5 + $0x960] sm:$0xff]
    %v454 = vld [vmem:[#allocation5 + $0x968] sm:$0xff]
    %v455 = vld [vmem:[#allocation5 + $0x970] sm:$0xff]
    %v456 = vld [vmem:[#allocation5 + $0x978] sm:$0xff]
    %v457 = vld [vmem:[#allocation5 + $0x980] sm:$0xff]
    %v458 = vld [vmem:[#allocation5 + $0x988] sm:$0xff]
    %v459 = vld [vmem:[#allocation5 + $0x990] sm:$0xff]
    %v460 = vld [vmem:[#allocation5 + $0x998] sm:$0xff]
    %v461 = vld [vmem:[#allocation5 + $0x9a0] sm:$0xff]
    %v462 = vld [vmem:[#allocation5 + $0x9a8] sm:$0xff]
    %v463 = vld [vmem:[#allocation5 + $0x9b0] sm:$0xff]
    %v464 = vld [vmem:[#allocation5 + $0x9b8] sm:$0xff]
    %v465 = vld [vmem:[#allocation5 + $0x9c0] sm:$0xff]
    %v466 = vld [vmem:[#allocation5 + $0x9c8] sm:$0xff]
    %v467 = vld [vmem:[#allocation5 + $0x9d0] sm:$0xff]
    %v468 = vld [vmem:[#allocation5 + $0x9d8] sm:$0xff]
    %v469 = vld [vmem:[#allocation5 + $0x9e0] sm:$0xff]
    %v470 = vld [vmem:[#allocation5 + $0x9e8] sm:$0xff]
    %v471 = vld [vmem:[#allocation5 + $0x9f0] sm:$0xff]
    %v472 = vld [vmem:[#allocation5 + $0x9f8] sm:$0xff]
    %v473 = vld [vmem:[#allocation5 + $0xa00] sm:$0xff]
    %v474 = vld [vmem:[#allocation5 + $0xa08] sm:$0xff]
    %v475 = vld [vmem:[#allocation5 + $0xa10] sm:$0xff]
    %v476 = vld [vmem:[#allocation5 + $0xa18] sm:$0xff]
    %v477 = vld [vmem:[#allocation5 + $0xa20] sm:$0xff]
    %v478 = vld [vmem:[#allocation5 + $0xa28] sm:$0xff]
    %v479 = vld [vmem:[#allocation5 + $0xa30] sm:$0xff]
    %v480 = vld [vmem:[#allocation5 + $0xa38] sm:$0xff]
    %v481 = vld [vmem:[#allocation5 + $0xa40] sm:$0xff]
    %v482 = vld [vmem:[#allocation5 + $0xa48] sm:$0xff]
    %v483 = vld [vmem:[#allocation5 + $0xa50] sm:$0xff]
    %v484 = vld [vmem:[#allocation5 + $0xa58] sm:$0xff]
    %v485 = vld [vmem:[#allocation5 + $0xa60] sm:$0xff]
    %v486 = vld [vmem:[#allocation5 + $0xa68] sm:$0xff]
    %v487 = vld [vmem:[#allocation5 + $0xa70] sm:$0xff]
    %v488 = vld [vmem:[#allocation5 + $0xa78] sm:$0xff]
    %v489 = vld [vmem:[#allocation5 + $0xa80] sm:$0xff]
    %v490 = vld [vmem:[#allocation5 + $0xa88] sm:$0xff]
    %v491 = vld [vmem:[#allocation5 + $0xa90] sm:$0xff]
    %v492 = vld [vmem:[#allocation5 + $0xa98] sm:$0xff]
    %v493 = vld [vmem:[#allocation5 + $0xaa0] sm:$0xff]
    %v494 = vld [vmem:[#allocation5 + $0xaa8] sm:$0xff]
    %v495 = vld [vmem:[#allocation5 + $0xab0] sm:$0xff]
    %v496 = vld [vmem:[#allocation5 + $0xab8] sm:$0xff]
    %v497 = vld [vmem:[#allocation5 + $0xac0] sm:$0xff]
    %v498 = vld [vmem:[#allocation5 + $0xac8] sm:$0xff]
    %v499 = vld [vmem:[#allocation5 + $0xad0] sm:$0xff]
    %v500 = vld [vmem:[#allocation5 + $0xad8] sm:$0xff]
    %v501 = vld [vmem:[#allocation5 + $0xae0] sm:$0xff]
    %v502 = vld [vmem:[#allocation5 + $0xae8] sm:$0xff]
    %v503 = vld [vmem:[#allocation5 + $0xaf0] sm:$0xff]
    %v504 = vld [vmem:[#allocation5 + $0xaf8] sm:$0xff]
    %v505 = vld [vmem:[#allocation5 + $0xb00] sm:$0xff]
    %v506 = vld [vmem:[#allocation5 + $0xb08] sm:$0xff]
    %v507 = vld [vmem:[#allocation5 + $0xb10] sm:$0xff]
    %v508 = vld [vmem:[#allocation5 + $0xb18] sm:$0xff]
    %v509 = vld [vmem:[#allocation5 + $0xb20] sm:$0xff]
    %v510 = vld [vmem:[#allocation5 + $0xb28] sm:$0xff]
    %v511 = vld [vmem:[#allocation5 + $0xb30] sm:$0xff]
    %v512 = vld [vmem:[#allocation5 + $0xb38] sm:$0xff]
    %v513 = vld [vmem:[#allocation5 + $0xb40] sm:$0xff]
    %v514 = vld [vmem:[#allocation5 + $0xb48] sm:$0xff]
    %v515 = vld [vmem:[#allocation5 + $0xb50] sm:$0xff]
    %v516 = vld [vmem:[#allocation5 + $0xb58] sm:$0xff]
    %v517 = vld [vmem:[#allocation5 + $0xb60] sm:$0xff]
    %v518 = vld [vmem:[#allocation5 + $0xb68] sm:$0xff]
    %v519 = vld [vmem:[#allocation5 + $0xb70] sm:$0xff]
    %v520 = vld [vmem:[#allocation5 + $0xb78] sm:$0xff]
    %v521 = vld [vmem:[#allocation5 + $0xb80] sm:$0xff]
    %v522 = vld [vmem:[#allocation5 + $0xb88] sm:$0xff]
    %v523 = vld [vmem:[#allocation5 + $0xb90] sm:$0xff]
    %v524 = vld [vmem:[#allocation5 + $0xb98] sm:$0xff]
    %v525 = vld [vmem:[#allocation5 + $0xba0] sm:$0xff]
    %v526 = vld [vmem:[#allocation5 + $0xba8] sm:$0xff]
    %v527 = vld [vmem:[#allocation5 + $0xbb0] sm:$0xff]
    %v528 = vld [vmem:[#allocation5 + $0xbb8] sm:$0xff]
    %v529 = vld [vmem:[#allocation5 + $0xbc0] sm:$0xff]
    %v530 = vld [vmem:[#allocation5 + $0xbc8] sm:$0xff]
    %v531 = vld [vmem:[#allocation5 + $0xbd0] sm:$0xff]
    %v532 = vld [vmem:[#allocation5 + $0xbd8] sm:$0xff]
    %v533 = vld [vmem:[#allocation5 + $0xbe0] sm:$0xff]
    %v534 = vld [vmem:[#allocation5 + $0xbe8] sm:$0xff]
    %v535 = vld [vmem:[#allocation5 + $0xbf0] sm:$0xff]
    %v536 = vld [vmem:[#allocation5 + $0xbf8] sm:$0xff]
    %v537 = vld [vmem:[#allocation5 + $0xc00] sm:$0xff]
    %v538 = vld [vmem:[#allocation5 + $0xc08] sm:$0xff]
    %v539 = vld [vmem:[#allocation5 + $0xc10] sm:$0xff]
    %v540 = vld [vmem:[#allocation5 + $0xc18] sm:$0xff]
    %v541 = vld [vmem:[#allocation5 + $0xc20] sm:$0xff]
    %v542 = vld [vmem:[#allocation5 + $0xc28] sm:$0xff]
    %v543 = vld [vmem:[#allocation5 + $0xc30] sm:$0xff]
    %v544 = vld [vmem:[#allocation5 + $0xc38] sm:$0xff]
    %v545 = vld [vmem:[#allocation5 + $0xc40] sm:$0xff]
    %v546 = vld [vmem:[#allocation5 + $0xc48] sm:$0xff]
    %v547 = vld [vmem:[#allocation5 + $0xc50] sm:$0xff]
    %v548 = vld [vmem:[#allocation5 + $0xc58] sm:$0xff]
    %v549 = vld [vmem:[#allocation5 + $0xc60] sm:$0xff]
    %v550 = vld [vmem:[#allocation5 + $0xc68] sm:$0xff]
    %v551 = vld [vmem:[#allocation5 + $0xc70] sm:$0xff]
    %v552 = vld [vmem:[#allocation5 + $0xc78] sm:$0xff]
    %v553 = vld [vmem:[#allocation5 + $0xc80] sm:$0xff]
    %v554 = vld [vmem:[#allocation5 + $0xc88] sm:$0xff]
    %v555 = vld [vmem:[#allocation5 + $0xc90] sm:$0xff]
    %v556 = vld [vmem:[#allocation5 + $0xc98] sm:$0xff]
    %v557 = vld [vmem:[#allocation5 + $0xca0] sm:$0xff]
    %v558 = vld [vmem:[#allocation5 + $0xca8] sm:$0xff]
    %v559 = vld [vmem:[#allocation5 + $0xcb0] sm:$0xff]
    %v560 = vld [vmem:[#allocation5 + $0xcb8] sm:$0xff]
    %v561 = vld [vmem:[#allocation5 + $0xcc0] sm:$0xff]
    %v562 = vld [vmem:[#allocation5 + $0xcc8] sm:$0xff]
    %v563 = vld [vmem:[#allocation5 + $0xcd0] sm:$0xff]
    %v564 = vld [vmem:[#allocation5 + $0xcd8] sm:$0xff]
    %v565 = vld [vmem:[#allocation5 + $0xce0] sm:$0xff]
    %v566 = vld [vmem:[#allocation5 + $0xce8] sm:$0xff]
    %v567 = vld [vmem:[#allocation5 + $0xcf0] sm:$0xff]
    %v568 = vld [vmem:[#allocation5 + $0xcf8] sm:$0xff]
    %v569 = vld [vmem:[#allocation5 + $0xd00] sm:$0xff]
    %v570 = vld [vmem:[#allocation5 + $0xd08] sm:$0xff]
    %v571 = vld [vmem:[#allocation5 + $0xd10] sm:$0xff]
    %v572 = vld [vmem:[#allocation5 + $0xd18] sm:$0xff]
    %v573 = vld [vmem:[#allocation5 + $0xd20] sm:$0xff]
    %v574 = vld [vmem:[#allocation5 + $0xd28] sm:$0xff]
    %v575 = vld [vmem:[#allocation5 + $0xd30] sm:$0xff]
    %v576 = vld [vmem:[#allocation5 + $0xd38] sm:$0xff]
    %v577 = vld [vmem:[#allocation5 + $0xd40] sm:$0xff]
    %v578 = vld [vmem:[#allocation5 + $0xd48] sm:$0xff]
    %v579 = vld [vmem:[#allocation5 + $0xd50] sm:$0xff]
    %v580 = vld [vmem:[#allocation5 + $0xd58] sm:$0xff]
    %v581 = vld [vmem:[#allocation5 + $0xd60] sm:$0xff]
    %v582 = vld [vmem:[#allocation5 + $0xd68] sm:$0xff]
    %v583 = vld [vmem:[#allocation5 + $0xd70] sm:$0xff]
    %v584 = vld [vmem:[#allocation5 + $0xd78] sm:$0xff]
    %v585 = vld [vmem:[#allocation5 + $0xd80] sm:$0xff]
    %v586 = vld [vmem:[#allocation5 + $0xd88] sm:$0xff]
    %v587 = vld [vmem:[#allocation5 + $0xd90] sm:$0xff]
    %v588 = vld [vmem:[#allocation5 + $0xd98] sm:$0xff]
    %v589 = vld [vmem:[#allocation5 + $0xda0] sm:$0xff]
    %v590 = vld [vmem:[#allocation5 + $0xda8] sm:$0xff]
    %v591 = vld [vmem:[#allocation5 + $0xdb0] sm:$0xff]
    %v592 = vld [vmem:[#allocation5 + $0xdb8] sm:$0xff]
    %v593 = vld [vmem:[#allocation5 + $0xdc0] sm:$0xff]
    %v594 = vld [vmem:[#allocation5 + $0xdc8] sm:$0xff]
    %v595 = vld [vmem:[#allocation5 + $0xdd0] sm:$0xff]
    %v596 = vld [vmem:[#allocation5 + $0xdd8] sm:$0xff]
    %v597 = vld [vmem:[#allocation5 + $0xde0] sm:$0xff]
    %v598 = vld [vmem:[#allocation5 + $0xde8] sm:$0xff]
    %v599 = vld [vmem:[#allocation5 + $0xdf0] sm:$0xff]
    %v600 = vld [vmem:[#allocation5 + $0xdf8] sm:$0xff]
    %v601 = vld [vmem:[#allocation5 + $0xe00] sm:$0xff]
    %v602 = vld [vmem:[#allocation5 + $0xe08] sm:$0xff]
    %v603 = vld [vmem:[#allocation5 + $0xe10] sm:$0xff]
    %v604 = vld [vmem:[#allocation5 + $0xe18] sm:$0xff]
    %v605 = vld [vmem:[#allocation5 + $0xe20] sm:$0xff]
    %v606 = vld [vmem:[#allocation5 + $0xe28] sm:$0xff]
    %v607 = vld [vmem:[#allocation5 + $0xe30] sm:$0xff]
    %v608 = vld [vmem:[#allocation5 + $0xe38] sm:$0xff]
    %v609 = vld [vmem:[#allocation5 + $0xe40] sm:$0xff]
    %v610 = vld [vmem:[#allocation5 + $0xe48] sm:$0xff]
    %v611 = vld [vmem:[#allocation5 + $0xe50] sm:$0xff]
    %v612 = vld [vmem:[#allocation5 + $0xe58] sm:$0xff]
    %v613 = vld [vmem:[#allocation5 + $0xe60] sm:$0xff]
    %v614 = vld [vmem:[#allocation5 + $0xe68] sm:$0xff]
    %v615 = vld [vmem:[#allocation5 + $0xe70] sm:$0xff]
    %v616 = vld [vmem:[#allocation5 + $0xe78] sm:$0xff]
    %v617 = vld [vmem:[#allocation5 + $0xe80] sm:$0xff]
    %v618 = vld [vmem:[#allocation5 + $0xe88] sm:$0xff]
    %v619 = vld [vmem:[#allocation5 + $0xe90] sm:$0xff]
    %v620 = vld [vmem:[#allocation5 + $0xe98] sm:$0xff]
    %v621 = vld [vmem:[#allocation5 + $0xea0] sm:$0xff]
    %v622 = vld [vmem:[#allocation5 + $0xea8] sm:$0xff]
    %v623 = vld [vmem:[#allocation5 + $0xeb0] sm:$0xff]
    %v624 = vld [vmem:[#allocation5 + $0xeb8] sm:$0xff]
    %v625 = vld [vmem:[#allocation5 + $0xec0] sm:$0xff]
    %v626 = vld [vmem:[#allocation5 + $0xec8] sm:$0xff]
    %v627 = vld [vmem:[#allocation5 + $0xed0] sm:$0xff]
    %v628 = vld [vmem:[#allocation5 + $0xed8] sm:$0xff]
    %v629 = vld [vmem:[#allocation5 + $0xee0] sm:$0xff]
    %v630 = vld [vmem:[#allocation5 + $0xee8] sm:$0xff]
    %v631 = vld [vmem:[#allocation5 + $0xef0] sm:$0xff]
    %v632 = vld [vmem:[#allocation5 + $0xef8] sm:$0xff]
    %v633 = vld [vmem:[#allocation5 + $0xf00] sm:$0xff]
    %v634 = vld [vmem:[#allocation5 + $0xf08] sm:$0xff]
    %v635 = vld [vmem:[#allocation5 + $0xf10] sm:$0xff]
    %v636 = vld [vmem:[#allocation5 + $0xf18] sm:$0xff]
    %v637 = vld [vmem:[#allocation5 + $0xf20] sm:$0xff]
    %v638 = vld [vmem:[#allocation5 + $0xf28] sm:$0xff]
    %v639 = vld [vmem:[#allocation5 + $0xf30] sm:$0xff]
    %v640 = vld [vmem:[#allocation5 + $0xf38] sm:$0xff]
    %v641 = vld [vmem:[#allocation5 + $0xf40] sm:$0xff]
    %v642 = vld [vmem:[#allocation5 + $0xf48] sm:$0xff]
    %v643 = vld [vmem:[#allocation5 + $0xf50] sm:$0xff]
    %v644 = vld [vmem:[#allocation5 + $0xf58] sm:$0xff]
    %v645 = vld [vmem:[#allocation5 + $0xf60] sm:$0xff]
    %v646 = vld [vmem:[#allocation5 + $0xf68] sm:$0xff]
    %v647 = vld [vmem:[#allocation5 + $0xf70] sm:$0xff]
    %v648 = vld [vmem:[#allocation5 + $0xf78] sm:$0xff]
    %v649 = vld [vmem:[#allocation5 + $0xf80] sm:$0xff]
    %v650 = vld [vmem:[#allocation5 + $0xf88] sm:$0xff]
    %v651 = vld [vmem:[#allocation5 + $0xf90] sm:$0xff]
    %v652 = vld [vmem:[#allocation5 + $0xf98] sm:$0xff]
    %v653 = vld [vmem:[#allocation5 + $0xfa0] sm:$0xff]
    %v654 = vld [vmem:[#allocation5 + $0xfa8] sm:$0xff]
    %v655 = vld [vmem:[#allocation5 + $0xfb0] sm:$0xff]
    %v656 = vld [vmem:[#allocation5 + $0xfb8] sm:$0xff]
    %v657 = vld [vmem:[#allocation5 + $0xfc0] sm:$0xff]
    %v658 = vld [vmem:[#allocation5 + $0xfc8] sm:$0xff]
    %v659 = vld [vmem:[#allocation5 + $0xfd0] sm:$0xff]
    %v660 = vld [vmem:[#allocation5 + $0xfd8] sm:$0xff]
    %v661 = vld [vmem:[#allocation5 + $0xfe0] sm:$0xff]
    %v662 = vld [vmem:[#allocation5 + $0xfe8] sm:$0xff]
    %v663 = vld [vmem:[#allocation5 + $0xff0] sm:$0xff]
    %v664 = vld [vmem:[#allocation5 + $0xff8] sm:$0xff]
    %v665 = vld [vmem:[#allocation7] sm:$0xff]
    %v667 = vlaneseq
    %v668 = vshrl.u32 %v667, 7
    %v669 = vsub.s32 0, %v668
    %v670 = vrot.slane %v665, %v669
    %v671 = vlaneseq
    %v672 = vshrl.u32 %v671, 7
    %v673 = vsub.s32 1, %v672
    %v674 = vrot.slane %v665, %v673
    %v675 = vlaneseq
    %v676 = vshrl.u32 %v675, 7
    %v677 = vsub.s32 2, %v676
    %v678 = vrot.slane %v665, %v677
    %v679 = vlaneseq
    %v680 = vshrl.u32 %v679, 7
    %v681 = vsub.s32 3, %v680
    %v682 = vrot.slane %v665, %v681
    %v683 = vlaneseq
    %v684 = vshrl.u32 %v683, 7
    %v685 = vsub.s32 4, %v684
    %v686 = vrot.slane %v665, %v685
    %v687 = vlaneseq
    %v688 = vshrl.u32 %v687, 7
    %v689 = vsub.s32 5, %v688
    %v690 = vrot.slane %v665, %v689
    %v691 = vlaneseq
    %v692 = vshrl.u32 %v691, 7
    %v693 = vsub.s32 6, %v692
    %v694 = vrot.slane %v665, %v693
    %v695 = vlaneseq
    %v696 = vshrl.u32 %v695, 7
    %v697 = vsub.s32 7, %v696
    %v698 = vrot.slane %v665, %v697
    %v771 = vunpack.c.l.b16 %v89
    %v772 = vunpack.c.h.b16 %v89
    %v773 = vunpack.c.l.b16 %v90
    %v774 = vunpack.c.h.b16 %v90
    %v775 = vunpack.c.l.b16 %v91
    %v776 = vunpack.c.h.b16 %v91
    %v777 = vunpack.c.l.b16 %v92
    %v778 = vunpack.c.h.b16 %v92
    %v779 = vunpack.c.l.b16 %v93
    %v780 = vunpack.c.h.b16 %v93
    %v781 = vunpack.c.l.b16 %v94
    %v782 = vunpack.c.h.b16 %v94
    %v783 = vunpack.c.l.b16 %v95
    %v784 = vunpack.c.h.b16 %v95
    %v785 = vunpack.c.l.b16 %v96
    %v786 = vunpack.c.h.b16 %v96
    %v787 = vunpack.c.l.b16 %v97
    %v788 = vunpack.c.h.b16 %v97
    %v789 = vunpack.c.l.b16 %v98
    %v790 = vunpack.c.h.b16 %v98
    %v791 = vunpack.c.l.b16 %v99
    %v792 = vunpack.c.h.b16 %v99
    %v793 = vunpack.c.l.b16 %v100
    %v794 = vunpack.c.h.b16 %v100
    %v795 = vunpack.c.l.b16 %v101
    %v796 = vunpack.c.h.b16 %v101
    %v797 = vunpack.c.l.b16 %v102
    %v798 = vunpack.c.h.b16 %v102
    %v799 = vunpack.c.l.b16 %v103
    %v800 = vunpack.c.h.b16 %v103
    %v801 = vunpack.c.l.b16 %v104
    %v802 = vunpack.c.h.b16 %v104
    %v803 = vunpack.c.l.b16 %v105
    %v804 = vunpack.c.h.b16 %v105
    %v805 = vunpack.c.l.b16 %v106
    %v806 = vunpack.c.h.b16 %v106
    %v807 = vunpack.c.l.b16 %v107
    %v808 = vunpack.c.h.b16 %v107
    %v809 = vunpack.c.l.b16 %v108
    %v810 = vunpack.c.h.b16 %v108
    %v811 = vunpack.c.l.b16 %v109
    %v812 = vunpack.c.h.b16 %v109
    %v813 = vunpack.c.l.b16 %v110
    %v814 = vunpack.c.h.b16 %v110
    %v815 = vunpack.c.l.b16 %v111
    %v816 = vunpack.c.h.b16 %v111
    %v817 = vunpack.c.l.b16 %v112
    %v818 = vunpack.c.h.b16 %v112
    %v819 = vunpack.c.l.b16 %v113
    %v820 = vunpack.c.h.b16 %v113
    %v821 = vunpack.c.l.b16 %v114
    %v822 = vunpack.c.h.b16 %v114
    %v823 = vunpack.c.l.b16 %v115
    %v824 = vunpack.c.h.b16 %v115
    %v825 = vunpack.c.l.b16 %v116
    %v826 = vunpack.c.h.b16 %v116
    %v827 = vunpack.c.l.b16 %v117
    %v828 = vunpack.c.h.b16 %v117
    %v829 = vunpack.c.l.b16 %v118
    %v830 = vunpack.c.h.b16 %v118
    %v831 = vunpack.c.l.b16 %v119
    %v832 = vunpack.c.h.b16 %v119
    %v833 = vunpack.c.l.b16 %v120
    %v834 = vunpack.c.h.b16 %v120
    %v835 = vunpack.c.l.b16 %v121
    %v836 = vunpack.c.h.b16 %v121
    %v837 = vunpack.c.l.b16 %v122
    %v838 = vunpack.c.h.b16 %v122
    %v839 = vunpack.c.l.b16 %v123
    %v840 = vunpack.c.h.b16 %v123
    %v841 = vunpack.c.l.b16 %v124
    %v842 = vunpack.c.h.b16 %v124
    %v843 = vunpack.c.l.b16 %v125
    %v844 = vunpack.c.h.b16 %v125
    %v845 = vunpack.c.l.b16 %v126
    %v846 = vunpack.c.h.b16 %v126
    %v847 = vunpack.c.l.b16 %v127
    %v848 = vunpack.c.h.b16 %v127
    %v849 = vunpack.c.l.b16 %v128
    %v850 = vunpack.c.h.b16 %v128
    %v851 = vunpack.c.l.b16 %v129
    %v852 = vunpack.c.h.b16 %v129
    %v853 = vunpack.c.l.b16 %v130
    %v854 = vunpack.c.h.b16 %v130
    %v855 = vunpack.c.l.b16 %v131
    %v856 = vunpack.c.h.b16 %v131
    %v857 = vunpack.c.l.b16 %v132
    %v858 = vunpack.c.h.b16 %v132
    %v859 = vunpack.c.l.b16 %v133
    %v860 = vunpack.c.h.b16 %v133
    %v861 = vunpack.c.l.b16 %v134
    %v862 = vunpack.c.h.b16 %v134
    %v863 = vunpack.c.l.b16 %v135
    %v864 = vunpack.c.h.b16 %v135
    %v865 = vunpack.c.l.b16 %v136
    %v866 = vunpack.c.h.b16 %v136
    %v867 = vunpack.c.l.b16 %v137
    %v868 = vunpack.c.h.b16 %v137
    %v869 = vunpack.c.l.b16 %v138
    %v870 = vunpack.c.h.b16 %v138
    %v871 = vunpack.c.l.b16 %v139
    %v872 = vunpack.c.h.b16 %v139
    %v873 = vunpack.c.l.b16 %v140
    %v874 = vunpack.c.h.b16 %v140
    %v875 = vunpack.c.l.b16 %v141
    %v876 = vunpack.c.h.b16 %v141
    %v877 = vunpack.c.l.b16 %v142
    %v878 = vunpack.c.h.b16 %v142
    %v879 = vunpack.c.l.b16 %v143
    %v880 = vunpack.c.h.b16 %v143
    %v881 = vunpack.c.l.b16 %v144
    %v882 = vunpack.c.h.b16 %v144
    %v883 = vunpack.c.l.b16 %v145
    %v884 = vunpack.c.h.b16 %v145
    %v885 = vunpack.c.l.b16 %v146
    %v886 = vunpack.c.h.b16 %v146
    %v887 = vunpack.c.l.b16 %v147
    %v888 = vunpack.c.h.b16 %v147
    %v889 = vunpack.c.l.b16 %v148
    %v890 = vunpack.c.h.b16 %v148
    %v891 = vunpack.c.l.b16 %v149
    %v892 = vunpack.c.h.b16 %v149
    %v893 = vunpack.c.l.b16 %v150
    %v894 = vunpack.c.h.b16 %v150
    %v895 = vunpack.c.l.b16 %v151
    %v896 = vunpack.c.h.b16 %v151
    %v897 = vunpack.c.l.b16 %v152
    %v898 = vunpack.c.h.b16 %v152
    %v899 = vpack.c.b16 %v779, %v771
    %v900 = vpack.c.b16 %v780, %v772
    %v901 = vpack.c.b16 %v781, %v773
    %v902 = vpack.c.b16 %v782, %v774
    %v903 = vpack.c.b16 %v783, %v775
    %v904 = vpack.c.b16 %v784, %v776
    %v905 = vpack.c.b16 %v785, %v777
    %v906 = vpack.c.b16 %v786, %v778
    %v907 = vpack.c.b16 %v795, %v787
    %v908 = vpack.c.b16 %v796, %v788
    %v909 = vpack.c.b16 %v797, %v789
    %v910 = vpack.c.b16 %v798, %v790
    %v911 = vpack.c.b16 %v799, %v791
    %v912 = vpack.c.b16 %v800, %v792
    %v913 = vpack.c.b16 %v801, %v793
    %v914 = vpack.c.b16 %v802, %v794
    %v915 = vpack.c.b16 %v811, %v803
    %v916 = vpack.c.b16 %v812, %v804
    %v917 = vpack.c.b16 %v813, %v805
    %v918 = vpack.c.b16 %v814, %v806
    %v919 = vpack.c.b16 %v815, %v807
    %v920 = vpack.c.b16 %v816, %v808
    %v921 = vpack.c.b16 %v817, %v809
    %v922 = vpack.c.b16 %v818, %v810
    %v923 = vpack.c.b16 %v827, %v819
    %v924 = vpack.c.b16 %v828, %v820
    %v925 = vpack.c.b16 %v829, %v821
    %v926 = vpack.c.b16 %v830, %v822
    %v927 = vpack.c.b16 %v831, %v823
    %v928 = vpack.c.b16 %v832, %v824
    %v929 = vpack.c.b16 %v833, %v825
    %v930 = vpack.c.b16 %v834, %v826
    %v931 = vpack.c.b16 %v843, %v835
    %v932 = vpack.c.b16 %v844, %v836
    %v933 = vpack.c.b16 %v845, %v837
    %v934 = vpack.c.b16 %v846, %v838
    %v935 = vpack.c.b16 %v847, %v839
    %v936 = vpack.c.b16 %v848, %v840
    %v937 = vpack.c.b16 %v849, %v841
    %v938 = vpack.c.b16 %v850, %v842
    %v939 = vpack.c.b16 %v859, %v851
    %v940 = vpack.c.b16 %v860, %v852
    %v941 = vpack.c.b16 %v861, %v853
    %v942 = vpack.c.b16 %v862, %v854
    %v943 = vpack.c.b16 %v863, %v855
    %v944 = vpack.c.b16 %v864, %v856
    %v945 = vpack.c.b16 %v865, %v857
    %v946 = vpack.c.b16 %v866, %v858
    %v947 = vpack.c.b16 %v875, %v867
    %v948 = vpack.c.b16 %v876, %v868
    %v949 = vpack.c.b16 %v877, %v869
    %v950 = vpack.c.b16 %v878, %v870
    %v951 = vpack.c.b16 %v879, %v871
    %v952 = vpack.c.b16 %v880, %v872
    %v953 = vpack.c.b16 %v881, %v873
    %v954 = vpack.c.b16 %v882, %v874
    %v955 = vpack.c.b16 %v891, %v883
    %v956 = vpack.c.b16 %v892, %v884
    %v957 = vpack.c.b16 %v893, %v885
    %v958 = vpack.c.b16 %v894, %v886
    %v959 = vpack.c.b16 %v895, %v887
    %v960 = vpack.c.b16 %v896, %v888
    %v961 = vpack.c.b16 %v897, %v889
    %v962 = vpack.c.b16 %v898, %v890
    %v1539 = vunpack.c.l.b16 %v153
    %v1540 = vunpack.c.h.b16 %v153
    %v1541 = vunpack.c.l.b16 %v154
    %v1542 = vunpack.c.h.b16 %v154
    %v1543 = vunpack.c.l.b16 %v155
    %v1544 = vunpack.c.h.b16 %v155
    %v1545 = vunpack.c.l.b16 %v156
    %v1546 = vunpack.c.h.b16 %v156
    %v1547 = vunpack.c.l.b16 %v157
    %v1548 = vunpack.c.h.b16 %v157
    %v1549 = vunpack.c.l.b16 %v158
    %v1550 = vunpack.c.h.b16 %v158
    %v1551 = vunpack.c.l.b16 %v159
    %v1552 = vunpack.c.h.b16 %v159
    %v1553 = vunpack.c.l.b16 %v160
    %v1554 = vunpack.c.h.b16 %v160
    %v1555 = vunpack.c.l.b16 %v161
    %v1556 = vunpack.c.h.b16 %v161
    %v1557 = vunpack.c.l.b16 %v162
    %v1558 = vunpack.c.h.b16 %v162
    %v1559 = vunpack.c.l.b16 %v163
    %v1560 = vunpack.c.h.b16 %v163
    %v1561 = vunpack.c.l.b16 %v164
    %v1562 = vunpack.c.h.b16 %v164
    %v1563 = vunpack.c.l.b16 %v165
    %v1564 = vunpack.c.h.b16 %v165
    %v1565 = vunpack.c.l.b16 %v166
    %v1566 = vunpack.c.h.b16 %v166
    %v1567 = vunpack.c.l.b16 %v167
    %v1568 = vunpack.c.h.b16 %v167
    %v1569 = vunpack.c.l.b16 %v168
    %v1570 = vunpack.c.h.b16 %v168
    %v1571 = vunpack.c.l.b16 %v169
    %v1572 = vunpack.c.h.b16 %v169
    %v1573 = vunpack.c.l.b16 %v170
    %v1574 = vunpack.c.h.b16 %v170
    %v1575 = vunpack.c.l.b16 %v171
    %v1576 = vunpack.c.h.b16 %v171
    %v1577 = vunpack.c.l.b16 %v172
    %v1578 = vunpack.c.h.b16 %v172
    %v1579 = vunpack.c.l.b16 %v173
    %v1580 = vunpack.c.h.b16 %v173
    %v1581 = vunpack.c.l.b16 %v174
    %v1582 = vunpack.c.h.b16 %v174
    %v1583 = vunpack.c.l.b16 %v175
    %v1584 = vunpack.c.h.b16 %v175
    %v1585 = vunpack.c.l.b16 %v176
    %v1586 = vunpack.c.h.b16 %v176
    %v1587 = vunpack.c.l.b16 %v177
    %v1588 = vunpack.c.h.b16 %v177
    %v1589 = vunpack.c.l.b16 %v178
    %v1590 = vunpack.c.h.b16 %v178
    %v1591 = vunpack.c.l.b16 %v179
    %v1592 = vunpack.c.h.b16 %v179
    %v1593 = vunpack.c.l.b16 %v180
    %v1594 = vunpack.c.h.b16 %v180
    %v1595 = vunpack.c.l.b16 %v181
    %v1596 = vunpack.c.h.b16 %v181
    %v1597 = vunpack.c.l.b16 %v182
    %v1598 = vunpack.c.h.b16 %v182
    %v1599 = vunpack.c.l.b16 %v183
    %v1600 = vunpack.c.h.b16 %v183
    %v1601 = vunpack.c.l.b16 %v184
    %v1602 = vunpack.c.h.b16 %v184
    %v1603 = vunpack.c.l.b16 %v185
    %v1604 = vunpack.c.h.b16 %v185
    %v1605 = vunpack.c.l.b16 %v186
    %v1606 = vunpack.c.h.b16 %v186
    %v1607 = vunpack.c.l.b16 %v187
    %v1608 = vunpack.c.h.b16 %v187
    %v1609 = vunpack.c.l.b16 %v188
    %v1610 = vunpack.c.h.b16 %v188
    %v1611 = vunpack.c.l.b16 %v189
    %v1612 = vunpack.c.h.b16 %v189
    %v1613 = vunpack.c.l.b16 %v190
    %v1614 = vunpack.c.h.b16 %v190
    %v1615 = vunpack.c.l.b16 %v191
    %v1616 = vunpack.c.h.b16 %v191
    %v1617 = vunpack.c.l.b16 %v192
    %v1618 = vunpack.c.h.b16 %v192
    %v1619 = vunpack.c.l.b16 %v193
    %v1620 = vunpack.c.h.b16 %v193
    %v1621 = vunpack.c.l.b16 %v194
    %v1622 = vunpack.c.h.b16 %v194
    %v1623 = vunpack.c.l.b16 %v195
    %v1624 = vunpack.c.h.b16 %v195
    %v1625 = vunpack.c.l.b16 %v196
    %v1626 = vunpack.c.h.b16 %v196
    %v1627 = vunpack.c.l.b16 %v197
    %v1628 = vunpack.c.h.b16 %v197
    %v1629 = vunpack.c.l.b16 %v198
    %v1630 = vunpack.c.h.b16 %v198
    %v1631 = vunpack.c.l.b16 %v199
    %v1632 = vunpack.c.h.b16 %v199
    %v1633 = vunpack.c.l.b16 %v200
    %v1634 = vunpack.c.h.b16 %v200
    %v1635 = vunpack.c.l.b16 %v201
    %v1636 = vunpack.c.h.b16 %v201
    %v1637 = vunpack.c.l.b16 %v202
    %v1638 = vunpack.c.h.b16 %v202
    %v1639 = vunpack.c.l.b16 %v203
    %v1640 = vunpack.c.h.b16 %v203
    %v1641 = vunpack.c.l.b16 %v204
    %v1642 = vunpack.c.h.b16 %v204
    %v1643 = vunpack.c.l.b16 %v205
    %v1644 = vunpack.c.h.b16 %v205
    %v1645 = vunpack.c.l.b16 %v206
    %v1646 = vunpack.c.h.b16 %v206
    %v1647 = vunpack.c.l.b16 %v207
    %v1648 = vunpack.c.h.b16 %v207
    %v1649 = vunpack.c.l.b16 %v208
    %v1650 = vunpack.c.h.b16 %v208
    %v1651 = vunpack.c.l.b16 %v209
    %v1652 = vunpack.c.h.b16 %v209
    %v1653 = vunpack.c.l.b16 %v210
    %v1654 = vunpack.c.h.b16 %v210
    %v1655 = vunpack.c.l.b16 %v211
    %v1656 = vunpack.c.h.b16 %v211
    %v1657 = vunpack.c.l.b16 %v212
    %v1658 = vunpack.c.h.b16 %v212
    %v1659 = vunpack.c.l.b16 %v213
    %v1660 = vunpack.c.h.b16 %v213
    %v1661 = vunpack.c.l.b16 %v214
    %v1662 = vunpack.c.h.b16 %v214
    %v1663 = vunpack.c.l.b16 %v215
    %v1664 = vunpack.c.h.b16 %v215
    %v1665 = vunpack.c.l.b16 %v216
    %v1666 = vunpack.c.h.b16 %v216
    %v1667 = vunpack.c.l.b16 %v217
    %v1668 = vunpack.c.h.b16 %v217
    %v1669 = vunpack.c.l.b16 %v218
    %v1670 = vunpack.c.h.b16 %v218
    %v1671 = vunpack.c.l.b16 %v219
    %v1672 = vunpack.c.h.b16 %v219
    %v1673 = vunpack.c.l.b16 %v220
    %v1674 = vunpack.c.h.b16 %v220
    %v1675 = vunpack.c.l.b16 %v221
    %v1676 = vunpack.c.h.b16 %v221
    %v1677 = vunpack.c.l.b16 %v222
    %v1678 = vunpack.c.h.b16 %v222
    %v1679 = vunpack.c.l.b16 %v223
    %v1680 = vunpack.c.h.b16 %v223
    %v1681 = vunpack.c.l.b16 %v224
    %v1682 = vunpack.c.h.b16 %v224
    %v1683 = vunpack.c.l.b16 %v225
    %v1684 = vunpack.c.h.b16 %v225
    %v1685 = vunpack.c.l.b16 %v226
    %v1686 = vunpack.c.h.b16 %v226
    %v1687 = vunpack.c.l.b16 %v227
    %v1688 = vunpack.c.h.b16 %v227
    %v1689 = vunpack.c.l.b16 %v228
    %v1690 = vunpack.c.h.b16 %v228
    %v1691 = vunpack.c.l.b16 %v229
    %v1692 = vunpack.c.h.b16 %v229
    %v1693 = vunpack.c.l.b16 %v230
    %v1694 = vunpack.c.h.b16 %v230
    %v1695 = vunpack.c.l.b16 %v231
    %v1696 = vunpack.c.h.b16 %v231
    %v1697 = vunpack.c.l.b16 %v232
    %v1698 = vunpack.c.h.b16 %v232
    %v1699 = vunpack.c.l.b16 %v233
    %v1700 = vunpack.c.h.b16 %v233
    %v1701 = vunpack.c.l.b16 %v234
    %v1702 = vunpack.c.h.b16 %v234
    %v1703 = vunpack.c.l.b16 %v235
    %v1704 = vunpack.c.h.b16 %v235
    %v1705 = vunpack.c.l.b16 %v236
    %v1706 = vunpack.c.h.b16 %v236
    %v1707 = vunpack.c.l.b16 %v237
    %v1708 = vunpack.c.h.b16 %v237
    %v1709 = vunpack.c.l.b16 %v238
    %v1710 = vunpack.c.h.b16 %v238
    %v1711 = vunpack.c.l.b16 %v239
    %v1712 = vunpack.c.h.b16 %v239
    %v1713 = vunpack.c.l.b16 %v240
    %v1714 = vunpack.c.h.b16 %v240
    %v1715 = vunpack.c.l.b16 %v241
    %v1716 = vunpack.c.h.b16 %v241
    %v1717 = vunpack.c.l.b16 %v242
    %v1718 = vunpack.c.h.b16 %v242
    %v1719 = vunpack.c.l.b16 %v243
    %v1720 = vunpack.c.h.b16 %v243
    %v1721 = vunpack.c.l.b16 %v244
    %v1722 = vunpack.c.h.b16 %v244
    %v1723 = vunpack.c.l.b16 %v245
    %v1724 = vunpack.c.h.b16 %v245
    %v1725 = vunpack.c.l.b16 %v246
    %v1726 = vunpack.c.h.b16 %v246
    %v1727 = vunpack.c.l.b16 %v247
    %v1728 = vunpack.c.h.b16 %v247
    %v1729 = vunpack.c.l.b16 %v248
    %v1730 = vunpack.c.h.b16 %v248
    %v1731 = vunpack.c.l.b16 %v249
    %v1732 = vunpack.c.h.b16 %v249
    %v1733 = vunpack.c.l.b16 %v250
    %v1734 = vunpack.c.h.b16 %v250
    %v1735 = vunpack.c.l.b16 %v251
    %v1736 = vunpack.c.h.b16 %v251
    %v1737 = vunpack.c.l.b16 %v252
    %v1738 = vunpack.c.h.b16 %v252
    %v1739 = vunpack.c.l.b16 %v253
    %v1740 = vunpack.c.h.b16 %v253
    %v1741 = vunpack.c.l.b16 %v254
    %v1742 = vunpack.c.h.b16 %v254
    %v1743 = vunpack.c.l.b16 %v255
    %v1744 = vunpack.c.h.b16 %v255
    %v1745 = vunpack.c.l.b16 %v256
    %v1746 = vunpack.c.h.b16 %v256
    %v1747 = vunpack.c.l.b16 %v257
    %v1748 = vunpack.c.h.b16 %v257
    %v1749 = vunpack.c.l.b16 %v258
    %v1750 = vunpack.c.h.b16 %v258
    %v1751 = vunpack.c.l.b16 %v259
    %v1752 = vunpack.c.h.b16 %v259
    %v1753 = vunpack.c.l.b16 %v260
    %v1754 = vunpack.c.h.b16 %v260
    %v1755 = vunpack.c.l.b16 %v261
    %v1756 = vunpack.c.h.b16 %v261
    %v1757 = vunpack.c.l.b16 %v262
    %v1758 = vunpack.c.h.b16 %v262
    %v1759 = vunpack.c.l.b16 %v263
    %v1760 = vunpack.c.h.b16 %v263
    %v1761 = vunpack.c.l.b16 %v264
    %v1762 = vunpack.c.h.b16 %v264
    %v1763 = vunpack.c.l.b16 %v265
    %v1764 = vunpack.c.h.b16 %v265
    %v1765 = vunpack.c.l.b16 %v266
    %v1766 = vunpack.c.h.b16 %v266
    %v1767 = vunpack.c.l.b16 %v267
    %v1768 = vunpack.c.h.b16 %v267
    %v1769 = vunpack.c.l.b16 %v268
    %v1770 = vunpack.c.h.b16 %v268
    %v1771 = vunpack.c.l.b16 %v269
    %v1772 = vunpack.c.h.b16 %v269
    %v1773 = vunpack.c.l.b16 %v270
    %v1774 = vunpack.c.h.b16 %v270
    %v1775 = vunpack.c.l.b16 %v271
    %v1776 = vunpack.c.h.b16 %v271
    %v1777 = vunpack.c.l.b16 %v272
    %v1778 = vunpack.c.h.b16 %v272
    %v1779 = vunpack.c.l.b16 %v273
    %v1780 = vunpack.c.h.b16 %v273
    %v1781 = vunpack.c.l.b16 %v274
    %v1782 = vunpack.c.h.b16 %v274
    %v1783 = vunpack.c.l.b16 %v275
    %v1784 = vunpack.c.h.b16 %v275
    %v1785 = vunpack.c.l.b16 %v276
    %v1786 = vunpack.c.h.b16 %v276
    %v1787 = vunpack.c.l.b16 %v277
    %v1788 = vunpack.c.h.b16 %v277
    %v1789 = vunpack.c.l.b16 %v278
    %v1790 = vunpack.c.h.b16 %v278
    %v1791 = vunpack.c.l.b16 %v279
    %v1792 = vunpack.c.h.b16 %v279
    %v1793 = vunpack.c.l.b16 %v280
    %v1794 = vunpack.c.h.b16 %v280
    %v1795 = vunpack.c.l.b16 %v281
    %v1796 = vunpack.c.h.b16 %v281
    %v1797 = vunpack.c.l.b16 %v282
    %v1798 = vunpack.c.h.b16 %v282
    %v1799 = vunpack.c.l.b16 %v283
    %v1800 = vunpack.c.h.b16 %v283
    %v1801 = vunpack.c.l.b16 %v284
    %v1802 = vunpack.c.h.b16 %v284
    %v1803 = vunpack.c.l.b16 %v285
    %v1804 = vunpack.c.h.b16 %v285
    %v1805 = vunpack.c.l.b16 %v286
    %v1806 = vunpack.c.h.b16 %v286
    %v1807 = vunpack.c.l.b16 %v287
    %v1808 = vunpack.c.h.b16 %v287
    %v1809 = vunpack.c.l.b16 %v288
    %v1810 = vunpack.c.h.b16 %v288
    %v1811 = vunpack.c.l.b16 %v289
    %v1812 = vunpack.c.h.b16 %v289
    %v1813 = vunpack.c.l.b16 %v290
    %v1814 = vunpack.c.h.b16 %v290
    %v1815 = vunpack.c.l.b16 %v291
    %v1816 = vunpack.c.h.b16 %v291
    %v1817 = vunpack.c.l.b16 %v292
    %v1818 = vunpack.c.h.b16 %v292
    %v1819 = vunpack.c.l.b16 %v293
    %v1820 = vunpack.c.h.b16 %v293
    %v1821 = vunpack.c.l.b16 %v294
    %v1822 = vunpack.c.h.b16 %v294
    %v1823 = vunpack.c.l.b16 %v295
    %v1824 = vunpack.c.h.b16 %v295
    %v1825 = vunpack.c.l.b16 %v296
    %v1826 = vunpack.c.h.b16 %v296
    %v1827 = vunpack.c.l.b16 %v297
    %v1828 = vunpack.c.h.b16 %v297
    %v1829 = vunpack.c.l.b16 %v298
    %v1830 = vunpack.c.h.b16 %v298
    %v1831 = vunpack.c.l.b16 %v299
    %v1832 = vunpack.c.h.b16 %v299
    %v1833 = vunpack.c.l.b16 %v300
    %v1834 = vunpack.c.h.b16 %v300
    %v1835 = vunpack.c.l.b16 %v301
    %v1836 = vunpack.c.h.b16 %v301
    %v1837 = vunpack.c.l.b16 %v302
    %v1838 = vunpack.c.h.b16 %v302
    %v1839 = vunpack.c.l.b16 %v303
    %v1840 = vunpack.c.h.b16 %v303
    %v1841 = vunpack.c.l.b16 %v304
    %v1842 = vunpack.c.h.b16 %v304
    %v1843 = vunpack.c.l.b16 %v305
    %v1844 = vunpack.c.h.b16 %v305
    %v1845 = vunpack.c.l.b16 %v306
    %v1846 = vunpack.c.h.b16 %v306
    %v1847 = vunpack.c.l.b16 %v307
    %v1848 = vunpack.c.h.b16 %v307
    %v1849 = vunpack.c.l.b16 %v308
    %v1850 = vunpack.c.h.b16 %v308
    %v1851 = vunpack.c.l.b16 %v309
    %v1852 = vunpack.c.h.b16 %v309
    %v1853 = vunpack.c.l.b16 %v310
    %v1854 = vunpack.c.h.b16 %v310
    %v1855 = vunpack.c.l.b16 %v311
    %v1856 = vunpack.c.h.b16 %v311
    %v1857 = vunpack.c.l.b16 %v312
    %v1858 = vunpack.c.h.b16 %v312
    %v1859 = vunpack.c.l.b16 %v313
    %v1860 = vunpack.c.h.b16 %v313
    %v1861 = vunpack.c.l.b16 %v314
    %v1862 = vunpack.c.h.b16 %v314
    %v1863 = vunpack.c.l.b16 %v315
    %v1864 = vunpack.c.h.b16 %v315
    %v1865 = vunpack.c.l.b16 %v316
    %v1866 = vunpack.c.h.b16 %v316
    %v1867 = vunpack.c.l.b16 %v317
    %v1868 = vunpack.c.h.b16 %v317
    %v1869 = vunpack.c.l.b16 %v318
    %v1870 = vunpack.c.h.b16 %v318
    %v1871 = vunpack.c.l.b16 %v319
    %v1872 = vunpack.c.h.b16 %v319
    %v1873 = vunpack.c.l.b16 %v320
    %v1874 = vunpack.c.h.b16 %v320
    %v1875 = vunpack.c.l.b16 %v321
    %v1876 = vunpack.c.h.b16 %v321
    %v1877 = vunpack.c.l.b16 %v322
    %v1878 = vunpack.c.h.b16 %v322
    %v1879 = vunpack.c.l.b16 %v323
    %v1880 = vunpack.c.h.b16 %v323
    %v1881 = vunpack.c.l.b16 %v324
    %v1882 = vunpack.c.h.b16 %v324
    %v1883 = vunpack.c.l.b16 %v325
    %v1884 = vunpack.c.h.b16 %v325
    %v1885 = vunpack.c.l.b16 %v326
    %v1886 = vunpack.c.h.b16 %v326
    %v1887 = vunpack.c.l.b16 %v327
    %v1888 = vunpack.c.h.b16 %v327
    %v1889 = vunpack.c.l.b16 %v328
    %v1890 = vunpack.c.h.b16 %v328
    %v1891 = vunpack.c.l.b16 %v329
    %v1892 = vunpack.c.h.b16 %v329
    %v1893 = vunpack.c.l.b16 %v330
    %v1894 = vunpack.c.h.b16 %v330
    %v1895 = vunpack.c.l.b16 %v331
    %v1896 = vunpack.c.h.b16 %v331
    %v1897 = vunpack.c.l.b16 %v332
    %v1898 = vunpack.c.h.b16 %v332
    %v1899 = vunpack.c.l.b16 %v333
    %v1900 = vunpack.c.h.b16 %v333
    %v1901 = vunpack.c.l.b16 %v334
    %v1902 = vunpack.c.h.b16 %v334
    %v1903 = vunpack.c.l.b16 %v335
    %v1904 = vunpack.c.h.b16 %v335
    %v1905 = vunpack.c.l.b16 %v336
    %v1906 = vunpack.c.h.b16 %v336
    %v1907 = vunpack.c.l.b16 %v337
    %v1908 = vunpack.c.h.b16 %v337
    %v1909 = vunpack.c.l.b16 %v338
    %v1910 = vunpack.c.h.b16 %v338
    %v1911 = vunpack.c.l.b16 %v339
    %v1912 = vunpack.c.h.b16 %v339
    %v1913 = vunpack.c.l.b16 %v340
    %v1914 = vunpack.c.h.b16 %v340
    %v1915 = vunpack.c.l.b16 %v341
    %v1916 = vunpack.c.h.b16 %v341
    %v1917 = vunpack.c.l.b16 %v342
    %v1918 = vunpack.c.h.b16 %v342
    %v1919 = vunpack.c.l.b16 %v343
    %v1920 = vunpack.c.h.b16 %v343
    %v1921 = vunpack.c.l.b16 %v344
    %v1922 = vunpack.c.h.b16 %v344
    %v1923 = vunpack.c.l.b16 %v345
    %v1924 = vunpack.c.h.b16 %v345
    %v1925 = vunpack.c.l.b16 %v346
    %v1926 = vunpack.c.h.b16 %v346
    %v1927 = vunpack.c.l.b16 %v347
    %v1928 = vunpack.c.h.b16 %v347
    %v1929 = vunpack.c.l.b16 %v348
    %v1930 = vunpack.c.h.b16 %v348
    %v1931 = vunpack.c.l.b16 %v349
    %v1932 = vunpack.c.h.b16 %v349
    %v1933 = vunpack.c.l.b16 %v350
    %v1934 = vunpack.c.h.b16 %v350
    %v1935 = vunpack.c.l.b16 %v351
    %v1936 = vunpack.c.h.b16 %v351
    %v1937 = vunpack.c.l.b16 %v352
    %v1938 = vunpack.c.h.b16 %v352
    %v1939 = vunpack.c.l.b16 %v353
    %v1940 = vunpack.c.h.b16 %v353
    %v1941 = vunpack.c.l.b16 %v354
    %v1942 = vunpack.c.h.b16 %v354
    %v1943 = vunpack.c.l.b16 %v355
    %v1944 = vunpack.c.h.b16 %v355
    %v1945 = vunpack.c.l.b16 %v356
    %v1946 = vunpack.c.h.b16 %v356
    %v1947 = vunpack.c.l.b16 %v357
    %v1948 = vunpack.c.h.b16 %v357
    %v1949 = vunpack.c.l.b16 %v358
    %v1950 = vunpack.c.h.b16 %v358
    %v1951 = vunpack.c.l.b16 %v359
    %v1952 = vunpack.c.h.b16 %v359
    %v1953 = vunpack.c.l.b16 %v360
    %v1954 = vunpack.c.h.b16 %v360
    %v1955 = vunpack.c.l.b16 %v361
    %v1956 = vunpack.c.h.b16 %v361
    %v1957 = vunpack.c.l.b16 %v362
    %v1958 = vunpack.c.h.b16 %v362
    %v1959 = vunpack.c.l.b16 %v363
    %v1960 = vunpack.c.h.b16 %v363
    %v1961 = vunpack.c.l.b16 %v364
    %v1962 = vunpack.c.h.b16 %v364
    %v1963 = vunpack.c.l.b16 %v365
    %v1964 = vunpack.c.h.b16 %v365
    %v1965 = vunpack.c.l.b16 %v366
    %v1966 = vunpack.c.h.b16 %v366
    %v1967 = vunpack.c.l.b16 %v367
    %v1968 = vunpack.c.h.b16 %v367
    %v1969 = vunpack.c.l.b16 %v368
    %v1970 = vunpack.c.h.b16 %v368
    %v1971 = vunpack.c.l.b16 %v369
    %v1972 = vunpack.c.h.b16 %v369
    %v1973 = vunpack.c.l.b16 %v370
    %v1974 = vunpack.c.h.b16 %v370
    %v1975 = vunpack.c.l.b16 %v371
    %v1976 = vunpack.c.h.b16 %v371
    %v1977 = vunpack.c.l.b16 %v372
    %v1978 = vunpack.c.h.b16 %v372
    %v1979 = vunpack.c.l.b16 %v373
    %v1980 = vunpack.c.h.b16 %v373
    %v1981 = vunpack.c.l.b16 %v374
    %v1982 = vunpack.c.h.b16 %v374
    %v1983 = vunpack.c.l.b16 %v375
    %v1984 = vunpack.c.h.b16 %v375
    %v1985 = vunpack.c.l.b16 %v376
    %v1986 = vunpack.c.h.b16 %v376
    %v1987 = vunpack.c.l.b16 %v377
    %v1988 = vunpack.c.h.b16 %v377
    %v1989 = vunpack.c.l.b16 %v378
    %v1990 = vunpack.c.h.b16 %v378
    %v1991 = vunpack.c.l.b16 %v379
    %v1992 = vunpack.c.h.b16 %v379
    %v1993 = vunpack.c.l.b16 %v380
    %v1994 = vunpack.c.h.b16 %v380
    %v1995 = vunpack.c.l.b16 %v381
    %v1996 = vunpack.c.h.b16 %v381
    %v1997 = vunpack.c.l.b16 %v382
    %v1998 = vunpack.c.h.b16 %v382
    %v1999 = vunpack.c.l.b16 %v383
    %v2000 = vunpack.c.h.b16 %v383
    %v2001 = vunpack.c.l.b16 %v384
    %v2002 = vunpack.c.h.b16 %v384
    %v2003 = vunpack.c.l.b16 %v385
    %v2004 = vunpack.c.h.b16 %v385
    %v2005 = vunpack.c.l.b16 %v386
    %v2006 = vunpack.c.h.b16 %v386
    %v2007 = vunpack.c.l.b16 %v387
    %v2008 = vunpack.c.h.b16 %v387
    %v2009 = vunpack.c.l.b16 %v388
    %v2010 = vunpack.c.h.b16 %v388
    %v2011 = vunpack.c.l.b16 %v389
    %v2012 = vunpack.c.h.b16 %v389
    %v2013 = vunpack.c.l.b16 %v390
    %v2014 = vunpack.c.h.b16 %v390
    %v2015 = vunpack.c.l.b16 %v391
    %v2016 = vunpack.c.h.b16 %v391
    %v2017 = vunpack.c.l.b16 %v392
    %v2018 = vunpack.c.h.b16 %v392
    %v2019 = vunpack.c.l.b16 %v393
    %v2020 = vunpack.c.h.b16 %v393
    %v2021 = vunpack.c.l.b16 %v394
    %v2022 = vunpack.c.h.b16 %v394
    %v2023 = vunpack.c.l.b16 %v395
    %v2024 = vunpack.c.h.b16 %v395
    %v2025 = vunpack.c.l.b16 %v396
    %v2026 = vunpack.c.h.b16 %v396
    %v2027 = vunpack.c.l.b16 %v397
    %v2028 = vunpack.c.h.b16 %v397
    %v2029 = vunpack.c.l.b16 %v398
    %v2030 = vunpack.c.h.b16 %v398
    %v2031 = vunpack.c.l.b16 %v399
    %v2032 = vunpack.c.h.b16 %v399
    %v2033 = vunpack.c.l.b16 %v400
    %v2034 = vunpack.c.h.b16 %v400
    %v2035 = vunpack.c.l.b16 %v401
    %v2036 = vunpack.c.h.b16 %v401
    %v2037 = vunpack.c.l.b16 %v402
    %v2038 = vunpack.c.h.b16 %v402
    %v2039 = vunpack.c.l.b16 %v403
    %v2040 = vunpack.c.h.b16 %v403
    %v2041 = vunpack.c.l.b16 %v404
    %v2042 = vunpack.c.h.b16 %v404
    %v2043 = vunpack.c.l.b16 %v405
    %v2044 = vunpack.c.h.b16 %v405
    %v2045 = vunpack.c.l.b16 %v406
    %v2046 = vunpack.c.h.b16 %v406
    %v2047 = vunpack.c.l.b16 %v407
    %v2048 = vunpack.c.h.b16 %v407
    %v2049 = vunpack.c.l.b16 %v408
    %v2050 = vunpack.c.h.b16 %v408
    %v2051 = vunpack.c.l.b16 %v409
    %v2052 = vunpack.c.h.b16 %v409
    %v2053 = vunpack.c.l.b16 %v410
    %v2054 = vunpack.c.h.b16 %v410
    %v2055 = vunpack.c.l.b16 %v411
    %v2056 = vunpack.c.h.b16 %v411
    %v2057 = vunpack.c.l.b16 %v412
    %v2058 = vunpack.c.h.b16 %v412
    %v2059 = vunpack.c.l.b16 %v413
    %v2060 = vunpack.c.h.b16 %v413
    %v2061 = vunpack.c.l.b16 %v414
    %v2062 = vunpack.c.h.b16 %v414
    %v2063 = vunpack.c.l.b16 %v415
    %v2064 = vunpack.c.h.b16 %v415
    %v2065 = vunpack.c.l.b16 %v416
    %v2066 = vunpack.c.h.b16 %v416
    %v2067 = vunpack.c.l.b16 %v417
    %v2068 = vunpack.c.h.b16 %v417
    %v2069 = vunpack.c.l.b16 %v418
    %v2070 = vunpack.c.h.b16 %v418
    %v2071 = vunpack.c.l.b16 %v419
    %v2072 = vunpack.c.h.b16 %v419
    %v2073 = vunpack.c.l.b16 %v420
    %v2074 = vunpack.c.h.b16 %v420
    %v2075 = vunpack.c.l.b16 %v421
    %v2076 = vunpack.c.h.b16 %v421
    %v2077 = vunpack.c.l.b16 %v422
    %v2078 = vunpack.c.h.b16 %v422
    %v2079 = vunpack.c.l.b16 %v423
    %v2080 = vunpack.c.h.b16 %v423
    %v2081 = vunpack.c.l.b16 %v424
    %v2082 = vunpack.c.h.b16 %v424
    %v2083 = vunpack.c.l.b16 %v425
    %v2084 = vunpack.c.h.b16 %v425
    %v2085 = vunpack.c.l.b16 %v426
    %v2086 = vunpack.c.h.b16 %v426
    %v2087 = vunpack.c.l.b16 %v427
    %v2088 = vunpack.c.h.b16 %v427
    %v2089 = vunpack.c.l.b16 %v428
    %v2090 = vunpack.c.h.b16 %v428
    %v2091 = vunpack.c.l.b16 %v429
    %v2092 = vunpack.c.h.b16 %v429
    %v2093 = vunpack.c.l.b16 %v430
    %v2094 = vunpack.c.h.b16 %v430
    %v2095 = vunpack.c.l.b16 %v431
    %v2096 = vunpack.c.h.b16 %v431
    %v2097 = vunpack.c.l.b16 %v432
    %v2098 = vunpack.c.h.b16 %v432
    %v2099 = vunpack.c.l.b16 %v433
    %v2100 = vunpack.c.h.b16 %v433
    %v2101 = vunpack.c.l.b16 %v434
    %v2102 = vunpack.c.h.b16 %v434
    %v2103 = vunpack.c.l.b16 %v435
    %v2104 = vunpack.c.h.b16 %v435
    %v2105 = vunpack.c.l.b16 %v436
    %v2106 = vunpack.c.h.b16 %v436
    %v2107 = vunpack.c.l.b16 %v437
    %v2108 = vunpack.c.h.b16 %v437
    %v2109 = vunpack.c.l.b16 %v438
    %v2110 = vunpack.c.h.b16 %v438
    %v2111 = vunpack.c.l.b16 %v439
    %v2112 = vunpack.c.h.b16 %v439
    %v2113 = vunpack.c.l.b16 %v440
    %v2114 = vunpack.c.h.b16 %v440
    %v2115 = vunpack.c.l.b16 %v441
    %v2116 = vunpack.c.h.b16 %v441
    %v2117 = vunpack.c.l.b16 %v442
    %v2118 = vunpack.c.h.b16 %v442
    %v2119 = vunpack.c.l.b16 %v443
    %v2120 = vunpack.c.h.b16 %v443
    %v2121 = vunpack.c.l.b16 %v444
    %v2122 = vunpack.c.h.b16 %v444
    %v2123 = vunpack.c.l.b16 %v445
    %v2124 = vunpack.c.h.b16 %v445
    %v2125 = vunpack.c.l.b16 %v446
    %v2126 = vunpack.c.h.b16 %v446
    %v2127 = vunpack.c.l.b16 %v447
    %v2128 = vunpack.c.h.b16 %v447
    %v2129 = vunpack.c.l.b16 %v448
    %v2130 = vunpack.c.h.b16 %v448
    %v2131 = vunpack.c.l.b16 %v449
    %v2132 = vunpack.c.h.b16 %v449
    %v2133 = vunpack.c.l.b16 %v450
    %v2134 = vunpack.c.h.b16 %v450
    %v2135 = vunpack.c.l.b16 %v451
    %v2136 = vunpack.c.h.b16 %v451
    %v2137 = vunpack.c.l.b16 %v452
    %v2138 = vunpack.c.h.b16 %v452
    %v2139 = vunpack.c.l.b16 %v453
    %v2140 = vunpack.c.h.b16 %v453
    %v2141 = vunpack.c.l.b16 %v454
    %v2142 = vunpack.c.h.b16 %v454
    %v2143 = vunpack.c.l.b16 %v455
    %v2144 = vunpack.c.h.b16 %v455
    %v2145 = vunpack.c.l.b16 %v456
    %v2146 = vunpack.c.h.b16 %v456
    %v2147 = vunpack.c.l.b16 %v457
    %v2148 = vunpack.c.h.b16 %v457
    %v2149 = vunpack.c.l.b16 %v458
    %v2150 = vunpack.c.h.b16 %v458
    %v2151 = vunpack.c.l.b16 %v459
    %v2152 = vunpack.c.h.b16 %v459
    %v2153 = vunpack.c.l.b16 %v460
    %v2154 = vunpack.c.h.b16 %v460
    %v2155 = vunpack.c.l.b16 %v461
    %v2156 = vunpack.c.h.b16 %v461
    %v2157 = vunpack.c.l.b16 %v462
    %v2158 = vunpack.c.h.b16 %v462
    %v2159 = vunpack.c.l.b16 %v463
    %v2160 = vunpack.c.h.b16 %v463
    %v2161 = vunpack.c.l.b16 %v464
    %v2162 = vunpack.c.h.b16 %v464
    %v2163 = vunpack.c.l.b16 %v465
    %v2164 = vunpack.c.h.b16 %v465
    %v2165 = vunpack.c.l.b16 %v466
    %v2166 = vunpack.c.h.b16 %v466
    %v2167 = vunpack.c.l.b16 %v467
    %v2168 = vunpack.c.h.b16 %v467
    %v2169 = vunpack.c.l.b16 %v468
    %v2170 = vunpack.c.h.b16 %v468
    %v2171 = vunpack.c.l.b16 %v469
    %v2172 = vunpack.c.h.b16 %v469
    %v2173 = vunpack.c.l.b16 %v470
    %v2174 = vunpack.c.h.b16 %v470
    %v2175 = vunpack.c.l.b16 %v471
    %v2176 = vunpack.c.h.b16 %v471
    %v2177 = vunpack.c.l.b16 %v472
    %v2178 = vunpack.c.h.b16 %v472
    %v2179 = vunpack.c.l.b16 %v473
    %v2180 = vunpack.c.h.b16 %v473
    %v2181 = vunpack.c.l.b16 %v474
    %v2182 = vunpack.c.h.b16 %v474
    %v2183 = vunpack.c.l.b16 %v475
    %v2184 = vunpack.c.h.b16 %v475
    %v2185 = vunpack.c.l.b16 %v476
    %v2186 = vunpack.c.h.b16 %v476
    %v2187 = vunpack.c.l.b16 %v477
    %v2188 = vunpack.c.h.b16 %v477
    %v2189 = vunpack.c.l.b16 %v478
    %v2190 = vunpack.c.h.b16 %v478
    %v2191 = vunpack.c.l.b16 %v479
    %v2192 = vunpack.c.h.b16 %v479
    %v2193 = vunpack.c.l.b16 %v480
    %v2194 = vunpack.c.h.b16 %v480
    %v2195 = vunpack.c.l.b16 %v481
    %v2196 = vunpack.c.h.b16 %v481
    %v2197 = vunpack.c.l.b16 %v482
    %v2198 = vunpack.c.h.b16 %v482
    %v2199 = vunpack.c.l.b16 %v483
    %v2200 = vunpack.c.h.b16 %v483
    %v2201 = vunpack.c.l.b16 %v484
    %v2202 = vunpack.c.h.b16 %v484
    %v2203 = vunpack.c.l.b16 %v485
    %v2204 = vunpack.c.h.b16 %v485
    %v2205 = vunpack.c.l.b16 %v486
    %v2206 = vunpack.c.h.b16 %v486
    %v2207 = vunpack.c.l.b16 %v487
    %v2208 = vunpack.c.h.b16 %v487
    %v2209 = vunpack.c.l.b16 %v488
    %v2210 = vunpack.c.h.b16 %v488
    %v2211 = vunpack.c.l.b16 %v489
    %v2212 = vunpack.c.h.b16 %v489
    %v2213 = vunpack.c.l.b16 %v490
    %v2214 = vunpack.c.h.b16 %v490
    %v2215 = vunpack.c.l.b16 %v491
    %v2216 = vunpack.c.h.b16 %v491
    %v2217 = vunpack.c.l.b16 %v492
    %v2218 = vunpack.c.h.b16 %v492
    %v2219 = vunpack.c.l.b16 %v493
    %v2220 = vunpack.c.h.b16 %v493
    %v2221 = vunpack.c.l.b16 %v494
    %v2222 = vunpack.c.h.b16 %v494
    %v2223 = vunpack.c.l.b16 %v495
    %v2224 = vunpack.c.h.b16 %v495
    %v2225 = vunpack.c.l.b16 %v496
    %v2226 = vunpack.c.h.b16 %v496
    %v2227 = vunpack.c.l.b16 %v497
    %v2228 = vunpack.c.h.b16 %v497
    %v2229 = vunpack.c.l.b16 %v498
    %v2230 = vunpack.c.h.b16 %v498
    %v2231 = vunpack.c.l.b16 %v499
    %v2232 = vunpack.c.h.b16 %v499
    %v2233 = vunpack.c.l.b16 %v500
    %v2234 = vunpack.c.h.b16 %v500
    %v2235 = vunpack.c.l.b16 %v501
    %v2236 = vunpack.c.h.b16 %v501
    %v2237 = vunpack.c.l.b16 %v502
    %v2238 = vunpack.c.h.b16 %v502
    %v2239 = vunpack.c.l.b16 %v503
    %v2240 = vunpack.c.h.b16 %v503
    %v2241 = vunpack.c.l.b16 %v504
    %v2242 = vunpack.c.h.b16 %v504
    %v2243 = vunpack.c.l.b16 %v505
    %v2244 = vunpack.c.h.b16 %v505
    %v2245 = vunpack.c.l.b16 %v506
    %v2246 = vunpack.c.h.b16 %v506
    %v2247 = vunpack.c.l.b16 %v507
    %v2248 = vunpack.c.h.b16 %v507
    %v2249 = vunpack.c.l.b16 %v508
    %v2250 = vunpack.c.h.b16 %v508
    %v2251 = vunpack.c.l.b16 %v509
    %v2252 = vunpack.c.h.b16 %v509
    %v2253 = vunpack.c.l.b16 %v510
    %v2254 = vunpack.c.h.b16 %v510
    %v2255 = vunpack.c.l.b16 %v511
    %v2256 = vunpack.c.h.b16 %v511
    %v2257 = vunpack.c.l.b16 %v512
    %v2258 = vunpack.c.h.b16 %v512
    %v2259 = vunpack.c.l.b16 %v513
    %v2260 = vunpack.c.h.b16 %v513
    %v2261 = vunpack.c.l.b16 %v514
    %v2262 = vunpack.c.h.b16 %v514
    %v2263 = vunpack.c.l.b16 %v515
    %v2264 = vunpack.c.h.b16 %v515
    %v2265 = vunpack.c.l.b16 %v516
    %v2266 = vunpack.c.h.b16 %v516
    %v2267 = vunpack.c.l.b16 %v517
    %v2268 = vunpack.c.h.b16 %v517
    %v2269 = vunpack.c.l.b16 %v518
    %v2270 = vunpack.c.h.b16 %v518
    %v2271 = vunpack.c.l.b16 %v519
    %v2272 = vunpack.c.h.b16 %v519
    %v2273 = vunpack.c.l.b16 %v520
    %v2274 = vunpack.c.h.b16 %v520
    %v2275 = vunpack.c.l.b16 %v521
    %v2276 = vunpack.c.h.b16 %v521
    %v2277 = vunpack.c.l.b16 %v522
    %v2278 = vunpack.c.h.b16 %v522
    %v2279 = vunpack.c.l.b16 %v523
    %v2280 = vunpack.c.h.b16 %v523
    %v2281 = vunpack.c.l.b16 %v524
    %v2282 = vunpack.c.h.b16 %v524
    %v2283 = vunpack.c.l.b16 %v525
    %v2284 = vunpack.c.h.b16 %v525
    %v2285 = vunpack.c.l.b16 %v526
    %v2286 = vunpack.c.h.b16 %v526
    %v2287 = vunpack.c.l.b16 %v527
    %v2288 = vunpack.c.h.b16 %v527
    %v2289 = vunpack.c.l.b16 %v528
    %v2290 = vunpack.c.h.b16 %v528
    %v2291 = vunpack.c.l.b16 %v529
    %v2292 = vunpack.c.h.b16 %v529
    %v2293 = vunpack.c.l.b16 %v530
    %v2294 = vunpack.c.h.b16 %v530
    %v2295 = vunpack.c.l.b16 %v531
    %v2296 = vunpack.c.h.b16 %v531
    %v2297 = vunpack.c.l.b16 %v532
    %v2298 = vunpack.c.h.b16 %v532
    %v2299 = vunpack.c.l.b16 %v533
    %v2300 = vunpack.c.h.b16 %v533
    %v2301 = vunpack.c.l.b16 %v534
    %v2302 = vunpack.c.h.b16 %v534
    %v2303 = vunpack.c.l.b16 %v535
    %v2304 = vunpack.c.h.b16 %v535
    %v2305 = vunpack.c.l.b16 %v536
    %v2306 = vunpack.c.h.b16 %v536
    %v2307 = vunpack.c.l.b16 %v537
    %v2308 = vunpack.c.h.b16 %v537
    %v2309 = vunpack.c.l.b16 %v538
    %v2310 = vunpack.c.h.b16 %v538
    %v2311 = vunpack.c.l.b16 %v539
    %v2312 = vunpack.c.h.b16 %v539
    %v2313 = vunpack.c.l.b16 %v540
    %v2314 = vunpack.c.h.b16 %v540
    %v2315 = vunpack.c.l.b16 %v541
    %v2316 = vunpack.c.h.b16 %v541
    %v2317 = vunpack.c.l.b16 %v542
    %v2318 = vunpack.c.h.b16 %v542
    %v2319 = vunpack.c.l.b16 %v543
    %v2320 = vunpack.c.h.b16 %v543
    %v2321 = vunpack.c.l.b16 %v544
    %v2322 = vunpack.c.h.b16 %v544
    %v2323 = vunpack.c.l.b16 %v545
    %v2324 = vunpack.c.h.b16 %v545
    %v2325 = vunpack.c.l.b16 %v546
    %v2326 = vunpack.c.h.b16 %v546
    %v2327 = vunpack.c.l.b16 %v547
    %v2328 = vunpack.c.h.b16 %v547
    %v2329 = vunpack.c.l.b16 %v548
    %v2330 = vunpack.c.h.b16 %v548
    %v2331 = vunpack.c.l.b16 %v549
    %v2332 = vunpack.c.h.b16 %v549
    %v2333 = vunpack.c.l.b16 %v550
    %v2334 = vunpack.c.h.b16 %v550
    %v2335 = vunpack.c.l.b16 %v551
    %v2336 = vunpack.c.h.b16 %v551
    %v2337 = vunpack.c.l.b16 %v552
    %v2338 = vunpack.c.h.b16 %v552
    %v2339 = vunpack.c.l.b16 %v553
    %v2340 = vunpack.c.h.b16 %v553
    %v2341 = vunpack.c.l.b16 %v554
    %v2342 = vunpack.c.h.b16 %v554
    %v2343 = vunpack.c.l.b16 %v555
    %v2344 = vunpack.c.h.b16 %v555
    %v2345 = vunpack.c.l.b16 %v556
    %v2346 = vunpack.c.h.b16 %v556
    %v2347 = vunpack.c.l.b16 %v557
    %v2348 = vunpack.c.h.b16 %v557
    %v2349 = vunpack.c.l.b16 %v558
    %v2350 = vunpack.c.h.b16 %v558
    %v2351 = vunpack.c.l.b16 %v559
    %v2352 = vunpack.c.h.b16 %v559
    %v2353 = vunpack.c.l.b16 %v560
    %v2354 = vunpack.c.h.b16 %v560
    %v2355 = vunpack.c.l.b16 %v561
    %v2356 = vunpack.c.h.b16 %v561
    %v2357 = vunpack.c.l.b16 %v562
    %v2358 = vunpack.c.h.b16 %v562
    %v2359 = vunpack.c.l.b16 %v563
    %v2360 = vunpack.c.h.b16 %v563
    %v2361 = vunpack.c.l.b16 %v564
    %v2362 = vunpack.c.h.b16 %v564
    %v2363 = vunpack.c.l.b16 %v565
    %v2364 = vunpack.c.h.b16 %v565
    %v2365 = vunpack.c.l.b16 %v566
    %v2366 = vunpack.c.h.b16 %v566
    %v2367 = vunpack.c.l.b16 %v567
    %v2368 = vunpack.c.h.b16 %v567
    %v2369 = vunpack.c.l.b16 %v568
    %v2370 = vunpack.c.h.b16 %v568
    %v2371 = vunpack.c.l.b16 %v569
    %v2372 = vunpack.c.h.b16 %v569
    %v2373 = vunpack.c.l.b16 %v570
    %v2374 = vunpack.c.h.b16 %v570
    %v2375 = vunpack.c.l.b16 %v571
    %v2376 = vunpack.c.h.b16 %v571
    %v2377 = vunpack.c.l.b16 %v572
    %v2378 = vunpack.c.h.b16 %v572
    %v2379 = vunpack.c.l.b16 %v573
    %v2380 = vunpack.c.h.b16 %v573
    %v2381 = vunpack.c.l.b16 %v574
    %v2382 = vunpack.c.h.b16 %v574
    %v2383 = vunpack.c.l.b16 %v575
    %v2384 = vunpack.c.h.b16 %v575
    %v2385 = vunpack.c.l.b16 %v576
    %v2386 = vunpack.c.h.b16 %v576
    %v2387 = vunpack.c.l.b16 %v577
    %v2388 = vunpack.c.h.b16 %v577
    %v2389 = vunpack.c.l.b16 %v578
    %v2390 = vunpack.c.h.b16 %v578
    %v2391 = vunpack.c.l.b16 %v579
    %v2392 = vunpack.c.h.b16 %v579
    %v2393 = vunpack.c.l.b16 %v580
    %v2394 = vunpack.c.h.b16 %v580
    %v2395 = vunpack.c.l.b16 %v581
    %v2396 = vunpack.c.h.b16 %v581
    %v2397 = vunpack.c.l.b16 %v582
    %v2398 = vunpack.c.h.b16 %v582
    %v2399 = vunpack.c.l.b16 %v583
    %v2400 = vunpack.c.h.b16 %v583
    %v2401 = vunpack.c.l.b16 %v584
    %v2402 = vunpack.c.h.b16 %v584
    %v2403 = vunpack.c.l.b16 %v585
    %v2404 = vunpack.c.h.b16 %v585
    %v2405 = vunpack.c.l.b16 %v586
    %v2406 = vunpack.c.h.b16 %v586
    %v2407 = vunpack.c.l.b16 %v587
    %v2408 = vunpack.c.h.b16 %v587
    %v2409 = vunpack.c.l.b16 %v588
    %v2410 = vunpack.c.h.b16 %v588
    %v2411 = vunpack.c.l.b16 %v589
    %v2412 = vunpack.c.h.b16 %v589
    %v2413 = vunpack.c.l.b16 %v590
    %v2414 = vunpack.c.h.b16 %v590
    %v2415 = vunpack.c.l.b16 %v591
    %v2416 = vunpack.c.h.b16 %v591
    %v2417 = vunpack.c.l.b16 %v592
    %v2418 = vunpack.c.h.b16 %v592
    %v2419 = vunpack.c.l.b16 %v593
    %v2420 = vunpack.c.h.b16 %v593
    %v2421 = vunpack.c.l.b16 %v594
    %v2422 = vunpack.c.h.b16 %v594
    %v2423 = vunpack.c.l.b16 %v595
    %v2424 = vunpack.c.h.b16 %v595
    %v2425 = vunpack.c.l.b16 %v596
    %v2426 = vunpack.c.h.b16 %v596
    %v2427 = vunpack.c.l.b16 %v597
    %v2428 = vunpack.c.h.b16 %v597
    %v2429 = vunpack.c.l.b16 %v598
    %v2430 = vunpack.c.h.b16 %v598
    %v2431 = vunpack.c.l.b16 %v599
    %v2432 = vunpack.c.h.b16 %v599
    %v2433 = vunpack.c.l.b16 %v600
    %v2434 = vunpack.c.h.b16 %v600
    %v2435 = vunpack.c.l.b16 %v601
    %v2436 = vunpack.c.h.b16 %v601
    %v2437 = vunpack.c.l.b16 %v602
    %v2438 = vunpack.c.h.b16 %v602
    %v2439 = vunpack.c.l.b16 %v603
    %v2440 = vunpack.c.h.b16 %v603
    %v2441 = vunpack.c.l.b16 %v604
    %v2442 = vunpack.c.h.b16 %v604
    %v2443 = vunpack.c.l.b16 %v605
    %v2444 = vunpack.c.h.b16 %v605
    %v2445 = vunpack.c.l.b16 %v606
    %v2446 = vunpack.c.h.b16 %v606
    %v2447 = vunpack.c.l.b16 %v607
    %v2448 = vunpack.c.h.b16 %v607
    %v2449 = vunpack.c.l.b16 %v608
    %v2450 = vunpack.c.h.b16 %v608
    %v2451 = vunpack.c.l.b16 %v609
    %v2452 = vunpack.c.h.b16 %v609
    %v2453 = vunpack.c.l.b16 %v610
    %v2454 = vunpack.c.h.b16 %v610
    %v2455 = vunpack.c.l.b16 %v611
    %v2456 = vunpack.c.h.b16 %v611
    %v2457 = vunpack.c.l.b16 %v612
    %v2458 = vunpack.c.h.b16 %v612
    %v2459 = vunpack.c.l.b16 %v613
    %v2460 = vunpack.c.h.b16 %v613
    %v2461 = vunpack.c.l.b16 %v614
    %v2462 = vunpack.c.h.b16 %v614
    %v2463 = vunpack.c.l.b16 %v615
    %v2464 = vunpack.c.h.b16 %v615
    %v2465 = vunpack.c.l.b16 %v616
    %v2466 = vunpack.c.h.b16 %v616
    %v2467 = vunpack.c.l.b16 %v617
    %v2468 = vunpack.c.h.b16 %v617
    %v2469 = vunpack.c.l.b16 %v618
    %v2470 = vunpack.c.h.b16 %v618
    %v2471 = vunpack.c.l.b16 %v619
    %v2472 = vunpack.c.h.b16 %v619
    %v2473 = vunpack.c.l.b16 %v620
    %v2474 = vunpack.c.h.b16 %v620
    %v2475 = vunpack.c.l.b16 %v621
    %v2476 = vunpack.c.h.b16 %v621
    %v2477 = vunpack.c.l.b16 %v622
    %v2478 = vunpack.c.h.b16 %v622
    %v2479 = vunpack.c.l.b16 %v623
    %v2480 = vunpack.c.h.b16 %v623
    %v2481 = vunpack.c.l.b16 %v624
    %v2482 = vunpack.c.h.b16 %v624
    %v2483 = vunpack.c.l.b16 %v625
    %v2484 = vunpack.c.h.b16 %v625
    %v2485 = vunpack.c.l.b16 %v626
    %v2486 = vunpack.c.h.b16 %v626
    %v2487 = vunpack.c.l.b16 %v627
    %v2488 = vunpack.c.h.b16 %v627
    %v2489 = vunpack.c.l.b16 %v628
    %v2490 = vunpack.c.h.b16 %v628
    %v2491 = vunpack.c.l.b16 %v629
    %v2492 = vunpack.c.h.b16 %v629
    %v2493 = vunpack.c.l.b16 %v630
    %v2494 = vunpack.c.h.b16 %v630
    %v2495 = vunpack.c.l.b16 %v631
    %v2496 = vunpack.c.h.b16 %v631
    %v2497 = vunpack.c.l.b16 %v632
    %v2498 = vunpack.c.h.b16 %v632
    %v2499 = vunpack.c.l.b16 %v633
    %v2500 = vunpack.c.h.b16 %v633
    %v2501 = vunpack.c.l.b16 %v634
    %v2502 = vunpack.c.h.b16 %v634
    %v2503 = vunpack.c.l.b16 %v635
    %v2504 = vunpack.c.h.b16 %v635
    %v2505 = vunpack.c.l.b16 %v636
    %v2506 = vunpack.c.h.b16 %v636
    %v2507 = vunpack.c.l.b16 %v637
    %v2508 = vunpack.c.h.b16 %v637
    %v2509 = vunpack.c.l.b16 %v638
    %v2510 = vunpack.c.h.b16 %v638
    %v2511 = vunpack.c.l.b16 %v639
    %v2512 = vunpack.c.h.b16 %v639
    %v2513 = vunpack.c.l.b16 %v640
    %v2514 = vunpack.c.h.b16 %v640
    %v2515 = vunpack.c.l.b16 %v641
    %v2516 = vunpack.c.h.b16 %v641
    %v2517 = vunpack.c.l.b16 %v642
    %v2518 = vunpack.c.h.b16 %v642
    %v2519 = vunpack.c.l.b16 %v643
    %v2520 = vunpack.c.h.b16 %v643
    %v2521 = vunpack.c.l.b16 %v644
    %v2522 = vunpack.c.h.b16 %v644
    %v2523 = vunpack.c.l.b16 %v645
    %v2524 = vunpack.c.h.b16 %v645
    %v2525 = vunpack.c.l.b16 %v646
    %v2526 = vunpack.c.h.b16 %v646
    %v2527 = vunpack.c.l.b16 %v647
    %v2528 = vunpack.c.h.b16 %v647
    %v2529 = vunpack.c.l.b16 %v648
    %v2530 = vunpack.c.h.b16 %v648
    %v2531 = vunpack.c.l.b16 %v649
    %v2532 = vunpack.c.h.b16 %v649
    %v2533 = vunpack.c.l.b16 %v650
    %v2534 = vunpack.c.h.b16 %v650
    %v2535 = vunpack.c.l.b16 %v651
    %v2536 = vunpack.c.h.b16 %v651
    %v2537 = vunpack.c.l.b16 %v652
    %v2538 = vunpack.c.h.b16 %v652
    %v2539 = vunpack.c.l.b16 %v653
    %v2540 = vunpack.c.h.b16 %v653
    %v2541 = vunpack.c.l.b16 %v654
    %v2542 = vunpack.c.h.b16 %v654
    %v2543 = vunpack.c.l.b16 %v655
    %v2544 = vunpack.c.h.b16 %v655
    %v2545 = vunpack.c.l.b16 %v656
    %v2546 = vunpack.c.h.b16 %v656
    %v2547 = vunpack.c.l.b16 %v657
    %v2548 = vunpack.c.h.b16 %v657
    %v2549 = vunpack.c.l.b16 %v658
    %v2550 = vunpack.c.h.b16 %v658
    %v2551 = vunpack.c.l.b16 %v659
    %v2552 = vunpack.c.h.b16 %v659
    %v2553 = vunpack.c.l.b16 %v660
    %v2554 = vunpack.c.h.b16 %v660
    %v2555 = vunpack.c.l.b16 %v661
    %v2556 = vunpack.c.h.b16 %v661
    %v2557 = vunpack.c.l.b16 %v662
    %v2558 = vunpack.c.h.b16 %v662
    %v2559 = vunpack.c.l.b16 %v663
    %v2560 = vunpack.c.h.b16 %v663
    %v2561 = vunpack.c.l.b16 %v664
    %v2562 = vunpack.c.h.b16 %v664
    %v2563 = vpack.c.b16 %v1547, %v1539
    %v2564 = vpack.c.b16 %v1548, %v1540
    %v2565 = vpack.c.b16 %v1549, %v1541
    %v2566 = vpack.c.b16 %v1550, %v1542
    %v2567 = vpack.c.b16 %v1551, %v1543
    %v2568 = vpack.c.b16 %v1552, %v1544
    %v2569 = vpack.c.b16 %v1553, %v1545
    %v2570 = vpack.c.b16 %v1554, %v1546
    %v2571 = vpack.c.b16 %v1563, %v1555
    %v2572 = vpack.c.b16 %v1564, %v1556
    %v2573 = vpack.c.b16 %v1565, %v1557
    %v2574 = vpack.c.b16 %v1566, %v1558
    %v2575 = vpack.c.b16 %v1567, %v1559
    %v2576 = vpack.c.b16 %v1568, %v1560
    %v2577 = vpack.c.b16 %v1569, %v1561
    %v2578 = vpack.c.b16 %v1570, %v1562
    %v2579 = vpack.c.b16 %v1579, %v1571
    %v2580 = vpack.c.b16 %v1580, %v1572
    %v2581 = vpack.c.b16 %v1581, %v1573
    %v2582 = vpack.c.b16 %v1582, %v1574
    %v2583 = vpack.c.b16 %v1583, %v1575
    %v2584 = vpack.c.b16 %v1584, %v1576
    %v2585 = vpack.c.b16 %v1585, %v1577
    %v2586 = vpack.c.b16 %v1586, %v1578
    %v2587 = vpack.c.b16 %v1595, %v1587
    %v2588 = vpack.c.b16 %v1596, %v1588
    %v2589 = vpack.c.b16 %v1597, %v1589
    %v2590 = vpack.c.b16 %v1598, %v1590
    %v2591 = vpack.c.b16 %v1599, %v1591
    %v2592 = vpack.c.b16 %v1600, %v1592
    %v2593 = vpack.c.b16 %v1601, %v1593
    %v2594 = vpack.c.b16 %v1602, %v1594
    %v2595 = vpack.c.b16 %v1611, %v1603
    %v2596 = vpack.c.b16 %v1612, %v1604
    %v2597 = vpack.c.b16 %v1613, %v1605
    %v2598 = vpack.c.b16 %v1614, %v1606
    %v2599 = vpack.c.b16 %v1615, %v1607
    %v2600 = vpack.c.b16 %v1616, %v1608
    %v2601 = vpack.c.b16 %v1617, %v1609
    %v2602 = vpack.c.b16 %v1618, %v1610
    %v2603 = vpack.c.b16 %v1627, %v1619
    %v2604 = vpack.c.b16 %v1628, %v1620
    %v2605 = vpack.c.b16 %v1629, %v1621
    %v2606 = vpack.c.b16 %v1630, %v1622
    %v2607 = vpack.c.b16 %v1631, %v1623
    %v2608 = vpack.c.b16 %v1632, %v1624
    %v2609 = vpack.c.b16 %v1633, %v1625
    %v2610 = vpack.c.b16 %v1634, %v1626
    %v2611 = vpack.c.b16 %v1643, %v1635
    %v2612 = vpack.c.b16 %v1644, %v1636
    %v2613 = vpack.c.b16 %v1645, %v1637
    %v2614 = vpack.c.b16 %v1646, %v1638
    %v2615 = vpack.c.b16 %v1647, %v1639
    %v2616 = vpack.c.b16 %v1648, %v1640
    %v2617 = vpack.c.b16 %v1649, %v1641
    %v2618 = vpack.c.b16 %v1650, %v1642
    %v2619 = vpack.c.b16 %v1659, %v1651
    %v2620 = vpack.c.b16 %v1660, %v1652
    %v2621 = vpack.c.b16 %v1661, %v1653
    %v2622 = vpack.c.b16 %v1662, %v1654
    %v2623 = vpack.c.b16 %v1663, %v1655
    %v2624 = vpack.c.b16 %v1664, %v1656
    %v2625 = vpack.c.b16 %v1665, %v1657
    %v2626 = vpack.c.b16 %v1666, %v1658
    %v2627 = vpack.c.b16 %v1675, %v1667
    %v2628 = vpack.c.b16 %v1676, %v1668
    %v2629 = vpack.c.b16 %v1677, %v1669
    %v2630 = vpack.c.b16 %v1678, %v1670
    %v2631 = vpack.c.b16 %v1679, %v1671
    %v2632 = vpack.c.b16 %v1680, %v1672
    %v2633 = vpack.c.b16 %v1681, %v1673
    %v2634 = vpack.c.b16 %v1682, %v1674
    %v2635 = vpack.c.b16 %v1691, %v1683
    %v2636 = vpack.c.b16 %v1692, %v1684
    %v2637 = vpack.c.b16 %v1693, %v1685
    %v2638 = vpack.c.b16 %v1694, %v1686
    %v2639 = vpack.c.b16 %v1695, %v1687
    %v2640 = vpack.c.b16 %v1696, %v1688
    %v2641 = vpack.c.b16 %v1697, %v1689
    %v2642 = vpack.c.b16 %v1698, %v1690
    %v2643 = vpack.c.b16 %v1707, %v1699
    %v2644 = vpack.c.b16 %v1708, %v1700
    %v2645 = vpack.c.b16 %v1709, %v1701
    %v2646 = vpack.c.b16 %v1710, %v1702
    %v2647 = vpack.c.b16 %v1711, %v1703
    %v2648 = vpack.c.b16 %v1712, %v1704
    %v2649 = vpack.c.b16 %v1713, %v1705
    %v2650 = vpack.c.b16 %v1714, %v1706
    %v2651 = vpack.c.b16 %v1723, %v1715
    %v2652 = vpack.c.b16 %v1724, %v1716
    %v2653 = vpack.c.b16 %v1725, %v1717
    %v2654 = vpack.c.b16 %v1726, %v1718
    %v2655 = vpack.c.b16 %v1727, %v1719
    %v2656 = vpack.c.b16 %v1728, %v1720
    %v2657 = vpack.c.b16 %v1729, %v1721
    %v2658 = vpack.c.b16 %v1730, %v1722
    %v2659 = vpack.c.b16 %v1739, %v1731
    %v2660 = vpack.c.b16 %v1740, %v1732
    %v2661 = vpack.c.b16 %v1741, %v1733
    %v2662 = vpack.c.b16 %v1742, %v1734
    %v2663 = vpack.c.b16 %v1743, %v1735
    %v2664 = vpack.c.b16 %v1744, %v1736
    %v2665 = vpack.c.b16 %v1745, %v1737
    %v2666 = vpack.c.b16 %v1746, %v1738
    %v2667 = vpack.c.b16 %v1755, %v1747
    %v2668 = vpack.c.b16 %v1756, %v1748
    %v2669 = vpack.c.b16 %v1757, %v1749
    %v2670 = vpack.c.b16 %v1758, %v1750
    %v2671 = vpack.c.b16 %v1759, %v1751
    %v2672 = vpack.c.b16 %v1760, %v1752
    %v2673 = vpack.c.b16 %v1761, %v1753
    %v2674 = vpack.c.b16 %v1762, %v1754
    %v2675 = vpack.c.b16 %v1771, %v1763
    %v2676 = vpack.c.b16 %v1772, %v1764
    %v2677 = vpack.c.b16 %v1773, %v1765
    %v2678 = vpack.c.b16 %v1774, %v1766
    %v2679 = vpack.c.b16 %v1775, %v1767
    %v2680 = vpack.c.b16 %v1776, %v1768
    %v2681 = vpack.c.b16 %v1777, %v1769
    %v2682 = vpack.c.b16 %v1778, %v1770
    %v2683 = vpack.c.b16 %v1787, %v1779
    %v2684 = vpack.c.b16 %v1788, %v1780
    %v2685 = vpack.c.b16 %v1789, %v1781
    %v2686 = vpack.c.b16 %v1790, %v1782
    %v2687 = vpack.c.b16 %v1791, %v1783
    %v2688 = vpack.c.b16 %v1792, %v1784
    %v2689 = vpack.c.b16 %v1793, %v1785
    %v2690 = vpack.c.b16 %v1794, %v1786
    %v2691 = vpack.c.b16 %v1803, %v1795
    %v2692 = vpack.c.b16 %v1804, %v1796
    %v2693 = vpack.c.b16 %v1805, %v1797
    %v2694 = vpack.c.b16 %v1806, %v1798
    %v2695 = vpack.c.b16 %v1807, %v1799
    %v2696 = vpack.c.b16 %v1808, %v1800
    %v2697 = vpack.c.b16 %v1809, %v1801
    %v2698 = vpack.c.b16 %v1810, %v1802
    %v2699 = vpack.c.b16 %v1819, %v1811
    %v2700 = vpack.c.b16 %v1820, %v1812
    %v2701 = vpack.c.b16 %v1821, %v1813
    %v2702 = vpack.c.b16 %v1822, %v1814
    %v2703 = vpack.c.b16 %v1823, %v1815
    %v2704 = vpack.c.b16 %v1824, %v1816
    %v2705 = vpack.c.b16 %v1825, %v1817
    %v2706 = vpack.c.b16 %v1826, %v1818
    %v2707 = vpack.c.b16 %v1835, %v1827
    %v2708 = vpack.c.b16 %v1836, %v1828
    %v2709 = vpack.c.b16 %v1837, %v1829
    %v2710 = vpack.c.b16 %v1838, %v1830
    %v2711 = vpack.c.b16 %v1839, %v1831
    %v2712 = vpack.c.b16 %v1840, %v1832
    %v2713 = vpack.c.b16 %v1841, %v1833
    %v2714 = vpack.c.b16 %v1842, %v1834
    %v2715 = vpack.c.b16 %v1851, %v1843
    %v2716 = vpack.c.b16 %v1852, %v1844
    %v2717 = vpack.c.b16 %v1853, %v1845
    %v2718 = vpack.c.b16 %v1854, %v1846
    %v2719 = vpack.c.b16 %v1855, %v1847
    %v2720 = vpack.c.b16 %v1856, %v1848
    %v2721 = vpack.c.b16 %v1857, %v1849
    %v2722 = vpack.c.b16 %v1858, %v1850
    %v2723 = vpack.c.b16 %v1867, %v1859
    %v2724 = vpack.c.b16 %v1868, %v1860
    %v2725 = vpack.c.b16 %v1869, %v1861
    %v2726 = vpack.c.b16 %v1870, %v1862
    %v2727 = vpack.c.b16 %v1871, %v1863
    %v2728 = vpack.c.b16 %v1872, %v1864
    %v2729 = vpack.c.b16 %v1873, %v1865
    %v2730 = vpack.c.b16 %v1874, %v1866
    %v2731 = vpack.c.b16 %v1883, %v1875
    %v2732 = vpack.c.b16 %v1884, %v1876
    %v2733 = vpack.c.b16 %v1885, %v1877
    %v2734 = vpack.c.b16 %v1886, %v1878
    %v2735 = vpack.c.b16 %v1887, %v1879
    %v2736 = vpack.c.b16 %v1888, %v1880
    %v2737 = vpack.c.b16 %v1889, %v1881
    %v2738 = vpack.c.b16 %v1890, %v1882
    %v2739 = vpack.c.b16 %v1899, %v1891
    %v2740 = vpack.c.b16 %v1900, %v1892
    %v2741 = vpack.c.b16 %v1901, %v1893
    %v2742 = vpack.c.b16 %v1902, %v1894
    %v2743 = vpack.c.b16 %v1903, %v1895
    %v2744 = vpack.c.b16 %v1904, %v1896
    %v2745 = vpack.c.b16 %v1905, %v1897
    %v2746 = vpack.c.b16 %v1906, %v1898
    %v2747 = vpack.c.b16 %v1915, %v1907
    %v2748 = vpack.c.b16 %v1916, %v1908
    %v2749 = vpack.c.b16 %v1917, %v1909
    %v2750 = vpack.c.b16 %v1918, %v1910
    %v2751 = vpack.c.b16 %v1919, %v1911
    %v2752 = vpack.c.b16 %v1920, %v1912
    %v2753 = vpack.c.b16 %v1921, %v1913
    %v2754 = vpack.c.b16 %v1922, %v1914
    %v2755 = vpack.c.b16 %v1931, %v1923
    %v2756 = vpack.c.b16 %v1932, %v1924
    %v2757 = vpack.c.b16 %v1933, %v1925
    %v2758 = vpack.c.b16 %v1934, %v1926
    %v2759 = vpack.c.b16 %v1935, %v1927
    %v2760 = vpack.c.b16 %v1936, %v1928
    %v2761 = vpack.c.b16 %v1937, %v1929
    %v2762 = vpack.c.b16 %v1938, %v1930
    %v2763 = vpack.c.b16 %v1947, %v1939
    %v2764 = vpack.c.b16 %v1948, %v1940
    %v2765 = vpack.c.b16 %v1949, %v1941
    %v2766 = vpack.c.b16 %v1950, %v1942
    %v2767 = vpack.c.b16 %v1951, %v1943
    %v2768 = vpack.c.b16 %v1952, %v1944
    %v2769 = vpack.c.b16 %v1953, %v1945
    %v2770 = vpack.c.b16 %v1954, %v1946
    %v2771 = vpack.c.b16 %v1963, %v1955
    %v2772 = vpack.c.b16 %v1964, %v1956
    %v2773 = vpack.c.b16 %v1965, %v1957
    %v2774 = vpack.c.b16 %v1966, %v1958
    %v2775 = vpack.c.b16 %v1967, %v1959
    %v2776 = vpack.c.b16 %v1968, %v1960
    %v2777 = vpack.c.b16 %v1969, %v1961
    %v2778 = vpack.c.b16 %v1970, %v1962
    %v2779 = vpack.c.b16 %v1979, %v1971
    %v2780 = vpack.c.b16 %v1980, %v1972
    %v2781 = vpack.c.b16 %v1981, %v1973
    %v2782 = vpack.c.b16 %v1982, %v1974
    %v2783 = vpack.c.b16 %v1983, %v1975
    %v2784 = vpack.c.b16 %v1984, %v1976
    %v2785 = vpack.c.b16 %v1985, %v1977
    %v2786 = vpack.c.b16 %v1986, %v1978
    %v2787 = vpack.c.b16 %v1995, %v1987
    %v2788 = vpack.c.b16 %v1996, %v1988
    %v2789 = vpack.c.b16 %v1997, %v1989
    %v2790 = vpack.c.b16 %v1998, %v1990
    %v2791 = vpack.c.b16 %v1999, %v1991
    %v2792 = vpack.c.b16 %v2000, %v1992
    %v2793 = vpack.c.b16 %v2001, %v1993
    %v2794 = vpack.c.b16 %v2002, %v1994
    %v2795 = vpack.c.b16 %v2011, %v2003
    %v2796 = vpack.c.b16 %v2012, %v2004
    %v2797 = vpack.c.b16 %v2013, %v2005
    %v2798 = vpack.c.b16 %v2014, %v2006
    %v2799 = vpack.c.b16 %v2015, %v2007
    %v2800 = vpack.c.b16 %v2016, %v2008
    %v2801 = vpack.c.b16 %v2017, %v2009
    %v2802 = vpack.c.b16 %v2018, %v2010
    %v2803 = vpack.c.b16 %v2027, %v2019
    %v2804 = vpack.c.b16 %v2028, %v2020
    %v2805 = vpack.c.b16 %v2029, %v2021
    %v2806 = vpack.c.b16 %v2030, %v2022
    %v2807 = vpack.c.b16 %v2031, %v2023
    %v2808 = vpack.c.b16 %v2032, %v2024
    %v2809 = vpack.c.b16 %v2033, %v2025
    %v2810 = vpack.c.b16 %v2034, %v2026
    %v2811 = vpack.c.b16 %v2043, %v2035
    %v2812 = vpack.c.b16 %v2044, %v2036
    %v2813 = vpack.c.b16 %v2045, %v2037
    %v2814 = vpack.c.b16 %v2046, %v2038
    %v2815 = vpack.c.b16 %v2047, %v2039
    %v2816 = vpack.c.b16 %v2048, %v2040
    %v2817 = vpack.c.b16 %v2049, %v2041
    %v2818 = vpack.c.b16 %v2050, %v2042
    %v2819 = vpack.c.b16 %v2059, %v2051
    %v2820 = vpack.c.b16 %v2060, %v2052
    %v2821 = vpack.c.b16 %v2061, %v2053
    %v2822 = vpack.c.b16 %v2062, %v2054
    %v2823 = vpack.c.b16 %v2063, %v2055
    %v2824 = vpack.c.b16 %v2064, %v2056
    %v2825 = vpack.c.b16 %v2065, %v2057
    %v2826 = vpack.c.b16 %v2066, %v2058
    %v2827 = vpack.c.b16 %v2075, %v2067
    %v2828 = vpack.c.b16 %v2076, %v2068
    %v2829 = vpack.c.b16 %v2077, %v2069
    %v2830 = vpack.c.b16 %v2078, %v2070
    %v2831 = vpack.c.b16 %v2079, %v2071
    %v2832 = vpack.c.b16 %v2080, %v2072
    %v2833 = vpack.c.b16 %v2081, %v2073
    %v2834 = vpack.c.b16 %v2082, %v2074
    %v2835 = vpack.c.b16 %v2091, %v2083
    %v2836 = vpack.c.b16 %v2092, %v2084
    %v2837 = vpack.c.b16 %v2093, %v2085
    %v2838 = vpack.c.b16 %v2094, %v2086
    %v2839 = vpack.c.b16 %v2095, %v2087
    %v2840 = vpack.c.b16 %v2096, %v2088
    %v2841 = vpack.c.b16 %v2097, %v2089
    %v2842 = vpack.c.b16 %v2098, %v2090
    %v2843 = vpack.c.b16 %v2107, %v2099
    %v2844 = vpack.c.b16 %v2108, %v2100
    %v2845 = vpack.c.b16 %v2109, %v2101
    %v2846 = vpack.c.b16 %v2110, %v2102
    %v2847 = vpack.c.b16 %v2111, %v2103
    %v2848 = vpack.c.b16 %v2112, %v2104
    %v2849 = vpack.c.b16 %v2113, %v2105
    %v2850 = vpack.c.b16 %v2114, %v2106
    %v2851 = vpack.c.b16 %v2123, %v2115
    %v2852 = vpack.c.b16 %v2124, %v2116
    %v2853 = vpack.c.b16 %v2125, %v2117
    %v2854 = vpack.c.b16 %v2126, %v2118
    %v2855 = vpack.c.b16 %v2127, %v2119
    %v2856 = vpack.c.b16 %v2128, %v2120
    %v2857 = vpack.c.b16 %v2129, %v2121
    %v2858 = vpack.c.b16 %v2130, %v2122
    %v2859 = vpack.c.b16 %v2139, %v2131
    %v2860 = vpack.c.b16 %v2140, %v2132
    %v2861 = vpack.c.b16 %v2141, %v2133
    %v2862 = vpack.c.b16 %v2142, %v2134
    %v2863 = vpack.c.b16 %v2143, %v2135
    %v2864 = vpack.c.b16 %v2144, %v2136
    %v2865 = vpack.c.b16 %v2145, %v2137
    %v2866 = vpack.c.b16 %v2146, %v2138
    %v2867 = vpack.c.b16 %v2155, %v2147
    %v2868 = vpack.c.b16 %v2156, %v2148
    %v2869 = vpack.c.b16 %v2157, %v2149
    %v2870 = vpack.c.b16 %v2158, %v2150
    %v2871 = vpack.c.b16 %v2159, %v2151
    %v2872 = vpack.c.b16 %v2160, %v2152
    %v2873 = vpack.c.b16 %v2161, %v2153
    %v2874 = vpack.c.b16 %v2162, %v2154
    %v2875 = vpack.c.b16 %v2171, %v2163
    %v2876 = vpack.c.b16 %v2172, %v2164
    %v2877 = vpack.c.b16 %v2173, %v2165
    %v2878 = vpack.c.b16 %v2174, %v2166
    %v2879 = vpack.c.b16 %v2175, %v2167
    %v2880 = vpack.c.b16 %v2176, %v2168
    %v2881 = vpack.c.b16 %v2177, %v2169
    %v2882 = vpack.c.b16 %v2178, %v2170
    %v2883 = vpack.c.b16 %v2187, %v2179
    %v2884 = vpack.c.b16 %v2188, %v2180
    %v2885 = vpack.c.b16 %v2189, %v2181
    %v2886 = vpack.c.b16 %v2190, %v2182
    %v2887 = vpack.c.b16 %v2191, %v2183
    %v2888 = vpack.c.b16 %v2192, %v2184
    %v2889 = vpack.c.b16 %v2193, %v2185
    %v2890 = vpack.c.b16 %v2194, %v2186
    %v2891 = vpack.c.b16 %v2203, %v2195
    %v2892 = vpack.c.b16 %v2204, %v2196
    %v2893 = vpack.c.b16 %v2205, %v2197
    %v2894 = vpack.c.b16 %v2206, %v2198
    %v2895 = vpack.c.b16 %v2207, %v2199
    %v2896 = vpack.c.b16 %v2208, %v2200
    %v2897 = vpack.c.b16 %v2209, %v2201
    %v2898 = vpack.c.b16 %v2210, %v2202
    %v2899 = vpack.c.b16 %v2219, %v2211
    %v2900 = vpack.c.b16 %v2220, %v2212
    %v2901 = vpack.c.b16 %v2221, %v2213
    %v2902 = vpack.c.b16 %v2222, %v2214
    %v2903 = vpack.c.b16 %v2223, %v2215
    %v2904 = vpack.c.b16 %v2224, %v2216
    %v2905 = vpack.c.b16 %v2225, %v2217
    %v2906 = vpack.c.b16 %v2226, %v2218
    %v2907 = vpack.c.b16 %v2235, %v2227
    %v2908 = vpack.c.b16 %v2236, %v2228
    %v2909 = vpack.c.b16 %v2237, %v2229
    %v2910 = vpack.c.b16 %v2238, %v2230
    %v2911 = vpack.c.b16 %v2239, %v2231
    %v2912 = vpack.c.b16 %v2240, %v2232
    %v2913 = vpack.c.b16 %v2241, %v2233
    %v2914 = vpack.c.b16 %v2242, %v2234
    %v2915 = vpack.c.b16 %v2251, %v2243
    %v2916 = vpack.c.b16 %v2252, %v2244
    %v2917 = vpack.c.b16 %v2253, %v2245
    %v2918 = vpack.c.b16 %v2254, %v2246
    %v2919 = vpack.c.b16 %v2255, %v2247
    %v2920 = vpack.c.b16 %v2256, %v2248
    %v2921 = vpack.c.b16 %v2257, %v2249
    %v2922 = vpack.c.b16 %v2258, %v2250
    %v2923 = vpack.c.b16 %v2267, %v2259
    %v2924 = vpack.c.b16 %v2268, %v2260
    %v2925 = vpack.c.b16 %v2269, %v2261
    %v2926 = vpack.c.b16 %v2270, %v2262
    %v2927 = vpack.c.b16 %v2271, %v2263
    %v2928 = vpack.c.b16 %v2272, %v2264
    %v2929 = vpack.c.b16 %v2273, %v2265
    %v2930 = vpack.c.b16 %v2274, %v2266
    %v2931 = vpack.c.b16 %v2283, %v2275
    %v2932 = vpack.c.b16 %v2284, %v2276
    %v2933 = vpack.c.b16 %v2285, %v2277
    %v2934 = vpack.c.b16 %v2286, %v2278
    %v2935 = vpack.c.b16 %v2287, %v2279
    %v2936 = vpack.c.b16 %v2288, %v2280
    %v2937 = vpack.c.b16 %v2289, %v2281
    %v2938 = vpack.c.b16 %v2290, %v2282
    %v2939 = vpack.c.b16 %v2299, %v2291
    %v2940 = vpack.c.b16 %v2300, %v2292
    %v2941 = vpack.c.b16 %v2301, %v2293
    %v2942 = vpack.c.b16 %v2302, %v2294
    %v2943 = vpack.c.b16 %v2303, %v2295
    %v2944 = vpack.c.b16 %v2304, %v2296
    %v2945 = vpack.c.b16 %v2305, %v2297
    %v2946 = vpack.c.b16 %v2306, %v2298
    %v2947 = vpack.c.b16 %v2315, %v2307
    %v2948 = vpack.c.b16 %v2316, %v2308
    %v2949 = vpack.c.b16 %v2317, %v2309
    %v2950 = vpack.c.b16 %v2318, %v2310
    %v2951 = vpack.c.b16 %v2319, %v2311
    %v2952 = vpack.c.b16 %v2320, %v2312
    %v2953 = vpack.c.b16 %v2321, %v2313
    %v2954 = vpack.c.b16 %v2322, %v2314
    %v2955 = vpack.c.b16 %v2331, %v2323
    %v2956 = vpack.c.b16 %v2332, %v2324
    %v2957 = vpack.c.b16 %v2333, %v2325
    %v2958 = vpack.c.b16 %v2334, %v2326
    %v2959 = vpack.c.b16 %v2335, %v2327
    %v2960 = vpack.c.b16 %v2336, %v2328
    %v2961 = vpack.c.b16 %v2337, %v2329
    %v2962 = vpack.c.b16 %v2338, %v2330
    %v2963 = vpack.c.b16 %v2347, %v2339
    %v2964 = vpack.c.b16 %v2348, %v2340
    %v2965 = vpack.c.b16 %v2349, %v2341
    %v2966 = vpack.c.b16 %v2350, %v2342
    %v2967 = vpack.c.b16 %v2351, %v2343
    %v2968 = vpack.c.b16 %v2352, %v2344
    %v2969 = vpack.c.b16 %v2353, %v2345
    %v2970 = vpack.c.b16 %v2354, %v2346
    %v2971 = vpack.c.b16 %v2363, %v2355
    %v2972 = vpack.c.b16 %v2364, %v2356
    %v2973 = vpack.c.b16 %v2365, %v2357
    %v2974 = vpack.c.b16 %v2366, %v2358
    %v2975 = vpack.c.b16 %v2367, %v2359
    %v2976 = vpack.c.b16 %v2368, %v2360
    %v2977 = vpack.c.b16 %v2369, %v2361
    %v2978 = vpack.c.b16 %v2370, %v2362
    %v2979 = vpack.c.b16 %v2379, %v2371
    %v2980 = vpack.c.b16 %v2380, %v2372
    %v2981 = vpack.c.b16 %v2381, %v2373
    %v2982 = vpack.c.b16 %v2382, %v2374
    %v2983 = vpack.c.b16 %v2383, %v2375
    %v2984 = vpack.c.b16 %v2384, %v2376
    %v2985 = vpack.c.b16 %v2385, %v2377
    %v2986 = vpack.c.b16 %v2386, %v2378
    %v2987 = vpack.c.b16 %v2395, %v2387
    %v2988 = vpack.c.b16 %v2396, %v2388
    %v2989 = vpack.c.b16 %v2397, %v2389
    %v2990 = vpack.c.b16 %v2398, %v2390
    %v2991 = vpack.c.b16 %v2399, %v2391
    %v2992 = vpack.c.b16 %v2400, %v2392
    %v2993 = vpack.c.b16 %v2401, %v2393
    %v2994 = vpack.c.b16 %v2402, %v2394
    %v2995 = vpack.c.b16 %v2411, %v2403
    %v2996 = vpack.c.b16 %v2412, %v2404
    %v2997 = vpack.c.b16 %v2413, %v2405
    %v2998 = vpack.c.b16 %v2414, %v2406
    %v2999 = vpack.c.b16 %v2415, %v2407
    %v3000 = vpack.c.b16 %v2416, %v2408
    %v3001 = vpack.c.b16 %v2417, %v2409
    %v3002 = vpack.c.b16 %v2418, %v2410
    %v3003 = vpack.c.b16 %v2427, %v2419
    %v3004 = vpack.c.b16 %v2428, %v2420
    %v3005 = vpack.c.b16 %v2429, %v2421
    %v3006 = vpack.c.b16 %v2430, %v2422
    %v3007 = vpack.c.b16 %v2431, %v2423
    %v3008 = vpack.c.b16 %v2432, %v2424
    %v3009 = vpack.c.b16 %v2433, %v2425
    %v3010 = vpack.c.b16 %v2434, %v2426
    %v3011 = vpack.c.b16 %v2443, %v2435
    %v3012 = vpack.c.b16 %v2444, %v2436
    %v3013 = vpack.c.b16 %v2445, %v2437
    %v3014 = vpack.c.b16 %v2446, %v2438
    %v3015 = vpack.c.b16 %v2447, %v2439
    %v3016 = vpack.c.b16 %v2448, %v2440
    %v3017 = vpack.c.b16 %v2449, %v2441
    %v3018 = vpack.c.b16 %v2450, %v2442
    %v3019 = vpack.c.b16 %v2459, %v2451
    %v3020 = vpack.c.b16 %v2460, %v2452
    %v3021 = vpack.c.b16 %v2461, %v2453
    %v3022 = vpack.c.b16 %v2462, %v2454
    %v3023 = vpack.c.b16 %v2463, %v2455
    %v3024 = vpack.c.b16 %v2464, %v2456
    %v3025 = vpack.c.b16 %v2465, %v2457
    %v3026 = vpack.c.b16 %v2466, %v2458
    %v3027 = vpack.c.b16 %v2475, %v2467
    %v3028 = vpack.c.b16 %v2476, %v2468
    %v3029 = vpack.c.b16 %v2477, %v2469
    %v3030 = vpack.c.b16 %v2478, %v2470
    %v3031 = vpack.c.b16 %v2479, %v2471
    %v3032 = vpack.c.b16 %v2480, %v2472
    %v3033 = vpack.c.b16 %v2481, %v2473
    %v3034 = vpack.c.b16 %v2482, %v2474
    %v3035 = vpack.c.b16 %v2491, %v2483
    %v3036 = vpack.c.b16 %v2492, %v2484
    %v3037 = vpack.c.b16 %v2493, %v2485
    %v3038 = vpack.c.b16 %v2494, %v2486
    %v3039 = vpack.c.b16 %v2495, %v2487
    %v3040 = vpack.c.b16 %v2496, %v2488
    %v3041 = vpack.c.b16 %v2497, %v2489
    %v3042 = vpack.c.b16 %v2498, %v2490
    %v3043 = vpack.c.b16 %v2507, %v2499
    %v3044 = vpack.c.b16 %v2508, %v2500
    %v3045 = vpack.c.b16 %v2509, %v2501
    %v3046 = vpack.c.b16 %v2510, %v2502
    %v3047 = vpack.c.b16 %v2511, %v2503
    %v3048 = vpack.c.b16 %v2512, %v2504
    %v3049 = vpack.c.b16 %v2513, %v2505
    %v3050 = vpack.c.b16 %v2514, %v2506
    %v3051 = vpack.c.b16 %v2523, %v2515
    %v3052 = vpack.c.b16 %v2524, %v2516
    %v3053 = vpack.c.b16 %v2525, %v2517
    %v3054 = vpack.c.b16 %v2526, %v2518
    %v3055 = vpack.c.b16 %v2527, %v2519
    %v3056 = vpack.c.b16 %v2528, %v2520
    %v3057 = vpack.c.b16 %v2529, %v2521
    %v3058 = vpack.c.b16 %v2530, %v2522
    %v3059 = vpack.c.b16 %v2539, %v2531
    %v3060 = vpack.c.b16 %v2540, %v2532
    %v3061 = vpack.c.b16 %v2541, %v2533
    %v3062 = vpack.c.b16 %v2542, %v2534
    %v3063 = vpack.c.b16 %v2543, %v2535
    %v3064 = vpack.c.b16 %v2544, %v2536
    %v3065 = vpack.c.b16 %v2545, %v2537
    %v3066 = vpack.c.b16 %v2546, %v2538
    %v3067 = vpack.c.b16 %v2555, %v2547
    %v3068 = vpack.c.b16 %v2556, %v2548
    %v3069 = vpack.c.b16 %v2557, %v2549
    %v3070 = vpack.c.b16 %v2558, %v2550
    %v3071 = vpack.c.b16 %v2559, %v2551
    %v3072 = vpack.c.b16 %v2560, %v2552
    %v3073 = vpack.c.b16 %v2561, %v2553
    %v3074 = vpack.c.b16 %v2562, %v2554
    %3587 = vmatprep.subr.bf16.mxu0 %v2564
    %3588 = vmatpush1.bf16.msra.mxu0 %v2563
    %3589 = vmatprep.subr.bf16.mxu0 %v2572
    %3590 = vmatpush1.bf16.msra.mxu0 %v2571
    %3591 = vmatprep.subr.bf16.mxu0 %v2580
    %3592 = vmatpush1.bf16.msra.mxu0 %v2579
    %3593 = vmatprep.subr.bf16.mxu0 %v2588
    %3594 = vmatpush1.bf16.msra.mxu0 %v2587
    %3595 = vmatprep.subr.bf16.mxu0 %v2596
    %3596 = vmatpush1.bf16.msra.mxu0 %v2595
    %3597 = vmatprep.subr.bf16.mxu0 %v2604
    %3598 = vmatpush1.bf16.msra.mxu0 %v2603
    %3599 = vmatprep.subr.bf16.mxu0 %v2612
    %3600 = vmatpush1.bf16.msra.mxu0 %v2611
    %3601 = vmatprep.subr.bf16.mxu0 %v2620
    %3602 = vmatpush1.bf16.msra.mxu0 %v2619
    %3603 = vmatprep.subr.bf16.mxu0 %v2628
    %3604 = vmatpush1.bf16.msra.mxu0 %v2627
    %3605 = vmatprep.subr.bf16.mxu0 %v2636
    %3606 = vmatpush1.bf16.msra.mxu0 %v2635
    %3607 = vmatprep.subr.bf16.mxu0 %v2644
    %3608 = vmatpush1.bf16.msra.mxu0 %v2643
    %3609 = vmatprep.subr.bf16.mxu0 %v2652
    %3610 = vmatpush1.bf16.msra.mxu0 %v2651
    %3611 = vmatprep.subr.bf16.mxu0 %v2660
    %3612 = vmatpush1.bf16.msra.mxu0 %v2659
    %3613 = vmatprep.subr.bf16.mxu0 %v2668
    %3614 = vmatpush1.bf16.msra.mxu0 %v2667
    %3615 = vmatprep.subr.bf16.mxu0 %v2676
    %3616 = vmatpush1.bf16.msra.mxu0 %v2675
    %3617 = vmatprep.subr.bf16.mxu0 %v2684
    %3618 = vmatpush1.bf16.msra.mxu0 %v2683
    %3619 = vmatprep.mubr.bf16.mxu0 %v900
    %3620 = vmatmul.mubr.bf16.gmra.mrb[0].mxu0 %v899
    %v3621 = vpop.f32.mrb[0].mxu0
    %v3622 = vadd.f32 %v670, %v3621
    %v3623 = vpop.f32.mrb[0].mxu0
    %v3624 = vadd.f32 %v674, %v3623
    %v3625 = vpop.f32.mrb[0].mxu0
    %v3626 = vadd.f32 %v670, %v3625
    %v3627 = vpop.f32.mrb[0].mxu0
    %v3628 = vadd.f32 %v674, %v3627
    %3629 = vmatprep.mubr.bf16.mxu0 %v908
    %3630 = vmatmul.mubr.bf16.gmra.mrb[0].mxu0 %v907
    %v3631 = vpop.f32.mrb[0].mxu0
    %v3632 = vadd.f32 %v670, %v3631
    %v3633 = vpop.f32.mrb[0].mxu0
    %v3634 = vadd.f32 %v674, %v3633
    %v3635 = vpop.f32.mrb[0].mxu0
    %v3636 = vadd.f32 %v670, %v3635
    %v3637 = vpop.f32.mrb[0].mxu0
    %v3638 = vadd.f32 %v674, %v3637
    %3639 = vmatprep.mubr.bf16.mxu0 %v916
    %3640 = vmatmul.mubr.bf16.gmra.mrb[0].mxu0 %v915
    %v3641 = vpop.f32.mrb[0].mxu0
    %v3642 = vadd.f32 %v670, %v3641
    %v3643 = vpop.f32.mrb[0].mxu0
    %v3644 = vadd.f32 %v674, %v3643
    %v3645 = vpop.f32.mrb[0].mxu0
    %v3646 = vadd.f32 %v670, %v3645
    %v3647 = vpop.f32.mrb[0].mxu0
    %v3648 = vadd.f32 %v674, %v3647
    %3649 = vmatprep.mubr.bf16.mxu0 %v924
    %3650 = vmatmul.mubr.bf16.gmra.mrb[0].mxu0 %v923
    %v3651 = vpop.f32.mrb[0].mxu0
    %v3652 = vadd.f32 %v670, %v3651
    %v3653 = vpop.f32.mrb[0].mxu0
    %v3654 = vadd.f32 %v674, %v3653
    %v3655 = vpop.f32.mrb[0].mxu0
    %v3656 = vadd.f32 %v670, %v3655
    %v3657 = vpop.f32.mrb[0].mxu0
    %v3658 = vadd.f32 %v674, %v3657
    %3659 = vmatprep.mubr.bf16.mxu0 %v932
    %3660 = vmatmul.mubr.bf16.gmra.mrb[0].mxu0 %v931
    %v3661 = vpop.f32.mrb[0].mxu0
    %v3662 = vadd.f32 %v670, %v3661
    %v3663 = vpop.f32.mrb[0].mxu0
    %v3664 = vadd.f32 %v674, %v3663
    %v3665 = vpop.f32.mrb[0].mxu0
    %v3666 = vadd.f32 %v670, %v3665
    %v3667 = vpop.f32.mrb[0].mxu0
    %v3668 = vadd.f32 %v674, %v3667
    %3669 = vmatprep.mubr.bf16.mxu0 %v940
    %3670 = vmatmul.mubr.bf16.gmra.mrb[0].mxu0 %v939
    %v3671 = vpop.f32.mrb[0].mxu0
    %v3672 = vadd.f32 %v670, %v3671
    %v3673 = vpop.f32.mrb[0].mxu0
    %v3674 = vadd.f32 %v674, %v3673
    %v3675 = vpop.f32.mrb[0].mxu0
    %v3676 = vadd.f32 %v670, %v3675
    %v3677 = vpop.f32.mrb[0].mxu0
    %v3678 = vadd.f32 %v674, %v3677
    %3679 = vmatprep.mubr.bf16.mxu0 %v948
    %3680 = vmatmul.mubr.bf16.gmra.mrb[0].mxu0 %v947
    %v3681 = vpop.f32.mrb[0].mxu0
    %v3682 = vadd.f32 %v670, %v3681
    %v3683 = vpop.f32.mrb[0].mxu0
    %v3684 = vadd.f32 %v674, %v3683
    %v3685 = vpop.f32.mrb[0].mxu0
    %v3686 = vadd.f32 %v670, %v3685
    %v3687 = vpop.f32.mrb[0].mxu0
    %v3688 = vadd.f32 %v674, %v3687
    %3689 = vmatprep.mubr.bf16.mxu0 %v956
    %3690 = vmatmul.mubr.bf16.gmra.mrb[0].mxu0 %v955
    %v3691 = vpop.f32.mrb[0].mxu0
    %v3692 = vadd.f32 %v670, %v3691
    %v3693 = vpop.f32.mrb[0].mxu0
    %v3694 = vadd.f32 %v674, %v3693
    %v3695 = vpop.f32.mrb[0].mxu0
    %v3696 = vadd.f32 %v670, %v3695
    %v3697 = vpop.f32.mrb[0].mxu0
    %v3698 = vadd.f32 %v674, %v3697
    %3699 = vdwg.mxu0
    %3700 = vmatprep.subr.bf16.mxu0 %v2692
    %3701 = vmatpush1.bf16.msra.mxu0 %v2691
    %3702 = vmatprep.subr.bf16.mxu0 %v2700
    %3703 = vmatpush1.bf16.msra.mxu0 %v2699
    %3704 = vmatprep.subr.bf16.mxu0 %v2708
    %3705 = vmatpush1.bf16.msra.mxu0 %v2707
    %3706 = vmatprep.subr.bf16.mxu0 %v2716
    %3707 = vmatpush1.bf16.msra.mxu0 %v2715
    %3708 = vmatprep.subr.bf16.mxu0 %v2724
    %3709 = vmatpush1.bf16.msra.mxu0 %v2723
    %3710 = vmatprep.subr.bf16.mxu0 %v2732
    %3711 = vmatpush1.bf16.msra.mxu0 %v2731
    %3712 = vmatprep.subr.bf16.mxu0 %v2740
    %3713 = vmatpush1.bf16.msra.mxu0 %v2739
    %3714 = vmatprep.subr.bf16.mxu0 %v2748
    %3715 = vmatpush1.bf16.msra.mxu0 %v2747
    %3716 = vmatprep.subr.bf16.mxu0 %v2756
    %3717 = vmatpush1.bf16.msra.mxu0 %v2755
    %3718 = vmatprep.subr.bf16.mxu0 %v2764
    %3719 = vmatpush1.bf16.msra.mxu0 %v2763
    %3720 = vmatprep.subr.bf16.mxu0 %v2772
    %3721 = vmatpush1.bf16.msra.mxu0 %v2771
    %3722 = vmatprep.subr.bf16.mxu0 %v2780
    %3723 = vmatpush1.bf16.msra.mxu0 %v2779
    %3724 = vmatprep.subr.bf16.mxu0 %v2788
    %3725 = vmatpush1.bf16.msra.mxu0 %v2787
    %3726 = vmatprep.subr.bf16.mxu0 %v2796
    %3727 = vmatpush1.bf16.msra.mxu0 %v2795
    %3728 = vmatprep.subr.bf16.mxu0 %v2804
    %3729 = vmatpush1.bf16.msra.mxu0 %v2803
    %3730 = vmatprep.subr.bf16.mxu0 %v2812
    %3731 = vmatpush1.bf16.msra.mxu0 %v2811
    %3732 = vmatprep.mubr.bf16.mxu0 %v902
    %3733 = vmatmul.mubr.bf16.gmra.mrb[0].mxu0 %v901
    %v3734 = vpop.f32.mrb[0].mxu0
    %v3735 = vadd.f32 %v3622, %v3734
    %v3736 = vpop.f32.mrb[0].mxu0
    %v3737 = vadd.f32 %v3624, %v3736
    %v3738 = vpop.f32.mrb[0].mxu0
    %v3739 = vadd.f32 %v3626, %v3738
    %v3740 = vpop.f32.mrb[0].mxu0
    %v3741 = vadd.f32 %v3628, %v3740
    %3742 = vmatprep.mubr.bf16.mxu0 %v910
    %3743 = vmatmul.mubr.bf16.gmra.mrb[0].mxu0 %v909
    %v3744 = vpop.f32.mrb[0].mxu0
    %v3745 = vadd.f32 %v3632, %v3744
    %v3746 = vpop.f32.mrb[0].mxu0
    %v3747 = vadd.f32 %v3634, %v3746
    %v3748 = vpop.f32.mrb[0].mxu0
    %v3749 = vadd.f32 %v3636, %v3748
    %v3750 = vpop.f32.mrb[0].mxu0
    %v3751 = vadd.f32 %v3638, %v3750
    %3752 = vmatprep.mubr.bf16.mxu0 %v918
    %3753 = vmatmul.mubr.bf16.gmra.mrb[0].mxu0 %v917
    %v3754 = vpop.f32.mrb[0].mxu0
    %v3755 = vadd.f32 %v3642, %v3754
    %v3756 = vpop.f32.mrb[0].mxu0
    %v3757 = vadd.f32 %v3644, %v3756
    %v3758 = vpop.f32.mrb[0].mxu0
    %v3759 = vadd.f32 %v3646, %v3758
    %v3760 = vpop.f32.mrb[0].mxu0
    %v3761 = vadd.f32 %v3648, %v3760
    %3762 = vmatprep.mubr.bf16.mxu0 %v926
    %3763 = vmatmul.mubr.bf16.gmra.mrb[0].mxu0 %v925
    %v3764 = vpop.f32.mrb[0].mxu0
    %v3765 = vadd.f32 %v3652, %v3764
    %v3766 = vpop.f32.mrb[0].mxu0
    %v3767 = vadd.f32 %v3654, %v3766
    %v3768 = vpop.f32.mrb[0].mxu0
    %v3769 = vadd.f32 %v3656, %v3768
    %v3770 = vpop.f32.mrb[0].mxu0
    %v3771 = vadd.f32 %v3658, %v3770
    %3772 = vmatprep.mubr.bf16.mxu0 %v934
    %3773 = vmatmul.mubr.bf16.gmra.mrb[0].mxu0 %v933
    %v3774 = vpop.f32.mrb[0].mxu0
    %v3775 = vadd.f32 %v3662, %v3774
    %v3776 = vpop.f32.mrb[0].mxu0
    %v3777 = vadd.f32 %v3664, %v3776
    %v3778 = vpop.f32.mrb[0].mxu0
    %v3779 = vadd.f32 %v3666, %v3778
    %v3780 = vpop.f32.mrb[0].mxu0
    %v3781 = vadd.f32 %v3668, %v3780
    %3782 = vmatprep.mubr.bf16.mxu0 %v942
    %3783 = vmatmul.mubr.bf16.gmra.mrb[0].mxu0 %v941
    %v3784 = vpop.f32.mrb[0].mxu0
    %v3785 = vadd.f32 %v3672, %v3784
    %v3786 = vpop.f32.mrb[0].mxu0
    %v3787 = vadd.f32 %v3674, %v3786
    %v3788 = vpop.f32.mrb[0].mxu0
    %v3789 = vadd.f32 %v3676, %v3788
    %v3790 = vpop.f32.mrb[0].mxu0
    %v3791 = vadd.f32 %v3678, %v3790
    %3792 = vmatprep.mubr.bf16.mxu0 %v950
    %3793 = vmatmul.mubr.bf16.gmra.mrb[0].mxu0 %v949
    %v3794 = vpop.f32.mrb[0].mxu0
    %v3795 = vadd.f32 %v3682, %v3794
    %v3796 = vpop.f32.mrb[0].mxu0
    %v3797 = vadd.f32 %v3684, %v3796
    %v3798 = vpop.f32.mrb[0].mxu0
    %v3799 = vadd.f32 %v3686, %v3798
    %v3800 = vpop.f32.mrb[0].mxu0
    %v3801 = vadd.f32 %v3688, %v3800
    %3802 = vmatprep.mubr.bf16.mxu0 %v958
    %3803 = vmatmul.mubr.bf16.gmra.mrb[0].mxu0 %v957
    %v3804 = vpop.f32.mrb[0].mxu0
    %v3805 = vadd.f32 %v3692, %v3804
    %v3806 = vpop.f32.mrb[0].mxu0
    %v3807 = vadd.f32 %v3694, %v3806
    %v3808 = vpop.f32.mrb[0].mxu0
    %v3809 = vadd.f32 %v3696, %v3808
    %v3810 = vpop.f32.mrb[0].mxu0
    %v3811 = vadd.f32 %v3698, %v3810
    %3812 = vdwg.mxu0
    %3813 = vmatprep.subr.bf16.mxu0 %v2820
    %3814 = vmatpush1.bf16.msra.mxu0 %v2819
    %3815 = vmatprep.subr.bf16.mxu0 %v2828
    %3816 = vmatpush1.bf16.msra.mxu0 %v2827
    %3817 = vmatprep.subr.bf16.mxu0 %v2836
    %3818 = vmatpush1.bf16.msra.mxu0 %v2835
    %3819 = vmatprep.subr.bf16.mxu0 %v2844
    %3820 = vmatpush1.bf16.msra.mxu0 %v2843
    %3821 = vmatprep.subr.bf16.mxu0 %v2852
    %3822 = vmatpush1.bf16.msra.mxu0 %v2851
    %3823 = vmatprep.subr.bf16.mxu0 %v2860
    %3824 = vmatpush1.bf16.msra.mxu0 %v2859
    %3825 = vmatprep.subr.bf16.mxu0 %v2868
    %3826 = vmatpush1.bf16.msra.mxu0 %v2867
    %3827 = vmatprep.subr.bf16.mxu0 %v2876
    %3828 = vmatpush1.bf16.msra.mxu0 %v2875
    %3829 = vmatprep.subr.bf16.mxu0 %v2884
    %3830 = vmatpush1.bf16.msra.mxu0 %v2883
    %3831 = vmatprep.subr.bf16.mxu0 %v2892
    %3832 = vmatpush1.bf16.msra.mxu0 %v2891
    %3833 = vmatprep.subr.bf16.mxu0 %v2900
    %3834 = vmatpush1.bf16.msra.mxu0 %v2899
    %3835 = vmatprep.subr.bf16.mxu0 %v2908
    %3836 = vmatpush1.bf16.msra.mxu0 %v2907
    %3837 = vmatprep.subr.bf16.mxu0 %v2916
    %3838 = vmatpush1.bf16.msra.mxu0 %v2915
    %3839 = vmatprep.subr.bf16.mxu0 %v2924
    %3840 = vmatpush1.bf16.msra.mxu0 %v2923
    %3841 = vmatprep.subr.bf16.mxu0 %v2932
    %3842 = vmatpush1.bf16.msra.mxu0 %v2931
    %3843 = vmatprep.subr.bf16.mxu0 %v2940
    %3844 = vmatpush1.bf16.msra.mxu0 %v2939
    %3845 = vmatprep.mubr.bf16.mxu0 %v904
    %3846 = vmatmul.mubr.bf16.gmra.mrb[0].mxu0 %v903
    %v3847 = vpop.f32.mrb[0].mxu0
    %v3848 = vadd.f32 %v3735, %v3847
    %v3849 = vpop.f32.mrb[0].mxu0
    %v3850 = vadd.f32 %v3737, %v3849
    %v3851 = vpop.f32.mrb[0].mxu0
    %v3852 = vadd.f32 %v3739, %v3851
    %v3853 = vpop.f32.mrb[0].mxu0
    %v3854 = vadd.f32 %v3741, %v3853
    %3855 = vmatprep.mubr.bf16.mxu0 %v912
    %3856 = vmatmul.mubr.bf16.gmra.mrb[0].mxu0 %v911
    %v3857 = vpop.f32.mrb[0].mxu0
    %v3858 = vadd.f32 %v3745, %v3857
    %v3859 = vpop.f32.mrb[0].mxu0
    %v3860 = vadd.f32 %v3747, %v3859
    %v3861 = vpop.f32.mrb[0].mxu0
    %v3862 = vadd.f32 %v3749, %v3861
    %v3863 = vpop.f32.mrb[0].mxu0
    %v3864 = vadd.f32 %v3751, %v3863
    %3865 = vmatprep.mubr.bf16.mxu0 %v920
    %3866 = vmatmul.mubr.bf16.gmra.mrb[0].mxu0 %v919
    %v3867 = vpop.f32.mrb[0].mxu0
    %v3868 = vadd.f32 %v3755, %v3867
    %v3869 = vpop.f32.mrb[0].mxu0
    %v3870 = vadd.f32 %v3757, %v3869
    %v3871 = vpop.f32.mrb[0].mxu0
    %v3872 = vadd.f32 %v3759, %v3871
    %v3873 = vpop.f32.mrb[0].mxu0
    %v3874 = vadd.f32 %v3761, %v3873
    %3875 = vmatprep.mubr.bf16.mxu0 %v928
    %3876 = vmatmul.mubr.bf16.gmra.mrb[0].mxu0 %v927
    %v3877 = vpop.f32.mrb[0].mxu0
    %v3878 = vadd.f32 %v3765, %v3877
    %v3879 = vpop.f32.mrb[0].mxu0
    %v3880 = vadd.f32 %v3767, %v3879
    %v3881 = vpop.f32.mrb[0].mxu0
    %v3882 = vadd.f32 %v3769, %v3881
    %v3883 = vpop.f32.mrb[0].mxu0
    %v3884 = vadd.f32 %v3771, %v3883
    %3885 = vmatprep.mubr.bf16.mxu0 %v936
    %3886 = vmatmul.mubr.bf16.gmra.mrb[0].mxu0 %v935
    %v3887 = vpop.f32.mrb[0].mxu0
    %v3888 = vadd.f32 %v3775, %v3887
    %v3889 = vpop.f32.mrb[0].mxu0
    %v3890 = vadd.f32 %v3777, %v3889
    %v3891 = vpop.f32.mrb[0].mxu0
    %v3892 = vadd.f32 %v3779, %v3891
    %v3893 = vpop.f32.mrb[0].mxu0
    %v3894 = vadd.f32 %v3781, %v3893
    %3895 = vmatprep.mubr.bf16.mxu0 %v944
    %3896 = vmatmul.mubr.bf16.gmra.mrb[0].mxu0 %v943
    %v3897 = vpop.f32.mrb[0].mxu0
    %v3898 = vadd.f32 %v3785, %v3897
    %v3899 = vpop.f32.mrb[0].mxu0
    %v3900 = vadd.f32 %v3787, %v3899
    %v3901 = vpop.f32.mrb[0].mxu0
    %v3902 = vadd.f32 %v3789, %v3901
    %v3903 = vpop.f32.mrb[0].mxu0
    %v3904 = vadd.f32 %v3791, %v3903
    %3905 = vmatprep.mubr.bf16.mxu0 %v952
    %3906 = vmatmul.mubr.bf16.gmra.mrb[0].mxu0 %v951
    %v3907 = vpop.f32.mrb[0].mxu0
    %v3908 = vadd.f32 %v3795, %v3907
    %v3909 = vpop.f32.mrb[0].mxu0
    %v3910 = vadd.f32 %v3797, %v3909
    %v3911 = vpop.f32.mrb[0].mxu0
    %v3912 = vadd.f32 %v3799, %v3911
    %v3913 = vpop.f32.mrb[0].mxu0
    %v3914 = vadd.f32 %v3801, %v3913
    %3915 = vmatprep.mubr.bf16.mxu0 %v960
    %3916 = vmatmul.mubr.bf16.gmra.mrb[0].mxu0 %v959
    %v3917 = vpop.f32.mrb[0].mxu0
    %v3918 = vadd.f32 %v3805, %v3917
    %v3919 = vpop.f32.mrb[0].mxu0
    %v3920 = vadd.f32 %v3807, %v3919
    %v3921 = vpop.f32.mrb[0].mxu0
    %v3922 = vadd.f32 %v3809, %v3921
    %v3923 = vpop.f32.mrb[0].mxu0
    %v3924 = vadd.f32 %v3811, %v3923
    %3925 = vdwg.mxu0
    %3926 = vmatprep.subr.bf16.mxu0 %v2948
    %3927 = vmatpush1.bf16.msra.mxu0 %v2947
    %3928 = vmatprep.subr.bf16.mxu0 %v2956
    %3929 = vmatpush1.bf16.msra.mxu0 %v2955
    %3930 = vmatprep.subr.bf16.mxu0 %v2964
    %3931 = vmatpush1.bf16.msra.mxu0 %v2963
    %3932 = vmatprep.subr.bf16.mxu0 %v2972
    %3933 = vmatpush1.bf16.msra.mxu0 %v2971
    %3934 = vmatprep.subr.bf16.mxu0 %v2980
    %3935 = vmatpush1.bf16.msra.mxu0 %v2979
    %3936 = vmatprep.subr.bf16.mxu0 %v2988
    %3937 = vmatpush1.bf16.msra.mxu0 %v2987
    %3938 = vmatprep.subr.bf16.mxu0 %v2996
    %3939 = vmatpush1.bf16.msra.mxu0 %v2995
    %3940 = vmatprep.subr.bf16.mxu0 %v3004
    %3941 = vmatpush1.bf16.msra.mxu0 %v3003
    %3942 = vmatprep.subr.bf16.mxu0 %v3012
    %3943 = vmatpush1.bf16.msra.mxu0 %v3011
    %3944 = vmatprep.subr.bf16.mxu0 %v3020
    %3945 = vmatpush1.bf16.msra.mxu0 %v3019
    %3946 = vmatprep.subr.bf16.mxu0 %v3028
    %3947 = vmatpush1.bf16.msra.mxu0 %v3027
    %3948 = vmatprep.subr.bf16.mxu0 %v3036
    %3949 = vmatpush1.bf16.msra.mxu0 %v3035
    %3950 = vmatprep.subr.bf16.mxu0 %v3044
    %3951 = vmatpush1.bf16.msra.mxu0 %v3043
    %3952 = vmatprep.subr.bf16.mxu0 %v3052
    %3953 = vmatpush1.bf16.msra.mxu0 %v3051
    %3954 = vmatprep.subr.bf16.mxu0 %v3060
    %3955 = vmatpush1.bf16.msra.mxu0 %v3059
    %3956 = vmatprep.subr.bf16.mxu0 %v3068
    %3957 = vmatpush1.bf16.msra.mxu0 %v3067
    %3958 = vmatprep.mubr.bf16.mxu0 %v906
    %3959 = vmatmul.mubr.bf16.gmra.mrb[0].mxu0 %v905
    %v3960 = vpop.f32.mrb[0].mxu0
    %v3961 = vadd.f32 %v3848, %v3960
    %v3962 = vpop.f32.mrb[0].mxu0
    %v3963 = vadd.f32 %v3850, %v3962
    %v3964 = vpop.f32.mrb[0].mxu0
    %v3965 = vadd.f32 %v3852, %v3964
    %v3966 = vpop.f32.mrb[0].mxu0
    %v3967 = vadd.f32 %v3854, %v3966
    %3968 = vmatprep.mubr.bf16.mxu0 %v914
    %3969 = vmatmul.mubr.bf16.gmra.mrb[0].mxu0 %v913
    %v3970 = vpop.f32.mrb[0].mxu0
    %v3971 = vadd.f32 %v3858, %v3970
    %v3972 = vpop.f32.mrb[0].mxu0
    %v3973 = vadd.f32 %v3860, %v3972
    %v3974 = vpop.f32.mrb[0].mxu0
    %v3975 = vadd.f32 %v3862, %v3974
    %v3976 = vpop.f32.mrb[0].mxu0
    %v3977 = vadd.f32 %v3864, %v3976
    %3978 = vmatprep.mubr.bf16.mxu0 %v922
    %3979 = vmatmul.mubr.bf16.gmra.mrb[0].mxu0 %v921
    %v3980 = vpop.f32.mrb[0].mxu0
    %v3981 = vadd.f32 %v3868, %v3980
    %v3982 = vpop.f32.mrb[0].mxu0
    %v3983 = vadd.f32 %v3870, %v3982
    %v3984 = vpop.f32.mrb[0].mxu0
    %v3985 = vadd.f32 %v3872, %v3984
    %v3986 = vpop.f32.mrb[0].mxu0
    %v3987 = vadd.f32 %v3874, %v3986
    %3988 = vmatprep.mubr.bf16.mxu0 %v930
    %3989 = vmatmul.mubr.bf16.gmra.mrb[0].mxu0 %v929
    %v3990 = vpop.f32.mrb[0].mxu0
    %v3991 = vadd.f32 %v3878, %v3990
    %v3992 = vpop.f32.mrb[0].mxu0
    %v3993 = vadd.f32 %v3880, %v3992
    %v3994 = vpop.f32.mrb[0].mxu0
    %v3995 = vadd.f32 %v3882, %v3994
    %v3996 = vpop.f32.mrb[0].mxu0
    %v3997 = vadd.f32 %v3884, %v3996
    %3998 = vmatprep.mubr.bf16.mxu0 %v938
    %3999 = vmatmul.mubr.bf16.gmra.mrb[0].mxu0 %v937
    %v4000 = vpop.f32.mrb[0].mxu0
    %v4001 = vadd.f32 %v3888, %v4000
    %v4002 = vpop.f32.mrb[0].mxu0
    %v4003 = vadd.f32 %v3890, %v4002
    %v4004 = vpop.f32.mrb[0].mxu0
    %v4005 = vadd.f32 %v3892, %v4004
    %v4006 = vpop.f32.mrb[0].mxu0
    %v4007 = vadd.f32 %v3894, %v4006
    %4008 = vmatprep.mubr.bf16.mxu0 %v946
    %4009 = vmatmul.mubr.bf16.gmra.mrb[0].mxu0 %v945
    %v4010 = vpop.f32.mrb[0].mxu0
    %v4011 = vadd.f32 %v3898, %v4010
    %v4012 = vpop.f32.mrb[0].mxu0
    %v4013 = vadd.f32 %v3900, %v4012
    %v4014 = vpop.f32.mrb[0].mxu0
    %v4015 = vadd.f32 %v3902, %v4014
    %v4016 = vpop.f32.mrb[0].mxu0
    %v4017 = vadd.f32 %v3904, %v4016
    %4018 = vmatprep.mubr.bf16.mxu0 %v954
    %4019 = vmatmul.mubr.bf16.gmra.mrb[0].mxu0 %v953
    %v4020 = vpop.f32.mrb[0].mxu0
    %v4021 = vadd.f32 %v3908, %v4020
    %v4022 = vpop.f32.mrb[0].mxu0
    %v4023 = vadd.f32 %v3910, %v4022
    %v4024 = vpop.f32.mrb[0].mxu0
    %v4025 = vadd.f32 %v3912, %v4024
    %v4026 = vpop.f32.mrb[0].mxu0
    %v4027 = vadd.f32 %v3914, %v4026
    %4028 = vmatprep.mubr.bf16.mxu0 %v962
    %4029 = vmatmul.mubr.bf16.gmra.mrb[0].mxu0 %v961
    %v4030 = vpop.f32.mrb[0].mxu0
    %v4031 = vadd.f32 %v3918, %v4030
    %v4032 = vpop.f32.mrb[0].mxu0
    %v4033 = vadd.f32 %v3920, %v4032
    %v4034 = vpop.f32.mrb[0].mxu0
    %v4035 = vadd.f32 %v3922, %v4034
    %v4036 = vpop.f32.mrb[0].mxu0
    %v4037 = vadd.f32 %v3924, %v4036
    %4038 = vdwg.mxu0
    %4039 = vmatprep.subr.bf16.mxu0 %v2566
    %4040 = vmatpush1.bf16.msra.mxu0 %v2565
    %4041 = vmatprep.subr.bf16.mxu0 %v2574
    %4042 = vmatpush1.bf16.msra.mxu0 %v2573
    %4043 = vmatprep.subr.bf16.mxu0 %v2582
    %4044 = vmatpush1.bf16.msra.mxu0 %v2581
    %4045 = vmatprep.subr.bf16.mxu0 %v2590
    %4046 = vmatpush1.bf16.msra.mxu0 %v2589
    %4047 = vmatprep.subr.bf16.mxu0 %v2598
    %4048 = vmatpush1.bf16.msra.mxu0 %v2597
    %4049 = vmatprep.subr.bf16.mxu0 %v2606
    %4050 = vmatpush1.bf16.msra.mxu0 %v2605
    %4051 = vmatprep.subr.bf16.mxu0 %v2614
    %4052 = vmatpush1.bf16.msra.mxu0 %v2613
    %4053 = vmatprep.subr.bf16.mxu0 %v2622
    %4054 = vmatpush1.bf16.msra.mxu0 %v2621
    %4055 = vmatprep.subr.bf16.mxu0 %v2630
    %4056 = vmatpush1.bf16.msra.mxu0 %v2629
    %4057 = vmatprep.subr.bf16.mxu0 %v2638
    %4058 = vmatpush1.bf16.msra.mxu0 %v2637
    %4059 = vmatprep.subr.bf16.mxu0 %v2646
    %4060 = vmatpush1.bf16.msra.mxu0 %v2645
    %4061 = vmatprep.subr.bf16.mxu0 %v2654
    %4062 = vmatpush1.bf16.msra.mxu0 %v2653
    %4063 = vmatprep.subr.bf16.mxu0 %v2662
    %4064 = vmatpush1.bf16.msra.mxu0 %v2661
    %4065 = vmatprep.subr.bf16.mxu0 %v2670
    %4066 = vmatpush1.bf16.msra.mxu0 %v2669
    %4067 = vmatprep.subr.bf16.mxu0 %v2678
    %4068 = vmatpush1.bf16.msra.mxu0 %v2677
    %4069 = vmatprep.subr.bf16.mxu0 %v2686
    %4070 = vmatpush1.bf16.msra.mxu0 %v2685
    %4071 = vmatprep.mubr.bf16.mxu0 %v900
    %4072 = vmatmul.mubr.bf16.gmra.mrb[0].mxu0 %v899
    %v4073 = vpop.f32.mrb[0].mxu0
    %v4074 = vadd.f32 %v678, %v4073
    %v4075 = vpop.f32.mrb[0].mxu0
    %v4076 = vadd.f32 %v682, %v4075
    %v4077 = vpop.f32.mrb[0].mxu0
    %v4078 = vadd.f32 %v678, %v4077
    %v4079 = vpop.f32.mrb[0].mxu0
    %v4080 = vadd.f32 %v682, %v4079
    %4081 = vmatprep.mubr.bf16.mxu0 %v908
    %4082 = vmatmul.mubr.bf16.gmra.mrb[0].mxu0 %v907
    %v4083 = vpop.f32.mrb[0].mxu0
    %v4084 = vadd.f32 %v678, %v4083
    %v4085 = vpop.f32.mrb[0].mxu0
    %v4086 = vadd.f32 %v682, %v4085
    %v4087 = vpop.f32.mrb[0].mxu0
    %v4088 = vadd.f32 %v678, %v4087
    %v4089 = vpop.f32.mrb[0].mxu0
    %v4090 = vadd.f32 %v682, %v4089
    %4091 = vmatprep.mubr.bf16.mxu0 %v916
    %4092 = vmatmul.mubr.bf16.gmra.mrb[0].mxu0 %v915
    %v4093 = vpop.f32.mrb[0].mxu0
    %v4094 = vadd.f32 %v678, %v4093
    %v4095 = vpop.f32.mrb[0].mxu0
    %v4096 = vadd.f32 %v682, %v4095
    %v4097 = vpop.f32.mrb[0].mxu0
    %v4098 = vadd.f32 %v678, %v4097
    %v4099 = vpop.f32.mrb[0].mxu0
    %v4100 = vadd.f32 %v682, %v4099
    %4101 = vmatprep.mubr.bf16.mxu0 %v924
    %4102 = vmatmul.mubr.bf16.gmra.mrb[0].mxu0 %v923
    %v4103 = vpop.f32.mrb[0].mxu0
    %v4104 = vadd.f32 %v678, %v4103
    %v4105 = vpop.f32.mrb[0].mxu0
    %v4106 = vadd.f32 %v682, %v4105
    %v4107 = vpop.f32.mrb[0].mxu0
    %v4108 = vadd.f32 %v678, %v4107
    %v4109 = vpop.f32.mrb[0].mxu0
    %v4110 = vadd.f32 %v682, %v4109
    %4111 = vmatprep.mubr.bf16.mxu0 %v932
    %4112 = vmatmul.mubr.bf16.gmra.mrb[0].mxu0 %v931
    %v4113 = vpop.f32.mrb[0].mxu0
    %v4114 = vadd.f32 %v678, %v4113
    %v4115 = vpop.f32.mrb[0].mxu0
    %v4116 = vadd.f32 %v682, %v4115
    %v4117 = vpop.f32.mrb[0].mxu0
    %v4118 = vadd.f32 %v678, %v4117
    %v4119 = vpop.f32.mrb[0].mxu0
    %v4120 = vadd.f32 %v682, %v4119
    %4121 = vmatprep.mubr.bf16.mxu0 %v940
    %4122 = vmatmul.mubr.bf16.gmra.mrb[0].mxu0 %v939
    %v4123 = vpop.f32.mrb[0].mxu0
    %v4124 = vadd.f32 %v678, %v4123
    %v4125 = vpop.f32.mrb[0].mxu0
    %v4126 = vadd.f32 %v682, %v4125
    %v4127 = vpop.f32.mrb[0].mxu0
    %v4128 = vadd.f32 %v678, %v4127
    %v4129 = vpop.f32.mrb[0].mxu0
    %v4130 = vadd.f32 %v682, %v4129
    %4131 = vmatprep.mubr.bf16.mxu0 %v948
    %4132 = vmatmul.mubr.bf16.gmra.mrb[0].mxu0 %v947
    %v4133 = vpop.f32.mrb[0].mxu0
    %v4134 = vadd.f32 %v678, %v4133
    %v4135 = vpop.f32.mrb[0].mxu0
    %v4136 = vadd.f32 %v682, %v4135
    %v4137 = vpop.f32.mrb[0].mxu0
    %v4138 = vadd.f32 %v678, %v4137
    %v4139 = vpop.f32.mrb[0].mxu0
    %v4140 = vadd.f32 %v682, %v4139
    %4141 = vmatprep.mubr.bf16.mxu0 %v956
    %4142 = vmatmul.mubr.bf16.gmra.mrb[0].mxu0 %v955
    %v4143 = vpop.f32.mrb[0].mxu0
    %v4144 = vadd.f32 %v678, %v4143
    %v4145 = vpop.f32.mrb[0].mxu0
    %v4146 = vadd.f32 %v682, %v4145
    %v4147 = vpop.f32.mrb[0].mxu0
    %v4148 = vadd.f32 %v678, %v4147
    %v4149 = vpop.f32.mrb[0].mxu0
    %v4150 = vadd.f32 %v682, %v4149
    %4151 = vdwg.mxu0
    %4152 = vmatprep.subr.bf16.mxu0 %v2694
    %4153 = vmatpush1.bf16.msra.mxu0 %v2693
    %4154 = vmatprep.subr.bf16.mxu0 %v2702
    %4155 = vmatpush1.bf16.msra.mxu0 %v2701
    %4156 = vmatprep.subr.bf16.mxu0 %v2710
    %4157 = vmatpush1.bf16.msra.mxu0 %v2709
    %4158 = vmatprep.subr.bf16.mxu0 %v2718
    %4159 = vmatpush1.bf16.msra.mxu0 %v2717
    %4160 = vmatprep.subr.bf16.mxu0 %v2726
    %4161 = vmatpush1.bf16.msra.mxu0 %v2725
    %4162 = vmatprep.subr.bf16.mxu0 %v2734
    %4163 = vmatpush1.bf16.msra.mxu0 %v2733
    %4164 = vmatprep.subr.bf16.mxu0 %v2742
    %4165 = vmatpush1.bf16.msra.mxu0 %v2741
    %4166 = vmatprep.subr.bf16.mxu0 %v2750
    %4167 = vmatpush1.bf16.msra.mxu0 %v2749
    %4168 = vmatprep.subr.bf16.mxu0 %v2758
    %4169 = vmatpush1.bf16.msra.mxu0 %v2757
    %4170 = vmatprep.subr.bf16.mxu0 %v2766
    %4171 = vmatpush1.bf16.msra.mxu0 %v2765
    %4172 = vmatprep.subr.bf16.mxu0 %v2774
    %4173 = vmatpush1.bf16.msra.mxu0 %v2773
    %4174 = vmatprep.subr.bf16.mxu0 %v2782
    %4175 = vmatpush1.bf16.msra.mxu0 %v2781
    %4176 = vmatprep.subr.bf16.mxu0 %v2790
    %4177 = vmatpush1.bf16.msra.mxu0 %v2789
    %4178 = vmatprep.subr.bf16.mxu0 %v2798
    %4179 = vmatpush1.bf16.msra.mxu0 %v2797
    %4180 = vmatprep.subr.bf16.mxu0 %v2806
    %4181 = vmatpush1.bf16.msra.mxu0 %v2805
    %4182 = vmatprep.subr.bf16.mxu0 %v2814
    %4183 = vmatpush1.bf16.msra.mxu0 %v2813
    %4184 = vmatprep.mubr.bf16.mxu0 %v902
    %4185 = vmatmul.mubr.bf16.gmra.mrb[0].mxu0 %v901
    %v4186 = vpop.f32.mrb[0].mxu0
    %v4187 = vadd.f32 %v4074, %v4186
    %v4188 = vpop.f32.mrb[0].mxu0
    %v4189 = vadd.f32 %v4076, %v4188
    %v4190 = vpop.f32.mrb[0].mxu0
    %v4191 = vadd.f32 %v4078, %v4190
    %v4192 = vpop.f32.mrb[0].mxu0
    %v4193 = vadd.f32 %v4080, %v4192
    %4194 = vmatprep.mubr.bf16.mxu0 %v910
    %4195 = vmatmul.mubr.bf16.gmra.mrb[0].mxu0 %v909
    %v4196 = vpop.f32.mrb[0].mxu0
    %v4197 = vadd.f32 %v4084, %v4196
    %v4198 = vpop.f32.mrb[0].mxu0
    %v4199 = vadd.f32 %v4086, %v4198
    %v4200 = vpop.f32.mrb[0].mxu0
    %v4201 = vadd.f32 %v4088, %v4200
    %v4202 = vpop.f32.mrb[0].mxu0
    %v4203 = vadd.f32 %v4090, %v4202
    %4204 = vmatprep.mubr.bf16.mxu0 %v918
    %4205 = vmatmul.mubr.bf16.gmra.mrb[0].mxu0 %v917
    %v4206 = vpop.f32.mrb[0].mxu0
    %v4207 = vadd.f32 %v4094, %v4206
    %v4208 = vpop.f32.mrb[0].mxu0
    %v4209 = vadd.f32 %v4096, %v4208
    %v4210 = vpop.f32.mrb[0].mxu0
    %v4211 = vadd.f32 %v4098, %v4210
    %v4212 = vpop.f32.mrb[0].mxu0
    %v4213 = vadd.f32 %v4100, %v4212
    %4214 = vmatprep.mubr.bf16.mxu0 %v926
    %4215 = vmatmul.mubr.bf16.gmra.mrb[0].mxu0 %v925
    %v4216 = vpop.f32.mrb[0].mxu0
    %v4217 = vadd.f32 %v4104, %v4216
    %v4218 = vpop.f32.mrb[0].mxu0
    %v4219 = vadd.f32 %v4106, %v4218
    %v4220 = vpop.f32.mrb[0].mxu0
    %v4221 = vadd.f32 %v4108, %v4220
    %v4222 = vpop.f32.mrb[0].mxu0
    %v4223 = vadd.f32 %v4110, %v4222
    %4224 = vmatprep.mubr.bf16.mxu0 %v934
    %4225 = vmatmul.mubr.bf16.gmra.mrb[0].mxu0 %v933
    %v4226 = vpop.f32.mrb[0].mxu0
    %v4227 = vadd.f32 %v4114, %v4226
    %v4228 = vpop.f32.mrb[0].mxu0
    %v4229 = vadd.f32 %v4116, %v4228
    %v4230 = vpop.f32.mrb[0].mxu0
    %v4231 = vadd.f32 %v4118, %v4230
    %v4232 = vpop.f32.mrb[0].mxu0
    %v4233 = vadd.f32 %v4120, %v4232
    %4234 = vmatprep.mubr.bf16.mxu0 %v942
    %4235 = vmatmul.mubr.bf16.gmra.mrb[0].mxu0 %v941
    %v4236 = vpop.f32.mrb[0].mxu0
    %v4237 = vadd.f32 %v4124, %v4236
    %v4238 = vpop.f32.mrb[0].mxu0
    %v4239 = vadd.f32 %v4126, %v4238
    %v4240 = vpop.f32.mrb[0].mxu0
    %v4241 = vadd.f32 %v4128, %v4240
    %v4242 = vpop.f32.mrb[0].mxu0
    %v4243 = vadd.f32 %v4130, %v4242
    %4244 = vmatprep.mubr.bf16.mxu0 %v950
    %4245 = vmatmul.mubr.bf16.gmra.mrb[0].mxu0 %v949
    %v4246 = vpop.f32.mrb[0].mxu0
    %v4247 = vadd.f32 %v4134, %v4246
    %v4248 = vpop.f32.mrb[0].mxu0
    %v4249 = vadd.f32 %v4136, %v4248
    %v4250 = vpop.f32.mrb[0].mxu0
    %v4251 = vadd.f32 %v4138, %v4250
    %v4252 = vpop.f32.mrb[0].mxu0
    %v4253 = vadd.f32 %v4140, %v4252
    %4254 = vmatprep.mubr.bf16.mxu0 %v958
    %4255 = vmatmul.mubr.bf16.gmra.mrb[0].mxu0 %v957
    %v4256 = vpop.f32.mrb[0].mxu0
    %v4257 = vadd.f32 %v4144, %v4256
    %v4258 = vpop.f32.mrb[0].mxu0
    %v4259 = vadd.f32 %v4146, %v4258
    %v4260 = vpop.f32.mrb[0].mxu0
    %v4261 = vadd.f32 %v4148, %v4260
    %v4262 = vpop.f32.mrb[0].mxu0
    %v4263 = vadd.f32 %v4150, %v4262
    %4264 = vdwg.mxu0
    %4265 = vmatprep.subr.bf16.mxu0 %v2822
    %4266 = vmatpush1.bf16.msra.mxu0 %v2821
    %4267 = vmatprep.subr.bf16.mxu0 %v2830
    %4268 = vmatpush1.bf16.msra.mxu0 %v2829
    %4269 = vmatprep.subr.bf16.mxu0 %v2838
    %4270 = vmatpush1.bf16.msra.mxu0 %v2837
    %4271 = vmatprep.subr.bf16.mxu0 %v2846
    %4272 = vmatpush1.bf16.msra.mxu0 %v2845
    %4273 = vmatprep.subr.bf16.mxu0 %v2854
    %4274 = vmatpush1.bf16.msra.mxu0 %v2853
    %4275 = vmatprep.subr.bf16.mxu0 %v2862
    %4276 = vmatpush1.bf16.msra.mxu0 %v2861
    %4277 = vmatprep.subr.bf16.mxu0 %v2870
    %4278 = vmatpush1.bf16.msra.mxu0 %v2869
    %4279 = vmatprep.subr.bf16.mxu0 %v2878
    %4280 = vmatpush1.bf16.msra.mxu0 %v2877
    %4281 = vmatprep.subr.bf16.mxu0 %v2886
    %4282 = vmatpush1.bf16.msra.mxu0 %v2885
    %4283 = vmatprep.subr.bf16.mxu0 %v2894
    %4284 = vmatpush1.bf16.msra.mxu0 %v2893
    %4285 = vmatprep.subr.bf16.mxu0 %v2902
    %4286 = vmatpush1.bf16.msra.mxu0 %v2901
    %4287 = vmatprep.subr.bf16.mxu0 %v2910
    %4288 = vmatpush1.bf16.msra.mxu0 %v2909
    %4289 = vmatprep.subr.bf16.mxu0 %v2918
    %4290 = vmatpush1.bf16.msra.mxu0 %v2917
    %4291 = vmatprep.subr.bf16.mxu0 %v2926
    %4292 = vmatpush1.bf16.msra.mxu0 %v2925
    %4293 = vmatprep.subr.bf16.mxu0 %v2934
    %4294 = vmatpush1.bf16.msra.mxu0 %v2933
    %4295 = vmatprep.subr.bf16.mxu0 %v2942
    %4296 = vmatpush1.bf16.msra.mxu0 %v2941
    %4297 = vmatprep.mubr.bf16.mxu0 %v904
    %4298 = vmatmul.mubr.bf16.gmra.mrb[0].mxu0 %v903
    %v4299 = vpop.f32.mrb[0].mxu0
    %v4300 = vadd.f32 %v4187, %v4299
    %v4301 = vpop.f32.mrb[0].mxu0
    %v4302 = vadd.f32 %v4189, %v4301
    %v4303 = vpop.f32.mrb[0].mxu0
    %v4304 = vadd.f32 %v4191, %v4303
    %v4305 = vpop.f32.mrb[0].mxu0
    %v4306 = vadd.f32 %v4193, %v4305
    %4307 = vmatprep.mubr.bf16.mxu0 %v912
    %4308 = vmatmul.mubr.bf16.gmra.mrb[0].mxu0 %v911
    %v4309 = vpop.f32.mrb[0].mxu0
    %v4310 = vadd.f32 %v4197, %v4309
    %v4311 = vpop.f32.mrb[0].mxu0
    %v4312 = vadd.f32 %v4199, %v4311
    %v4313 = vpop.f32.mrb[0].mxu0
    %v4314 = vadd.f32 %v4201, %v4313
    %v4315 = vpop.f32.mrb[0].mxu0
    %v4316 = vadd.f32 %v4203, %v4315
    %4317 = vmatprep.mubr.bf16.mxu0 %v920
    %4318 = vmatmul.mubr.bf16.gmra.mrb[0].mxu0 %v919
    %v4319 = vpop.f32.mrb[0].mxu0
    %v4320 = vadd.f32 %v4207, %v4319
    %v4321 = vpop.f32.mrb[0].mxu0
    %v4322 = vadd.f32 %v4209, %v4321
    %v4323 = vpop.f32.mrb[0].mxu0
    %v4324 = vadd.f32 %v4211, %v4323
    %v4325 = vpop.f32.mrb[0].mxu0
    %v4326 = vadd.f32 %v4213, %v4325
    %4327 = vmatprep.mubr.bf16.mxu0 %v928
    %4328 = vmatmul.mubr.bf16.gmra.mrb[0].mxu0 %v927
    %v4329 = vpop.f32.mrb[0].mxu0
    %v4330 = vadd.f32 %v4217, %v4329
    %v4331 = vpop.f32.mrb[0].mxu0
    %v4332 = vadd.f32 %v4219, %v4331
    %v4333 = vpop.f32.mrb[0].mxu0
    %v4334 = vadd.f32 %v4221, %v4333
    %v4335 = vpop.f32.mrb[0].mxu0
    %v4336 = vadd.f32 %v4223, %v4335
    %4337 = vmatprep.mubr.bf16.mxu0 %v936
    %4338 = vmatmul.mubr.bf16.gmra.mrb[0].mxu0 %v935
    %v4339 = vpop.f32.mrb[0].mxu0
    %v4340 = vadd.f32 %v4227, %v4339
    %v4341 = vpop.f32.mrb[0].mxu0
    %v4342 = vadd.f32 %v4229, %v4341
    %v4343 = vpop.f32.mrb[0].mxu0
    %v4344 = vadd.f32 %v4231, %v4343
    %v4345 = vpop.f32.mrb[0].mxu0
    %v4346 = vadd.f32 %v4233, %v4345
    %4347 = vmatprep.mubr.bf16.mxu0 %v944
    %4348 = vmatmul.mubr.bf16.gmra.mrb[0].mxu0 %v943
    %v4349 = vpop.f32.mrb[0].mxu0
    %v4350 = vadd.f32 %v4237, %v4349
    %v4351 = vpop.f32.mrb[0].mxu0
    %v4352 = vadd.f32 %v4239, %v4351
    %v4353 = vpop.f32.mrb[0].mxu0
    %v4354 = vadd.f32 %v4241, %v4353
    %v4355 = vpop.f32.mrb[0].mxu0
    %v4356 = vadd.f32 %v4243, %v4355
    %4357 = vmatprep.mubr.bf16.mxu0 %v952
    %4358 = vmatmul.mubr.bf16.gmra.mrb[0].mxu0 %v951
    %v4359 = vpop.f32.mrb[0].mxu0
    %v4360 = vadd.f32 %v4247, %v4359
    %v4361 = vpop.f32.mrb[0].mxu0
    %v4362 = vadd.f32 %v4249, %v4361
    %v4363 = vpop.f32.mrb[0].mxu0
    %v4364 = vadd.f32 %v4251, %v4363
    %v4365 = vpop.f32.mrb[0].mxu0
    %v4366 = vadd.f32 %v4253, %v4365
    %4367 = vmatprep.mubr.bf16.mxu0 %v960
    %4368 = vmatmul.mubr.bf16.gmra.mrb[0].mxu0 %v959
    %v4369 = vpop.f32.mrb[0].mxu0
    %v4370 = vadd.f32 %v4257, %v4369
    %v4371 = vpop.f32.mrb[0].mxu0
    %v4372 = vadd.f32 %v4259, %v4371
    %v4373 = vpop.f32.mrb[0].mxu0
    %v4374 = vadd.f32 %v4261, %v4373
    %v4375 = vpop.f32.mrb[0].mxu0
    %v4376 = vadd.f32 %v4263, %v4375
    %4377 = vdwg.mxu0
    %4378 = vmatprep.subr.bf16.mxu0 %v2950
    %4379 = vmatpush1.bf16.msra.mxu0 %v2949
    %4380 = vmatprep.subr.bf16.mxu0 %v2958
    %4381 = vmatpush1.bf16.msra.mxu0 %v2957
    %4382 = vmatprep.subr.bf16.mxu0 %v2966
    %4383 = vmatpush1.bf16.msra.mxu0 %v2965
    %4384 = vmatprep.subr.bf16.mxu0 %v2974
    %4385 = vmatpush1.bf16.msra.mxu0 %v2973
    %4386 = vmatprep.subr.bf16.mxu0 %v2982
    %4387 = vmatpush1.bf16.msra.mxu0 %v2981
    %4388 = vmatprep.subr.bf16.mxu0 %v2990
    %4389 = vmatpush1.bf16.msra.mxu0 %v2989
    %4390 = vmatprep.subr.bf16.mxu0 %v2998
    %4391 = vmatpush1.bf16.msra.mxu0 %v2997
    %4392 = vmatprep.subr.bf16.mxu0 %v3006
    %4393 = vmatpush1.bf16.msra.mxu0 %v3005
    %4394 = vmatprep.subr.bf16.mxu0 %v3014
    %4395 = vmatpush1.bf16.msra.mxu0 %v3013
    %4396 = vmatprep.subr.bf16.mxu0 %v3022
    %4397 = vmatpush1.bf16.msra.mxu0 %v3021
    %4398 = vmatprep.subr.bf16.mxu0 %v3030
    %4399 = vmatpush1.bf16.msra.mxu0 %v3029
    %4400 = vmatprep.subr.bf16.mxu0 %v3038
    %4401 = vmatpush1.bf16.msra.mxu0 %v3037
    %4402 = vmatprep.subr.bf16.mxu0 %v3046
    %4403 = vmatpush1.bf16.msra.mxu0 %v3045
    %4404 = vmatprep.subr.bf16.mxu0 %v3054
    %4405 = vmatpush1.bf16.msra.mxu0 %v3053
    %4406 = vmatprep.subr.bf16.mxu0 %v3062
    %4407 = vmatpush1.bf16.msra.mxu0 %v3061
    %4408 = vmatprep.subr.bf16.mxu0 %v3070
    %4409 = vmatpush1.bf16.msra.mxu0 %v3069
    %4410 = vmatprep.mubr.bf16.mxu0 %v906
    %4411 = vmatmul.mubr.bf16.gmra.mrb[0].mxu0 %v905
    %v4412 = vpop.f32.mrb[0].mxu0
    %v4413 = vadd.f32 %v4300, %v4412
    %v4414 = vpop.f32.mrb[0].mxu0
    %v4415 = vadd.f32 %v4302, %v4414
    %v4416 = vpop.f32.mrb[0].mxu0
    %v4417 = vadd.f32 %v4304, %v4416
    %v4418 = vpop.f32.mrb[0].mxu0
    %v4419 = vadd.f32 %v4306, %v4418
    %4420 = vmatprep.mubr.bf16.mxu0 %v914
    %4421 = vmatmul.mubr.bf16.gmra.mrb[0].mxu0 %v913
    %v4422 = vpop.f32.mrb[0].mxu0
    %v4423 = vadd.f32 %v4310, %v4422
    %v4424 = vpop.f32.mrb[0].mxu0
    %v4425 = vadd.f32 %v4312, %v4424
    %v4426 = vpop.f32.mrb[0].mxu0
    %v4427 = vadd.f32 %v4314, %v4426
    %v4428 = vpop.f32.mrb[0].mxu0
    %v4429 = vadd.f32 %v4316, %v4428
    %4430 = vmatprep.mubr.bf16.mxu0 %v922
    %4431 = vmatmul.mubr.bf16.gmra.mrb[0].mxu0 %v921
    %v4432 = vpop.f32.mrb[0].mxu0
    %v4433 = vadd.f32 %v4320, %v4432
    %v4434 = vpop.f32.mrb[0].mxu0
    %v4435 = vadd.f32 %v4322, %v4434
    %v4436 = vpop.f32.mrb[0].mxu0
    %v4437 = vadd.f32 %v4324, %v4436
    %v4438 = vpop.f32.mrb[0].mxu0
    %v4439 = vadd.f32 %v4326, %v4438
    %4440 = vmatprep.mubr.bf16.mxu0 %v930
    %4441 = vmatmul.mubr.bf16.gmra.mrb[0].mxu0 %v929
    %v4442 = vpop.f32.mrb[0].mxu0
    %v4443 = vadd.f32 %v4330, %v4442
    %v4444 = vpop.f32.mrb[0].mxu0
    %v4445 = vadd.f32 %v4332, %v4444
    %v4446 = vpop.f32.mrb[0].mxu0
    %v4447 = vadd.f32 %v4334, %v4446
    %v4448 = vpop.f32.mrb[0].mxu0
    %v4449 = vadd.f32 %v4336, %v4448
    %4450 = vmatprep.mubr.bf16.mxu0 %v938
    %4451 = vmatmul.mubr.bf16.gmra.mrb[0].mxu0 %v937
    %v4452 = vpop.f32.mrb[0].mxu0
    %v4453 = vadd.f32 %v4340, %v4452
    %v4454 = vpop.f32.mrb[0].mxu0
    %v4455 = vadd.f32 %v4342, %v4454
    %v4456 = vpop.f32.mrb[0].mxu0
    %v4457 = vadd.f32 %v4344, %v4456
    %v4458 = vpop.f32.mrb[0].mxu0
    %v4459 = vadd.f32 %v4346, %v4458
    %4460 = vmatprep.mubr.bf16.mxu0 %v946
    %4461 = vmatmul.mubr.bf16.gmra.mrb[0].mxu0 %v945
    %v4462 = vpop.f32.mrb[0].mxu0
    %v4463 = vadd.f32 %v4350, %v4462
    %v4464 = vpop.f32.mrb[0].mxu0
    %v4465 = vadd.f32 %v4352, %v4464
    %v4466 = vpop.f32.mrb[0].mxu0
    %v4467 = vadd.f32 %v4354, %v4466
    %v4468 = vpop.f32.mrb[0].mxu0
    %v4469 = vadd.f32 %v4356, %v4468
    %4470 = vmatprep.mubr.bf16.mxu0 %v954
    %4471 = vmatmul.mubr.bf16.gmra.mrb[0].mxu0 %v953
    %v4472 = vpop.f32.mrb[0].mxu0
    %v4473 = vadd.f32 %v4360, %v4472
    %v4474 = vpop.f32.mrb[0].mxu0
    %v4475 = vadd.f32 %v4362, %v4474
    %v4476 = vpop.f32.mrb[0].mxu0
    %v4477 = vadd.f32 %v4364, %v4476
    %v4478 = vpop.f32.mrb[0].mxu0
    %v4479 = vadd.f32 %v4366, %v4478
    %4480 = vmatprep.mubr.bf16.mxu0 %v962
    %4481 = vmatmul.mubr.bf16.gmra.mrb[0].mxu0 %v961
    %v4482 = vpop.f32.mrb[0].mxu0
    %v4483 = vadd.f32 %v4370, %v4482
    %v4484 = vpop.f32.mrb[0].mxu0
    %v4485 = vadd.f32 %v4372, %v4484
    %v4486 = vpop.f32.mrb[0].mxu0
    %v4487 = vadd.f32 %v4374, %v4486
    %v4488 = vpop.f32.mrb[0].mxu0
    %v4489 = vadd.f32 %v4376, %v4488
    %4490 = vdwg.mxu0
    %4491 = vmatprep.subr.bf16.mxu0 %v2568
    %4492 = vmatpush1.bf16.msra.mxu0 %v2567
    %4493 = vmatprep.subr.bf16.mxu0 %v2576
    %4494 = vmatpush1.bf16.msra.mxu0 %v2575
    %4495 = vmatprep.subr.bf16.mxu0 %v2584
    %4496 = vmatpush1.bf16.msra.mxu0 %v2583
    %4497 = vmatprep.subr.bf16.mxu0 %v2592
    %4498 = vmatpush1.bf16.msra.mxu0 %v2591
    %4499 = vmatprep.subr.bf16.mxu0 %v2600
    %4500 = vmatpush1.bf16.msra.mxu0 %v2599
    %4501 = vmatprep.subr.bf16.mxu0 %v2608
    %4502 = vmatpush1.bf16.msra.mxu0 %v2607
    %4503 = vmatprep.subr.bf16.mxu0 %v2616
    %4504 = vmatpush1.bf16.msra.mxu0 %v2615
    %4505 = vmatprep.subr.bf16.mxu0 %v2624
    %4506 = vmatpush1.bf16.msra.mxu0 %v2623
    %4507 = vmatprep.subr.bf16.mxu0 %v2632
    %4508 = vmatpush1.bf16.msra.mxu0 %v2631
    %4509 = vmatprep.subr.bf16.mxu0 %v2640
    %4510 = vmatpush1.bf16.msra.mxu0 %v2639
    %4511 = vmatprep.subr.bf16.mxu0 %v2648
    %4512 = vmatpush1.bf16.msra.mxu0 %v2647
    %4513 = vmatprep.subr.bf16.mxu0 %v2656
    %4514 = vmatpush1.bf16.msra.mxu0 %v2655
    %4515 = vmatprep.subr.bf16.mxu0 %v2664
    %4516 = vmatpush1.bf16.msra.mxu0 %v2663
    %4517 = vmatprep.subr.bf16.mxu0 %v2672
    %4518 = vmatpush1.bf16.msra.mxu0 %v2671
    %4519 = vmatprep.subr.bf16.mxu0 %v2680
    %4520 = vmatpush1.bf16.msra.mxu0 %v2679
    %4521 = vmatprep.subr.bf16.mxu0 %v2688
    %4522 = vmatpush1.bf16.msra.mxu0 %v2687
    %4523 = vmatprep.mubr.bf16.mxu0 %v900
    %4524 = vmatmul.mubr.bf16.gmra.mrb[0].mxu0 %v899
    %v4525 = vpop.f32.mrb[0].mxu0
    %v4526 = vadd.f32 %v686, %v4525
    %v4527 = vpop.f32.mrb[0].mxu0
    %v4528 = vadd.f32 %v690, %v4527
    %v4529 = vpop.f32.mrb[0].mxu0
    %v4530 = vadd.f32 %v686, %v4529
    %v4531 = vpop.f32.mrb[0].mxu0
    %v4532 = vadd.f32 %v690, %v4531
    %4533 = vmatprep.mubr.bf16.mxu0 %v908
    %4534 = vmatmul.mubr.bf16.gmra.mrb[0].mxu0 %v907
    %v4535 = vpop.f32.mrb[0].mxu0
    %v4536 = vadd.f32 %v686, %v4535
    %v4537 = vpop.f32.mrb[0].mxu0
    %v4538 = vadd.f32 %v690, %v4537
    %v4539 = vpop.f32.mrb[0].mxu0
    %v4540 = vadd.f32 %v686, %v4539
    %v4541 = vpop.f32.mrb[0].mxu0
    %v4542 = vadd.f32 %v690, %v4541
    %4543 = vmatprep.mubr.bf16.mxu0 %v916
    %4544 = vmatmul.mubr.bf16.gmra.mrb[0].mxu0 %v915
    %v4545 = vpop.f32.mrb[0].mxu0
    %v4546 = vadd.f32 %v686, %v4545
    %v4547 = vpop.f32.mrb[0].mxu0
    %v4548 = vadd.f32 %v690, %v4547
    %v4549 = vpop.f32.mrb[0].mxu0
    %v4550 = vadd.f32 %v686, %v4549
    %v4551 = vpop.f32.mrb[0].mxu0
    %v4552 = vadd.f32 %v690, %v4551
    %4553 = vmatprep.mubr.bf16.mxu0 %v924
    %4554 = vmatmul.mubr.bf16.gmra.mrb[0].mxu0 %v923
    %v4555 = vpop.f32.mrb[0].mxu0
    %v4556 = vadd.f32 %v686, %v4555
    %v4557 = vpop.f32.mrb[0].mxu0
    %v4558 = vadd.f32 %v690, %v4557
    %v4559 = vpop.f32.mrb[0].mxu0
    %v4560 = vadd.f32 %v686, %v4559
    %v4561 = vpop.f32.mrb[0].mxu0
    %v4562 = vadd.f32 %v690, %v4561
    %4563 = vmatprep.mubr.bf16.mxu0 %v932
    %4564 = vmatmul.mubr.bf16.gmra.mrb[0].mxu0 %v931
    %v4565 = vpop.f32.mrb[0].mxu0
    %v4566 = vadd.f32 %v686, %v4565
    %v4567 = vpop.f32.mrb[0].mxu0
    %v4568 = vadd.f32 %v690, %v4567
    %v4569 = vpop.f32.mrb[0].mxu0
    %v4570 = vadd.f32 %v686, %v4569
    %v4571 = vpop.f32.mrb[0].mxu0
    %v4572 = vadd.f32 %v690, %v4571
    %4573 = vmatprep.mubr.bf16.mxu0 %v940
    %4574 = vmatmul.mubr.bf16.gmra.mrb[0].mxu0 %v939
    %v4575 = vpop.f32.mrb[0].mxu0
    %v4576 = vadd.f32 %v686, %v4575
    %v4577 = vpop.f32.mrb[0].mxu0
    %v4578 = vadd.f32 %v690, %v4577
    %v4579 = vpop.f32.mrb[0].mxu0
    %v4580 = vadd.f32 %v686, %v4579
    %v4581 = vpop.f32.mrb[0].mxu0
    %v4582 = vadd.f32 %v690, %v4581
    %4583 = vmatprep.mubr.bf16.mxu0 %v948
    %4584 = vmatmul.mubr.bf16.gmra.mrb[0].mxu0 %v947
    %v4585 = vpop.f32.mrb[0].mxu0
    %v4586 = vadd.f32 %v686, %v4585
    %v4587 = vpop.f32.mrb[0].mxu0
    %v4588 = vadd.f32 %v690, %v4587
    %v4589 = vpop.f32.mrb[0].mxu0
    %v4590 = vadd.f32 %v686, %v4589
    %v4591 = vpop.f32.mrb[0].mxu0
    %v4592 = vadd.f32 %v690, %v4591
    %4593 = vmatprep.mubr.bf16.mxu0 %v956
    %4594 = vmatmul.mubr.bf16.gmra.mrb[0].mxu0 %v955
    %v4595 = vpop.f32.mrb[0].mxu0
    %v4596 = vadd.f32 %v686, %v4595
    %v4597 = vpop.f32.mrb[0].mxu0
    %v4598 = vadd.f32 %v690, %v4597
    %v4599 = vpop.f32.mrb[0].mxu0
    %v4600 = vadd.f32 %v686, %v4599
    %v4601 = vpop.f32.mrb[0].mxu0
    %v4602 = vadd.f32 %v690, %v4601
    %4603 = vdwg.mxu0
    %4604 = vmatprep.subr.bf16.mxu0 %v2696
    %4605 = vmatpush1.bf16.msra.mxu0 %v2695
    %4606 = vmatprep.subr.bf16.mxu0 %v2704
    %4607 = vmatpush1.bf16.msra.mxu0 %v2703
    %4608 = vmatprep.subr.bf16.mxu0 %v2712
    %4609 = vmatpush1.bf16.msra.mxu0 %v2711
    %4610 = vmatprep.subr.bf16.mxu0 %v2720
    %4611 = vmatpush1.bf16.msra.mxu0 %v2719
    %4612 = vmatprep.subr.bf16.mxu0 %v2728
    %4613 = vmatpush1.bf16.msra.mxu0 %v2727
    %4614 = vmatprep.subr.bf16.mxu0 %v2736
    %4615 = vmatpush1.bf16.msra.mxu0 %v2735
    %4616 = vmatprep.subr.bf16.mxu0 %v2744
    %4617 = vmatpush1.bf16.msra.mxu0 %v2743
    %4618 = vmatprep.subr.bf16.mxu0 %v2752
    %4619 = vmatpush1.bf16.msra.mxu0 %v2751
    %4620 = vmatprep.subr.bf16.mxu0 %v2760
    %4621 = vmatpush1.bf16.msra.mxu0 %v2759
    %4622 = vmatprep.subr.bf16.mxu0 %v2768
    %4623 = vmatpush1.bf16.msra.mxu0 %v2767
    %4624 = vmatprep.subr.bf16.mxu0 %v2776
    %4625 = vmatpush1.bf16.msra.mxu0 %v2775
    %4626 = vmatprep.subr.bf16.mxu0 %v2784
    %4627 = vmatpush1.bf16.msra.mxu0 %v2783
    %4628 = vmatprep.subr.bf16.mxu0 %v2792
    %4629 = vmatpush1.bf16.msra.mxu0 %v2791
    %4630 = vmatprep.subr.bf16.mxu0 %v2800
    %4631 = vmatpush1.bf16.msra.mxu0 %v2799
    %4632 = vmatprep.subr.bf16.mxu0 %v2808
    %4633 = vmatpush1.bf16.msra.mxu0 %v2807
    %4634 = vmatprep.subr.bf16.mxu0 %v2816
    %4635 = vmatpush1.bf16.msra.mxu0 %v2815
    %4636 = vmatprep.mubr.bf16.mxu0 %v902
    %4637 = vmatmul.mubr.bf16.gmra.mrb[0].mxu0 %v901
    %v4638 = vpop.f32.mrb[0].mxu0
    %v4639 = vadd.f32 %v4526, %v4638
    %v4640 = vpop.f32.mrb[0].mxu0
    %v4641 = vadd.f32 %v4528, %v4640
    %v4642 = vpop.f32.mrb[0].mxu0
    %v4643 = vadd.f32 %v4530, %v4642
    %v4644 = vpop.f32.mrb[0].mxu0
    %v4645 = vadd.f32 %v4532, %v4644
    %4646 = vmatprep.mubr.bf16.mxu0 %v910
    %4647 = vmatmul.mubr.bf16.gmra.mrb[0].mxu0 %v909
    %v4648 = vpop.f32.mrb[0].mxu0
    %v4649 = vadd.f32 %v4536, %v4648
    %v4650 = vpop.f32.mrb[0].mxu0
    %v4651 = vadd.f32 %v4538, %v4650
    %v4652 = vpop.f32.mrb[0].mxu0
    %v4653 = vadd.f32 %v4540, %v4652
    %v4654 = vpop.f32.mrb[0].mxu0
    %v4655 = vadd.f32 %v4542, %v4654
    %4656 = vmatprep.mubr.bf16.mxu0 %v918
    %4657 = vmatmul.mubr.bf16.gmra.mrb[0].mxu0 %v917
    %v4658 = vpop.f32.mrb[0].mxu0
    %v4659 = vadd.f32 %v4546, %v4658
    %v4660 = vpop.f32.mrb[0].mxu0
    %v4661 = vadd.f32 %v4548, %v4660
    %v4662 = vpop.f32.mrb[0].mxu0
    %v4663 = vadd.f32 %v4550, %v4662
    %v4664 = vpop.f32.mrb[0].mxu0
    %v4665 = vadd.f32 %v4552, %v4664
    %4666 = vmatprep.mubr.bf16.mxu0 %v926
    %4667 = vmatmul.mubr.bf16.gmra.mrb[0].mxu0 %v925
    %v4668 = vpop.f32.mrb[0].mxu0
    %v4669 = vadd.f32 %v4556, %v4668
    %v4670 = vpop.f32.mrb[0].mxu0
    %v4671 = vadd.f32 %v4558, %v4670
    %v4672 = vpop.f32.mrb[0].mxu0
    %v4673 = vadd.f32 %v4560, %v4672
    %v4674 = vpop.f32.mrb[0].mxu0
    %v4675 = vadd.f32 %v4562, %v4674
    %4676 = vmatprep.mubr.bf16.mxu0 %v934
    %4677 = vmatmul.mubr.bf16.gmra.mrb[0].mxu0 %v933
    %v4678 = vpop.f32.mrb[0].mxu0
    %v4679 = vadd.f32 %v4566, %v4678
    %v4680 = vpop.f32.mrb[0].mxu0
    %v4681 = vadd.f32 %v4568, %v4680
    %v4682 = vpop.f32.mrb[0].mxu0
    %v4683 = vadd.f32 %v4570, %v4682
    %v4684 = vpop.f32.mrb[0].mxu0
    %v4685 = vadd.f32 %v4572, %v4684
    %4686 = vmatprep.mubr.bf16.mxu0 %v942
    %4687 = vmatmul.mubr.bf16.gmra.mrb[0].mxu0 %v941
    %v4688 = vpop.f32.mrb[0].mxu0
    %v4689 = vadd.f32 %v4576, %v4688
    %v4690 = vpop.f32.mrb[0].mxu0
    %v4691 = vadd.f32 %v4578, %v4690
    %v4692 = vpop.f32.mrb[0].mxu0
    %v4693 = vadd.f32 %v4580, %v4692
    %v4694 = vpop.f32.mrb[0].mxu0
    %v4695 = vadd.f32 %v4582, %v4694
    %4696 = vmatprep.mubr.bf16.mxu0 %v950
    %4697 = vmatmul.mubr.bf16.gmra.mrb[0].mxu0 %v949
    %v4698 = vpop.f32.mrb[0].mxu0
    %v4699 = vadd.f32 %v4586, %v4698
    %v4700 = vpop.f32.mrb[0].mxu0
    %v4701 = vadd.f32 %v4588, %v4700
    %v4702 = vpop.f32.mrb[0].mxu0
    %v4703 = vadd.f32 %v4590, %v4702
    %v4704 = vpop.f32.mrb[0].mxu0
    %v4705 = vadd.f32 %v4592, %v4704
    %4706 = vmatprep.mubr.bf16.mxu0 %v958
    %4707 = vmatmul.mubr.bf16.gmra.mrb[0].mxu0 %v957
    %v4708 = vpop.f32.mrb[0].mxu0
    %v4709 = vadd.f32 %v4596, %v4708
    %v4710 = vpop.f32.mrb[0].mxu0
    %v4711 = vadd.f32 %v4598, %v4710
    %v4712 = vpop.f32.mrb[0].mxu0
    %v4713 = vadd.f32 %v4600, %v4712
    %v4714 = vpop.f32.mrb[0].mxu0
    %v4715 = vadd.f32 %v4602, %v4714
    %4716 = vdwg.mxu0
    %4717 = vmatprep.subr.bf16.mxu0 %v2824
    %4718 = vmatpush1.bf16.msra.mxu0 %v2823
    %4719 = vmatprep.subr.bf16.mxu0 %v2832
    %4720 = vmatpush1.bf16.msra.mxu0 %v2831
    %4721 = vmatprep.subr.bf16.mxu0 %v2840
    %4722 = vmatpush1.bf16.msra.mxu0 %v2839
    %4723 = vmatprep.subr.bf16.mxu0 %v2848
    %4724 = vmatpush1.bf16.msra.mxu0 %v2847
    %4725 = vmatprep.subr.bf16.mxu0 %v2856
    %4726 = vmatpush1.bf16.msra.mxu0 %v2855
    %4727 = vmatprep.subr.bf16.mxu0 %v2864
    %4728 = vmatpush1.bf16.msra.mxu0 %v2863
    %4729 = vmatprep.subr.bf16.mxu0 %v2872
    %4730 = vmatpush1.bf16.msra.mxu0 %v2871
    %4731 = vmatprep.subr.bf16.mxu0 %v2880
    %4732 = vmatpush1.bf16.msra.mxu0 %v2879
    %4733 = vmatprep.subr.bf16.mxu0 %v2888
    %4734 = vmatpush1.bf16.msra.mxu0 %v2887
    %4735 = vmatprep.subr.bf16.mxu0 %v2896
    %4736 = vmatpush1.bf16.msra.mxu0 %v2895
    %4737 = vmatprep.subr.bf16.mxu0 %v2904
    %4738 = vmatpush1.bf16.msra.mxu0 %v2903
    %4739 = vmatprep.subr.bf16.mxu0 %v2912
    %4740 = vmatpush1.bf16.msra.mxu0 %v2911
    %4741 = vmatprep.subr.bf16.mxu0 %v2920
    %4742 = vmatpush1.bf16.msra.mxu0 %v2919
    %4743 = vmatprep.subr.bf16.mxu0 %v2928
    %4744 = vmatpush1.bf16.msra.mxu0 %v2927
    %4745 = vmatprep.subr.bf16.mxu0 %v2936
    %4746 = vmatpush1.bf16.msra.mxu0 %v2935
    %4747 = vmatprep.subr.bf16.mxu0 %v2944
    %4748 = vmatpush1.bf16.msra.mxu0 %v2943
    %4749 = vmatprep.mubr.bf16.mxu0 %v904
    %4750 = vmatmul.mubr.bf16.gmra.mrb[0].mxu0 %v903
    %v4751 = vpop.f32.mrb[0].mxu0
    %v4752 = vadd.f32 %v4639, %v4751
    %v4753 = vpop.f32.mrb[0].mxu0
    %v4754 = vadd.f32 %v4641, %v4753
    %v4755 = vpop.f32.mrb[0].mxu0
    %v4756 = vadd.f32 %v4643, %v4755
    %v4757 = vpop.f32.mrb[0].mxu0
    %v4758 = vadd.f32 %v4645, %v4757
    %4759 = vmatprep.mubr.bf16.mxu0 %v912
    %4760 = vmatmul.mubr.bf16.gmra.mrb[0].mxu0 %v911
    %v4761 = vpop.f32.mrb[0].mxu0
    %v4762 = vadd.f32 %v4649, %v4761
    %v4763 = vpop.f32.mrb[0].mxu0
    %v4764 = vadd.f32 %v4651, %v4763
    %v4765 = vpop.f32.mrb[0].mxu0
    %v4766 = vadd.f32 %v4653, %v4765
    %v4767 = vpop.f32.mrb[0].mxu0
    %v4768 = vadd.f32 %v4655, %v4767
    %4769 = vmatprep.mubr.bf16.mxu0 %v920
    %4770 = vmatmul.mubr.bf16.gmra.mrb[0].mxu0 %v919
    %v4771 = vpop.f32.mrb[0].mxu0
    %v4772 = vadd.f32 %v4659, %v4771
    %v4773 = vpop.f32.mrb[0].mxu0
    %v4774 = vadd.f32 %v4661, %v4773
    %v4775 = vpop.f32.mrb[0].mxu0
    %v4776 = vadd.f32 %v4663, %v4775
    %v4777 = vpop.f32.mrb[0].mxu0
    %v4778 = vadd.f32 %v4665, %v4777
    %4779 = vmatprep.mubr.bf16.mxu0 %v928
    %4780 = vmatmul.mubr.bf16.gmra.mrb[0].mxu0 %v927
    %v4781 = vpop.f32.mrb[0].mxu0
    %v4782 = vadd.f32 %v4669, %v4781
    %v4783 = vpop.f32.mrb[0].mxu0
    %v4784 = vadd.f32 %v4671, %v4783
    %v4785 = vpop.f32.mrb[0].mxu0
    %v4786 = vadd.f32 %v4673, %v4785
    %v4787 = vpop.f32.mrb[0].mxu0
    %v4788 = vadd.f32 %v4675, %v4787
    %4789 = vmatprep.mubr.bf16.mxu0 %v936
    %4790 = vmatmul.mubr.bf16.gmra.mrb[0].mxu0 %v935
    %v4791 = vpop.f32.mrb[0].mxu0
    %v4792 = vadd.f32 %v4679, %v4791
    %v4793 = vpop.f32.mrb[0].mxu0
    %v4794 = vadd.f32 %v4681, %v4793
    %v4795 = vpop.f32.mrb[0].mxu0
    %v4796 = vadd.f32 %v4683, %v4795
    %v4797 = vpop.f32.mrb[0].mxu0
    %v4798 = vadd.f32 %v4685, %v4797
    %4799 = vmatprep.mubr.bf16.mxu0 %v944
    %4800 = vmatmul.mubr.bf16.gmra.mrb[0].mxu0 %v943
    %v4801 = vpop.f32.mrb[0].mxu0
    %v4802 = vadd.f32 %v4689, %v4801
    %v4803 = vpop.f32.mrb[0].mxu0
    %v4804 = vadd.f32 %v4691, %v4803
    %v4805 = vpop.f32.mrb[0].mxu0
    %v4806 = vadd.f32 %v4693, %v4805
    %v4807 = vpop.f32.mrb[0].mxu0
    %v4808 = vadd.f32 %v4695, %v4807
    %4809 = vmatprep.mubr.bf16.mxu0 %v952
    %4810 = vmatmul.mubr.bf16.gmra.mrb[0].mxu0 %v951
    %v4811 = vpop.f32.mrb[0].mxu0
    %v4812 = vadd.f32 %v4699, %v4811
    %v4813 = vpop.f32.mrb[0].mxu0
    %v4814 = vadd.f32 %v4701, %v4813
    %v4815 = vpop.f32.mrb[0].mxu0
    %v4816 = vadd.f32 %v4703, %v4815
    %v4817 = vpop.f32.mrb[0].mxu0
    %v4818 = vadd.f32 %v4705, %v4817
    %4819 = vmatprep.mubr.bf16.mxu0 %v960
    %4820 = vmatmul.mubr.bf16.gmra.mrb[0].mxu0 %v959
    %v4821 = vpop.f32.mrb[0].mxu0
    %v4822 = vadd.f32 %v4709, %v4821
    %v4823 = vpop.f32.mrb[0].mxu0
    %v4824 = vadd.f32 %v4711, %v4823
    %v4825 = vpop.f32.mrb[0].mxu0
    %v4826 = vadd.f32 %v4713, %v4825
    %v4827 = vpop.f32.mrb[0].mxu0
    %v4828 = vadd.f32 %v4715, %v4827
    %4829 = vdwg.mxu0
    %4830 = vmatprep.subr.bf16.mxu0 %v2952
    %4831 = vmatpush1.bf16.msra.mxu0 %v2951
    %4832 = vmatprep.subr.bf16.mxu0 %v2960
    %4833 = vmatpush1.bf16.msra.mxu0 %v2959
    %4834 = vmatprep.subr.bf16.mxu0 %v2968
    %4835 = vmatpush1.bf16.msra.mxu0 %v2967
    %4836 = vmatprep.subr.bf16.mxu0 %v2976
    %4837 = vmatpush1.bf16.msra.mxu0 %v2975
    %4838 = vmatprep.subr.bf16.mxu0 %v2984
    %4839 = vmatpush1.bf16.msra.mxu0 %v2983
    %4840 = vmatprep.subr.bf16.mxu0 %v2992
    %4841 = vmatpush1.bf16.msra.mxu0 %v2991
    %4842 = vmatprep.subr.bf16.mxu0 %v3000
    %4843 = vmatpush1.bf16.msra.mxu0 %v2999
    %4844 = vmatprep.subr.bf16.mxu0 %v3008
    %4845 = vmatpush1.bf16.msra.mxu0 %v3007
    %4846 = vmatprep.subr.bf16.mxu0 %v3016
    %4847 = vmatpush1.bf16.msra.mxu0 %v3015
    %4848 = vmatprep.subr.bf16.mxu0 %v3024
    %4849 = vmatpush1.bf16.msra.mxu0 %v3023
    %4850 = vmatprep.subr.bf16.mxu0 %v3032
    %4851 = vmatpush1.bf16.msra.mxu0 %v3031
    %4852 = vmatprep.subr.bf16.mxu0 %v3040
    %4853 = vmatpush1.bf16.msra.mxu0 %v3039
    %4854 = vmatprep.subr.bf16.mxu0 %v3048
    %4855 = vmatpush1.bf16.msra.mxu0 %v3047
    %4856 = vmatprep.subr.bf16.mxu0 %v3056
    %4857 = vmatpush1.bf16.msra.mxu0 %v3055
    %4858 = vmatprep.subr.bf16.mxu0 %v3064
    %4859 = vmatpush1.bf16.msra.mxu0 %v3063
    %4860 = vmatprep.subr.bf16.mxu0 %v3072
    %4861 = vmatpush1.bf16.msra.mxu0 %v3071
    %4862 = vmatprep.mubr.bf16.mxu0 %v906
    %4863 = vmatmul.mubr.bf16.gmra.mrb[0].mxu0 %v905
    %v4864 = vpop.f32.mrb[0].mxu0
    %v4865 = vadd.f32 %v4752, %v4864
    %v4866 = vpop.f32.mrb[0].mxu0
    %v4867 = vadd.f32 %v4754, %v4866
    %v4868 = vpop.f32.mrb[0].mxu0
    %v4869 = vadd.f32 %v4756, %v4868
    %v4870 = vpop.f32.mrb[0].mxu0
    %v4871 = vadd.f32 %v4758, %v4870
    %4872 = vmatprep.mubr.bf16.mxu0 %v914
    %4873 = vmatmul.mubr.bf16.gmra.mrb[0].mxu0 %v913
    %v4874 = vpop.f32.mrb[0].mxu0
    %v4875 = vadd.f32 %v4762, %v4874
    %v4876 = vpop.f32.mrb[0].mxu0
    %v4877 = vadd.f32 %v4764, %v4876
    %v4878 = vpop.f32.mrb[0].mxu0
    %v4879 = vadd.f32 %v4766, %v4878
    %v4880 = vpop.f32.mrb[0].mxu0
    %v4881 = vadd.f32 %v4768, %v4880
    %4882 = vmatprep.mubr.bf16.mxu0 %v922
    %4883 = vmatmul.mubr.bf16.gmra.mrb[0].mxu0 %v921
    %v4884 = vpop.f32.mrb[0].mxu0
    %v4885 = vadd.f32 %v4772, %v4884
    %v4886 = vpop.f32.mrb[0].mxu0
    %v4887 = vadd.f32 %v4774, %v4886
    %v4888 = vpop.f32.mrb[0].mxu0
    %v4889 = vadd.f32 %v4776, %v4888
    %v4890 = vpop.f32.mrb[0].mxu0
    %v4891 = vadd.f32 %v4778, %v4890
    %4892 = vmatprep.mubr.bf16.mxu0 %v930
    %4893 = vmatmul.mubr.bf16.gmra.mrb[0].mxu0 %v929
    %v4894 = vpop.f32.mrb[0].mxu0
    %v4895 = vadd.f32 %v4782, %v4894
    %v4896 = vpop.f32.mrb[0].mxu0
    %v4897 = vadd.f32 %v4784, %v4896
    %v4898 = vpop.f32.mrb[0].mxu0
    %v4899 = vadd.f32 %v4786, %v4898
    %v4900 = vpop.f32.mrb[0].mxu0
    %v4901 = vadd.f32 %v4788, %v4900
    %4902 = vmatprep.mubr.bf16.mxu0 %v938
    %4903 = vmatmul.mubr.bf16.gmra.mrb[0].mxu0 %v937
    %v4904 = vpop.f32.mrb[0].mxu0
    %v4905 = vadd.f32 %v4792, %v4904
    %v4906 = vpop.f32.mrb[0].mxu0
    %v4907 = vadd.f32 %v4794, %v4906
    %v4908 = vpop.f32.mrb[0].mxu0
    %v4909 = vadd.f32 %v4796, %v4908
    %v4910 = vpop.f32.mrb[0].mxu0
    %v4911 = vadd.f32 %v4798, %v4910
    %4912 = vmatprep.mubr.bf16.mxu0 %v946
    %4913 = vmatmul.mubr.bf16.gmra.mrb[0].mxu0 %v945
    %v4914 = vpop.f32.mrb[0].mxu0
    %v4915 = vadd.f32 %v4802, %v4914
    %v4916 = vpop.f32.mrb[0].mxu0
    %v4917 = vadd.f32 %v4804, %v4916
    %v4918 = vpop.f32.mrb[0].mxu0
    %v4919 = vadd.f32 %v4806, %v4918
    %v4920 = vpop.f32.mrb[0].mxu0
    %v4921 = vadd.f32 %v4808, %v4920
    %4922 = vmatprep.mubr.bf16.mxu0 %v954
    %4923 = vmatmul.mubr.bf16.gmra.mrb[0].mxu0 %v953
    %v4924 = vpop.f32.mrb[0].mxu0
    %v4925 = vadd.f32 %v4812, %v4924
    %v4926 = vpop.f32.mrb[0].mxu0
    %v4927 = vadd.f32 %v4814, %v4926
    %v4928 = vpop.f32.mrb[0].mxu0
    %v4929 = vadd.f32 %v4816, %v4928
    %v4930 = vpop.f32.mrb[0].mxu0
    %v4931 = vadd.f32 %v4818, %v4930
    %4932 = vmatprep.mubr.bf16.mxu0 %v962
    %4933 = vmatmul.mubr.bf16.gmra.mrb[0].mxu0 %v961
    %v4934 = vpop.f32.mrb[0].mxu0
    %v4935 = vadd.f32 %v4822, %v4934
    %v4936 = vpop.f32.mrb[0].mxu0
    %v4937 = vadd.f32 %v4824, %v4936
    %v4938 = vpop.f32.mrb[0].mxu0
    %v4939 = vadd.f32 %v4826, %v4938
    %v4940 = vpop.f32.mrb[0].mxu0
    %v4941 = vadd.f32 %v4828, %v4940
    %4942 = vdwg.mxu0
    %4943 = vmatprep.subr.bf16.mxu0 %v2570
    %4944 = vmatpush1.bf16.msra.mxu0 %v2569
    %4945 = vmatprep.subr.bf16.mxu0 %v2578
    %4946 = vmatpush1.bf16.msra.mxu0 %v2577
    %4947 = vmatprep.subr.bf16.mxu0 %v2586
    %4948 = vmatpush1.bf16.msra.mxu0 %v2585
    %4949 = vmatprep.subr.bf16.mxu0 %v2594
    %4950 = vmatpush1.bf16.msra.mxu0 %v2593
    %4951 = vmatprep.subr.bf16.mxu0 %v2602
    %4952 = vmatpush1.bf16.msra.mxu0 %v2601
    %4953 = vmatprep.subr.bf16.mxu0 %v2610
    %4954 = vmatpush1.bf16.msra.mxu0 %v2609
    %4955 = vmatprep.subr.bf16.mxu0 %v2618
    %4956 = vmatpush1.bf16.msra.mxu0 %v2617
    %4957 = vmatprep.subr.bf16.mxu0 %v2626
    %4958 = vmatpush1.bf16.msra.mxu0 %v2625
    %4959 = vmatprep.subr.bf16.mxu0 %v2634
    %4960 = vmatpush1.bf16.msra.mxu0 %v2633
    %4961 = vmatprep.subr.bf16.mxu0 %v2642
    %4962 = vmatpush1.bf16.msra.mxu0 %v2641
    %4963 = vmatprep.subr.bf16.mxu0 %v2650
    %4964 = vmatpush1.bf16.msra.mxu0 %v2649
    %4965 = vmatprep.subr.bf16.mxu0 %v2658
    %4966 = vmatpush1.bf16.msra.mxu0 %v2657
    %4967 = vmatprep.subr.bf16.mxu0 %v2666
    %4968 = vmatpush1.bf16.msra.mxu0 %v2665
    %4969 = vmatprep.subr.bf16.mxu0 %v2674
    %4970 = vmatpush1.bf16.msra.mxu0 %v2673
    %4971 = vmatprep.subr.bf16.mxu0 %v2682
    %4972 = vmatpush1.bf16.msra.mxu0 %v2681
    %4973 = vmatprep.subr.bf16.mxu0 %v2690
    %4974 = vmatpush1.bf16.msra.mxu0 %v2689
    %4975 = vmatprep.mubr.bf16.mxu0 %v900
    %4976 = vmatmul.mubr.bf16.gmra.mrb[0].mxu0 %v899
    %v4977 = vpop.f32.mrb[0].mxu0
    %v4978 = vadd.f32 %v694, %v4977
    %v4979 = vpop.f32.mrb[0].mxu0
    %v4980 = vadd.f32 %v698, %v4979
    %v4981 = vpop.f32.mrb[0].mxu0
    %v4982 = vadd.f32 %v694, %v4981
    %v4983 = vpop.f32.mrb[0].mxu0
    %v4984 = vadd.f32 %v698, %v4983
    %4985 = vmatprep.mubr.bf16.mxu0 %v908
    %4986 = vmatmul.mubr.bf16.gmra.mrb[0].mxu0 %v907
    %v4987 = vpop.f32.mrb[0].mxu0
    %v4988 = vadd.f32 %v694, %v4987
    %v4989 = vpop.f32.mrb[0].mxu0
    %v4990 = vadd.f32 %v698, %v4989
    %v4991 = vpop.f32.mrb[0].mxu0
    %v4992 = vadd.f32 %v694, %v4991
    %v4993 = vpop.f32.mrb[0].mxu0
    %v4994 = vadd.f32 %v698, %v4993
    %4995 = vmatprep.mubr.bf16.mxu0 %v916
    %4996 = vmatmul.mubr.bf16.gmra.mrb[0].mxu0 %v915
    %v4997 = vpop.f32.mrb[0].mxu0
    %v4998 = vadd.f32 %v694, %v4997
    %v4999 = vpop.f32.mrb[0].mxu0
    %v5000 = vadd.f32 %v698, %v4999
    %v5001 = vpop.f32.mrb[0].mxu0
    %v5002 = vadd.f32 %v694, %v5001
    %v5003 = vpop.f32.mrb[0].mxu0
    %v5004 = vadd.f32 %v698, %v5003
    %5005 = vmatprep.mubr.bf16.mxu0 %v924
    %5006 = vmatmul.mubr.bf16.gmra.mrb[0].mxu0 %v923
    %v5007 = vpop.f32.mrb[0].mxu0
    %v5008 = vadd.f32 %v694, %v5007
    %v5009 = vpop.f32.mrb[0].mxu0
    %v5010 = vadd.f32 %v698, %v5009
    %v5011 = vpop.f32.mrb[0].mxu0
    %v5012 = vadd.f32 %v694, %v5011
    %v5013 = vpop.f32.mrb[0].mxu0
    %v5014 = vadd.f32 %v698, %v5013
    %5015 = vmatprep.mubr.bf16.mxu0 %v932
    %5016 = vmatmul.mubr.bf16.gmra.mrb[0].mxu0 %v931
    %v5017 = vpop.f32.mrb[0].mxu0
    %v5018 = vadd.f32 %v694, %v5017
    %v5019 = vpop.f32.mrb[0].mxu0
    %v5020 = vadd.f32 %v698, %v5019
    %v5021 = vpop.f32.mrb[0].mxu0
    %v5022 = vadd.f32 %v694, %v5021
    %v5023 = vpop.f32.mrb[0].mxu0
    %v5024 = vadd.f32 %v698, %v5023
    %5025 = vmatprep.mubr.bf16.mxu0 %v940
    %5026 = vmatmul.mubr.bf16.gmra.mrb[0].mxu0 %v939
    %v5027 = vpop.f32.mrb[0].mxu0
    %v5028 = vadd.f32 %v694, %v5027
    %v5029 = vpop.f32.mrb[0].mxu0
    %v5030 = vadd.f32 %v698, %v5029
    %v5031 = vpop.f32.mrb[0].mxu0
    %v5032 = vadd.f32 %v694, %v5031
    %v5033 = vpop.f32.mrb[0].mxu0
    %v5034 = vadd.f32 %v698, %v5033
    %5035 = vmatprep.mubr.bf16.mxu0 %v948
    %5036 = vmatmul.mubr.bf16.gmra.mrb[0].mxu0 %v947
    %v5037 = vpop.f32.mrb[0].mxu0
    %v5038 = vadd.f32 %v694, %v5037
    %v5039 = vpop.f32.mrb[0].mxu0
    %v5040 = vadd.f32 %v698, %v5039
    %v5041 = vpop.f32.mrb[0].mxu0
    %v5042 = vadd.f32 %v694, %v5041
    %v5043 = vpop.f32.mrb[0].mxu0
    %v5044 = vadd.f32 %v698, %v5043
    %5045 = vmatprep.mubr.bf16.mxu0 %v956
    %5046 = vmatmul.mubr.bf16.gmra.mrb[0].mxu0 %v955
    %v5047 = vpop.f32.mrb[0].mxu0
    %v5048 = vadd.f32 %v694, %v5047
    %v5049 = vpop.f32.mrb[0].mxu0
    %v5050 = vadd.f32 %v698, %v5049
    %v5051 = vpop.f32.mrb[0].mxu0
    %v5052 = vadd.f32 %v694, %v5051
    %v5053 = vpop.f32.mrb[0].mxu0
    %v5054 = vadd.f32 %v698, %v5053
    %5055 = vdwg.mxu0
    %5056 = vmatprep.subr.bf16.mxu0 %v2698
    %5057 = vmatpush1.bf16.msra.mxu0 %v2697
    %5058 = vmatprep.subr.bf16.mxu0 %v2706
    %5059 = vmatpush1.bf16.msra.mxu0 %v2705
    %5060 = vmatprep.subr.bf16.mxu0 %v2714
    %5061 = vmatpush1.bf16.msra.mxu0 %v2713
    %5062 = vmatprep.subr.bf16.mxu0 %v2722
    %5063 = vmatpush1.bf16.msra.mxu0 %v2721
    %5064 = vmatprep.subr.bf16.mxu0 %v2730
    %5065 = vmatpush1.bf16.msra.mxu0 %v2729
    %5066 = vmatprep.subr.bf16.mxu0 %v2738
    %5067 = vmatpush1.bf16.msra.mxu0 %v2737
    %5068 = vmatprep.subr.bf16.mxu0 %v2746
    %5069 = vmatpush1.bf16.msra.mxu0 %v2745
    %5070 = vmatprep.subr.bf16.mxu0 %v2754
    %5071 = vmatpush1.bf16.msra.mxu0 %v2753
    %5072 = vmatprep.subr.bf16.mxu0 %v2762
    %5073 = vmatpush1.bf16.msra.mxu0 %v2761
    %5074 = vmatprep.subr.bf16.mxu0 %v2770
    %5075 = vmatpush1.bf16.msra.mxu0 %v2769
    %5076 = vmatprep.subr.bf16.mxu0 %v2778
    %5077 = vmatpush1.bf16.msra.mxu0 %v2777
    %5078 = vmatprep.subr.bf16.mxu0 %v2786
    %5079 = vmatpush1.bf16.msra.mxu0 %v2785
    %5080 = vmatprep.subr.bf16.mxu0 %v2794
    %5081 = vmatpush1.bf16.msra.mxu0 %v2793
    %5082 = vmatprep.subr.bf16.mxu0 %v2802
    %5083 = vmatpush1.bf16.msra.mxu0 %v2801
    %5084 = vmatprep.subr.bf16.mxu0 %v2810
    %5085 = vmatpush1.bf16.msra.mxu0 %v2809
    %5086 = vmatprep.subr.bf16.mxu0 %v2818
    %5087 = vmatpush1.bf16.msra.mxu0 %v2817
    %5088 = vmatprep.mubr.bf16.mxu0 %v902
    %5089 = vmatmul.mubr.bf16.gmra.mrb[0].mxu0 %v901
    %v5090 = vpop.f32.mrb[0].mxu0
    %v5091 = vadd.f32 %v4978, %v5090
    %v5092 = vpop.f32.mrb[0].mxu0
    %v5093 = vadd.f32 %v4980, %v5092
    %v5094 = vpop.f32.mrb[0].mxu0
    %v5095 = vadd.f32 %v4982, %v5094
    %v5096 = vpop.f32.mrb[0].mxu0
    %v5097 = vadd.f32 %v4984, %v5096
    %5098 = vmatprep.mubr.bf16.mxu0 %v910
    %5099 = vmatmul.mubr.bf16.gmra.mrb[0].mxu0 %v909
    %v5100 = vpop.f32.mrb[0].mxu0
    %v5101 = vadd.f32 %v4988, %v5100
    %v5102 = vpop.f32.mrb[0].mxu0
    %v5103 = vadd.f32 %v4990, %v5102
    %v5104 = vpop.f32.mrb[0].mxu0
    %v5105 = vadd.f32 %v4992, %v5104
    %v5106 = vpop.f32.mrb[0].mxu0
    %v5107 = vadd.f32 %v4994, %v5106
    %5108 = vmatprep.mubr.bf16.mxu0 %v918
    %5109 = vmatmul.mubr.bf16.gmra.mrb[0].mxu0 %v917
    %v5110 = vpop.f32.mrb[0].mxu0
    %v5111 = vadd.f32 %v4998, %v5110
    %v5112 = vpop.f32.mrb[0].mxu0
    %v5113 = vadd.f32 %v5000, %v5112
    %v5114 = vpop.f32.mrb[0].mxu0
    %v5115 = vadd.f32 %v5002, %v5114
    %v5116 = vpop.f32.mrb[0].mxu0
    %v5117 = vadd.f32 %v5004, %v5116
    %5118 = vmatprep.mubr.bf16.mxu0 %v926
    %5119 = vmatmul.mubr.bf16.gmra.mrb[0].mxu0 %v925
    %v5120 = vpop.f32.mrb[0].mxu0
    %v5121 = vadd.f32 %v5008, %v5120
    %v5122 = vpop.f32.mrb[0].mxu0
    %v5123 = vadd.f32 %v5010, %v5122
    %v5124 = vpop.f32.mrb[0].mxu0
    %v5125 = vadd.f32 %v5012, %v5124
    %v5126 = vpop.f32.mrb[0].mxu0
    %v5127 = vadd.f32 %v5014, %v5126
    %5128 = vmatprep.mubr.bf16.mxu0 %v934
    %5129 = vmatmul.mubr.bf16.gmra.mrb[0].mxu0 %v933
    %v5130 = vpop.f32.mrb[0].mxu0
    %v5131 = vadd.f32 %v5018, %v5130
    %v5132 = vpop.f32.mrb[0].mxu0
    %v5133 = vadd.f32 %v5020, %v5132
    %v5134 = vpop.f32.mrb[0].mxu0
    %v5135 = vadd.f32 %v5022, %v5134
    %v5136 = vpop.f32.mrb[0].mxu0
    %v5137 = vadd.f32 %v5024, %v5136
    %5138 = vmatprep.mubr.bf16.mxu0 %v942
    %5139 = vmatmul.mubr.bf16.gmra.mrb[0].mxu0 %v941
    %v5140 = vpop.f32.mrb[0].mxu0
    %v5141 = vadd.f32 %v5028, %v5140
    %v5142 = vpop.f32.mrb[0].mxu0
    %v5143 = vadd.f32 %v5030, %v5142
    %v5144 = vpop.f32.mrb[0].mxu0
    %v5145 = vadd.f32 %v5032, %v5144
    %v5146 = vpop.f32.mrb[0].mxu0
    %v5147 = vadd.f32 %v5034, %v5146
    %5148 = vmatprep.mubr.bf16.mxu0 %v950
    %5149 = vmatmul.mubr.bf16.gmra.mrb[0].mxu0 %v949
    %v5150 = vpop.f32.mrb[0].mxu0
    %v5151 = vadd.f32 %v5038, %v5150
    %v5152 = vpop.f32.mrb[0].mxu0
    %v5153 = vadd.f32 %v5040, %v5152
    %v5154 = vpop.f32.mrb[0].mxu0
    %v5155 = vadd.f32 %v5042, %v5154
    %v5156 = vpop.f32.mrb[0].mxu0
    %v5157 = vadd.f32 %v5044, %v5156
    %5158 = vmatprep.mubr.bf16.mxu0 %v958
    %5159 = vmatmul.mubr.bf16.gmra.mrb[0].mxu0 %v957
    %v5160 = vpop.f32.mrb[0].mxu0
    %v5161 = vadd.f32 %v5048, %v5160
    %v5162 = vpop.f32.mrb[0].mxu0
    %v5163 = vadd.f32 %v5050, %v5162
    %v5164 = vpop.f32.mrb[0].mxu0
    %v5165 = vadd.f32 %v5052, %v5164
    %v5166 = vpop.f32.mrb[0].mxu0
    %v5167 = vadd.f32 %v5054, %v5166
    %5168 = vdwg.mxu0
    %5169 = vmatprep.subr.bf16.mxu0 %v2826
    %5170 = vmatpush1.bf16.msra.mxu0 %v2825
    %5171 = vmatprep.subr.bf16.mxu0 %v2834
    %5172 = vmatpush1.bf16.msra.mxu0 %v2833
    %5173 = vmatprep.subr.bf16.mxu0 %v2842
    %5174 = vmatpush1.bf16.msra.mxu0 %v2841
    %5175 = vmatprep.subr.bf16.mxu0 %v2850
    %5176 = vmatpush1.bf16.msra.mxu0 %v2849
    %5177 = vmatprep.subr.bf16.mxu0 %v2858
    %5178 = vmatpush1.bf16.msra.mxu0 %v2857
    %5179 = vmatprep.subr.bf16.mxu0 %v2866
    %5180 = vmatpush1.bf16.msra.mxu0 %v2865
    %5181 = vmatprep.subr.bf16.mxu0 %v2874
    %5182 = vmatpush1.bf16.msra.mxu0 %v2873
    %5183 = vmatprep.subr.bf16.mxu0 %v2882
    %5184 = vmatpush1.bf16.msra.mxu0 %v2881
    %5185 = vmatprep.subr.bf16.mxu0 %v2890
    %5186 = vmatpush1.bf16.msra.mxu0 %v2889
    %5187 = vmatprep.subr.bf16.mxu0 %v2898
    %5188 = vmatpush1.bf16.msra.mxu0 %v2897
    %5189 = vmatprep.subr.bf16.mxu0 %v2906
    %5190 = vmatpush1.bf16.msra.mxu0 %v2905
    %5191 = vmatprep.subr.bf16.mxu0 %v2914
    %5192 = vmatpush1.bf16.msra.mxu0 %v2913
    %5193 = vmatprep.subr.bf16.mxu0 %v2922
    %5194 = vmatpush1.bf16.msra.mxu0 %v2921
    %5195 = vmatprep.subr.bf16.mxu0 %v2930
    %5196 = vmatpush1.bf16.msra.mxu0 %v2929
    %5197 = vmatprep.subr.bf16.mxu0 %v2938
    %5198 = vmatpush1.bf16.msra.mxu0 %v2937
    %5199 = vmatprep.subr.bf16.mxu0 %v2946
    %5200 = vmatpush1.bf16.msra.mxu0 %v2945
    %5201 = vmatprep.mubr.bf16.mxu0 %v904
    %5202 = vmatmul.mubr.bf16.gmra.mrb[0].mxu0 %v903
    %v5203 = vpop.f32.mrb[0].mxu0
    %v5204 = vadd.f32 %v5091, %v5203
    %v5205 = vpop.f32.mrb[0].mxu0
    %v5206 = vadd.f32 %v5093, %v5205
    %v5207 = vpop.f32.mrb[0].mxu0
    %v5208 = vadd.f32 %v5095, %v5207
    %v5209 = vpop.f32.mrb[0].mxu0
    %v5210 = vadd.f32 %v5097, %v5209
    %5211 = vmatprep.mubr.bf16.mxu0 %v912
    %5212 = vmatmul.mubr.bf16.gmra.mrb[0].mxu0 %v911
    %v5213 = vpop.f32.mrb[0].mxu0
    %v5214 = vadd.f32 %v5101, %v5213
    %v5215 = vpop.f32.mrb[0].mxu0
    %v5216 = vadd.f32 %v5103, %v5215
    %v5217 = vpop.f32.mrb[0].mxu0
    %v5218 = vadd.f32 %v5105, %v5217
    %v5219 = vpop.f32.mrb[0].mxu0
    %v5220 = vadd.f32 %v5107, %v5219
    %5221 = vmatprep.mubr.bf16.mxu0 %v920
    %5222 = vmatmul.mubr.bf16.gmra.mrb[0].mxu0 %v919
    %v5223 = vpop.f32.mrb[0].mxu0
    %v5224 = vadd.f32 %v5111, %v5223
    %v5225 = vpop.f32.mrb[0].mxu0
    %v5226 = vadd.f32 %v5113, %v5225
    %v5227 = vpop.f32.mrb[0].mxu0
    %v5228 = vadd.f32 %v5115, %v5227
    %v5229 = vpop.f32.mrb[0].mxu0
    %v5230 = vadd.f32 %v5117, %v5229
    %5231 = vmatprep.mubr.bf16.mxu0 %v928
    %5232 = vmatmul.mubr.bf16.gmra.mrb[0].mxu0 %v927
    %v5233 = vpop.f32.mrb[0].mxu0
    %v5234 = vadd.f32 %v5121, %v5233
    %v5235 = vpop.f32.mrb[0].mxu0
    %v5236 = vadd.f32 %v5123, %v5235
    %v5237 = vpop.f32.mrb[0].mxu0
    %v5238 = vadd.f32 %v5125, %v5237
    %v5239 = vpop.f32.mrb[0].mxu0
    %v5240 = vadd.f32 %v5127, %v5239
    %5241 = vmatprep.mubr.bf16.mxu0 %v936
    %5242 = vmatmul.mubr.bf16.gmra.mrb[0].mxu0 %v935
    %v5243 = vpop.f32.mrb[0].mxu0
    %v5244 = vadd.f32 %v5131, %v5243
    %v5245 = vpop.f32.mrb[0].mxu0
    %v5246 = vadd.f32 %v5133, %v5245
    %v5247 = vpop.f32.mrb[0].mxu0
    %v5248 = vadd.f32 %v5135, %v5247
    %v5249 = vpop.f32.mrb[0].mxu0
    %v5250 = vadd.f32 %v5137, %v5249
    %5251 = vmatprep.mubr.bf16.mxu0 %v944
    %5252 = vmatmul.mubr.bf16.gmra.mrb[0].mxu0 %v943
    %v5253 = vpop.f32.mrb[0].mxu0
    %v5254 = vadd.f32 %v5141, %v5253
    %v5255 = vpop.f32.mrb[0].mxu0
    %v5256 = vadd.f32 %v5143, %v5255
    %v5257 = vpop.f32.mrb[0].mxu0
    %v5258 = vadd.f32 %v5145, %v5257
    %v5259 = vpop.f32.mrb[0].mxu0
    %v5260 = vadd.f32 %v5147, %v5259
    %5261 = vmatprep.mubr.bf16.mxu0 %v952
    %5262 = vmatmul.mubr.bf16.gmra.mrb[0].mxu0 %v951
    %v5263 = vpop.f32.mrb[0].mxu0
    %v5264 = vadd.f32 %v5151, %v5263
    %v5265 = vpop.f32.mrb[0].mxu0
    %v5266 = vadd.f32 %v5153, %v5265
    %v5267 = vpop.f32.mrb[0].mxu0
    %v5268 = vadd.f32 %v5155, %v5267
    %v5269 = vpop.f32.mrb[0].mxu0
    %v5270 = vadd.f32 %v5157, %v5269
    %5271 = vmatprep.mubr.bf16.mxu0 %v960
    %5272 = vmatmul.mubr.bf16.gmra.mrb[0].mxu0 %v959
    %v5273 = vpop.f32.mrb[0].mxu0
    %v5274 = vadd.f32 %v5161, %v5273
    %v5275 = vpop.f32.mrb[0].mxu0
    %v5276 = vadd.f32 %v5163, %v5275
    %v5277 = vpop.f32.mrb[0].mxu0
    %v5278 = vadd.f32 %v5165, %v5277
    %v5279 = vpop.f32.mrb[0].mxu0
    %v5280 = vadd.f32 %v5167, %v5279
    %5281 = vdwg.mxu0
    %5282 = vmatprep.subr.bf16.mxu0 %v2954
    %5283 = vmatpush1.bf16.msra.mxu0 %v2953
    %5284 = vmatprep.subr.bf16.mxu0 %v2962
    %5285 = vmatpush1.bf16.msra.mxu0 %v2961
    %5286 = vmatprep.subr.bf16.mxu0 %v2970
    %5287 = vmatpush1.bf16.msra.mxu0 %v2969
    %5288 = vmatprep.subr.bf16.mxu0 %v2978
    %5289 = vmatpush1.bf16.msra.mxu0 %v2977
    %5290 = vmatprep.subr.bf16.mxu0 %v2986
    %5291 = vmatpush1.bf16.msra.mxu0 %v2985
    %5292 = vmatprep.subr.bf16.mxu0 %v2994
    %5293 = vmatpush1.bf16.msra.mxu0 %v2993
    %5294 = vmatprep.subr.bf16.mxu0 %v3002
    %5295 = vmatpush1.bf16.msra.mxu0 %v3001
    %5296 = vmatprep.subr.bf16.mxu0 %v3010
    %5297 = vmatpush1.bf16.msra.mxu0 %v3009
    %5298 = vmatprep.subr.bf16.mxu0 %v3018
    %5299 = vmatpush1.bf16.msra.mxu0 %v3017
    %5300 = vmatprep.subr.bf16.mxu0 %v3026
    %5301 = vmatpush1.bf16.msra.mxu0 %v3025
    %5302 = vmatprep.subr.bf16.mxu0 %v3034
    %5303 = vmatpush1.bf16.msra.mxu0 %v3033
    %5304 = vmatprep.subr.bf16.mxu0 %v3042
    %5305 = vmatpush1.bf16.msra.mxu0 %v3041
    %5306 = vmatprep.subr.bf16.mxu0 %v3050
    %5307 = vmatpush1.bf16.msra.mxu0 %v3049
    %5308 = vmatprep.subr.bf16.mxu0 %v3058
    %5309 = vmatpush1.bf16.msra.mxu0 %v3057
    %5310 = vmatprep.subr.bf16.mxu0 %v3066
    %5311 = vmatpush1.bf16.msra.mxu0 %v3065
    %5312 = vmatprep.subr.bf16.mxu0 %v3074
    %5313 = vmatpush1.bf16.msra.mxu0 %v3073
    %5314 = vmatprep.mubr.bf16.mxu0 %v906
    %5315 = vmatmul.mubr.bf16.gmra.mrb[0].mxu0 %v905
    %v5316 = vpop.f32.mrb[0].mxu0
    %v5317 = vadd.f32 %v5204, %v5316
    %v5318 = vpop.f32.mrb[0].mxu0
    %v5319 = vadd.f32 %v5206, %v5318
    %v5320 = vpop.f32.mrb[0].mxu0
    %v5321 = vadd.f32 %v5208, %v5320
    %v5322 = vpop.f32.mrb[0].mxu0
    %v5323 = vadd.f32 %v5210, %v5322
    %5324 = vmatprep.mubr.bf16.mxu0 %v914
    %5325 = vmatmul.mubr.bf16.gmra.mrb[0].mxu0 %v913
    %v5326 = vpop.f32.mrb[0].mxu0
    %v5327 = vadd.f32 %v5214, %v5326
    %v5328 = vpop.f32.mrb[0].mxu0
    %v5329 = vadd.f32 %v5216, %v5328
    %v5330 = vpop.f32.mrb[0].mxu0
    %v5331 = vadd.f32 %v5218, %v5330
    %v5332 = vpop.f32.mrb[0].mxu0
    %v5333 = vadd.f32 %v5220, %v5332
    %5334 = vmatprep.mubr.bf16.mxu0 %v922
    %5335 = vmatmul.mubr.bf16.gmra.mrb[0].mxu0 %v921
    %v5336 = vpop.f32.mrb[0].mxu0
    %v5337 = vadd.f32 %v5224, %v5336
    %v5338 = vpop.f32.mrb[0].mxu0
    %v5339 = vadd.f32 %v5226, %v5338
    %v5340 = vpop.f32.mrb[0].mxu0
    %v5341 = vadd.f32 %v5228, %v5340
    %v5342 = vpop.f32.mrb[0].mxu0
    %v5343 = vadd.f32 %v5230, %v5342
    %5344 = vmatprep.mubr.bf16.mxu0 %v930
    %5345 = vmatmul.mubr.bf16.gmra.mrb[0].mxu0 %v929
    %v5346 = vpop.f32.mrb[0].mxu0
    %v5347 = vadd.f32 %v5234, %v5346
    %v5348 = vpop.f32.mrb[0].mxu0
    %v5349 = vadd.f32 %v5236, %v5348
    %v5350 = vpop.f32.mrb[0].mxu0
    %v5351 = vadd.f32 %v5238, %v5350
    %v5352 = vpop.f32.mrb[0].mxu0
    %v5353 = vadd.f32 %v5240, %v5352
    %5354 = vmatprep.mubr.bf16.mxu0 %v938
    %5355 = vmatmul.mubr.bf16.gmra.mrb[0].mxu0 %v937
    %v5356 = vpop.f32.mrb[0].mxu0
    %v5357 = vadd.f32 %v5244, %v5356
    %v5358 = vpop.f32.mrb[0].mxu0
    %v5359 = vadd.f32 %v5246, %v5358
    %v5360 = vpop.f32.mrb[0].mxu0
    %v5361 = vadd.f32 %v5248, %v5360
    %v5362 = vpop.f32.mrb[0].mxu0
    %v5363 = vadd.f32 %v5250, %v5362
    %5364 = vmatprep.mubr.bf16.mxu0 %v946
    %5365 = vmatmul.mubr.bf16.gmra.mrb[0].mxu0 %v945
    %v5366 = vpop.f32.mrb[0].mxu0
    %v5367 = vadd.f32 %v5254, %v5366
    %v5368 = vpop.f32.mrb[0].mxu0
    %v5369 = vadd.f32 %v5256, %v5368
    %v5370 = vpop.f32.mrb[0].mxu0
    %v5371 = vadd.f32 %v5258, %v5370
    %v5372 = vpop.f32.mrb[0].mxu0
    %v5373 = vadd.f32 %v5260, %v5372
    %5374 = vmatprep.mubr.bf16.mxu0 %v954
    %5375 = vmatmul.mubr.bf16.gmra.mrb[0].mxu0 %v953
    %v5376 = vpop.f32.mrb[0].mxu0
    %v5377 = vadd.f32 %v5264, %v5376
    %v5378 = vpop.f32.mrb[0].mxu0
    %v5379 = vadd.f32 %v5266, %v5378
    %v5380 = vpop.f32.mrb[0].mxu0
    %v5381 = vadd.f32 %v5268, %v5380
    %v5382 = vpop.f32.mrb[0].mxu0
    %v5383 = vadd.f32 %v5270, %v5382
    %5384 = vmatprep.mubr.bf16.mxu0 %v962
    %5385 = vmatmul.mubr.bf16.gmra.mrb[0].mxu0 %v961
    %v5386 = vpop.f32.mrb[0].mxu0
    %v5387 = vadd.f32 %v5274, %v5386
    %v5388 = vpop.f32.mrb[0].mxu0
    %v5389 = vadd.f32 %v5276, %v5388
    %v5390 = vpop.f32.mrb[0].mxu0
    %v5391 = vadd.f32 %v5278, %v5390
    %v5392 = vpop.f32.mrb[0].mxu0
    %v5393 = vadd.f32 %v5280, %v5392
    %5394 = vdwg.mxu0
    %v5395 = vmax.f32 %v3961, 0.0
    %v5396 = vmax.f32 %v3963, 0.0
    %v5397 = vmax.f32 %v4413, 0.0
    %v5398 = vmax.f32 %v4415, 0.0
    %v5399 = vmax.f32 %v4865, 0.0
    %v5400 = vmax.f32 %v4867, 0.0
    %v5401 = vmax.f32 %v5317, 0.0
    %v5402 = vmax.f32 %v5319, 0.0
    %v5403 = vmax.f32 %v3965, 0.0
    %v5404 = vmax.f32 %v3967, 0.0
    %v5405 = vmax.f32 %v4417, 0.0
    %v5406 = vmax.f32 %v4419, 0.0
    %v5407 = vmax.f32 %v4869, 0.0
    %v5408 = vmax.f32 %v4871, 0.0
    %v5409 = vmax.f32 %v5321, 0.0
    %v5410 = vmax.f32 %v5323, 0.0
    %v5411 = vmax.f32 %v3971, 0.0
    %v5412 = vmax.f32 %v3973, 0.0
    %v5413 = vmax.f32 %v4423, 0.0
    %v5414 = vmax.f32 %v4425, 0.0
    %v5415 = vmax.f32 %v4875, 0.0
    %v5416 = vmax.f32 %v4877, 0.0
    %v5417 = vmax.f32 %v5327, 0.0
    %v5418 = vmax.f32 %v5329, 0.0
    %v5419 = vmax.f32 %v3975, 0.0
    %v5420 = vmax.f32 %v3977, 0.0
    %v5421 = vmax.f32 %v4427, 0.0
    %v5422 = vmax.f32 %v4429, 0.0
    %v5423 = vmax.f32 %v4879, 0.0
    %v5424 = vmax.f32 %v4881, 0.0
    %v5425 = vmax.f32 %v5331, 0.0
    %v5426 = vmax.f32 %v5333, 0.0
    %v5427 = vmax.f32 %v3981, 0.0
    %v5428 = vmax.f32 %v3983, 0.0
    %v5429 = vmax.f32 %v4433, 0.0
    %v5430 = vmax.f32 %v4435, 0.0
    %v5431 = vmax.f32 %v4885, 0.0
    %v5432 = vmax.f32 %v4887, 0.0
    %v5433 = vmax.f32 %v5337, 0.0
    %v5434 = vmax.f32 %v5339, 0.0
    %v5435 = vmax.f32 %v3985, 0.0
    %v5436 = vmax.f32 %v3987, 0.0
    %v5437 = vmax.f32 %v4437, 0.0
    %v5438 = vmax.f32 %v4439, 0.0
    %v5439 = vmax.f32 %v4889, 0.0
    %v5440 = vmax.f32 %v4891, 0.0
    %v5441 = vmax.f32 %v5341, 0.0
    %v5442 = vmax.f32 %v5343, 0.0
    %v5443 = vmax.f32 %v3991, 0.0
    %v5444 = vmax.f32 %v3993, 0.0
    %v5445 = vmax.f32 %v4443, 0.0
    %v5446 = vmax.f32 %v4445, 0.0
    %v5447 = vmax.f32 %v4895, 0.0
    %v5448 = vmax.f32 %v4897, 0.0
    %v5449 = vmax.f32 %v5347, 0.0
    %v5450 = vmax.f32 %v5349, 0.0
    %v5451 = vmax.f32 %v3995, 0.0
    %v5452 = vmax.f32 %v3997, 0.0
    %v5453 = vmax.f32 %v4447, 0.0
    %v5454 = vmax.f32 %v4449, 0.0
    %v5455 = vmax.f32 %v4899, 0.0
    %v5456 = vmax.f32 %v4901, 0.0
    %v5457 = vmax.f32 %v5351, 0.0
    %v5458 = vmax.f32 %v5353, 0.0
    %v5459 = vmax.f32 %v4001, 0.0
    %v5460 = vmax.f32 %v4003, 0.0
    %v5461 = vmax.f32 %v4453, 0.0
    %v5462 = vmax.f32 %v4455, 0.0
    %v5463 = vmax.f32 %v4905, 0.0
    %v5464 = vmax.f32 %v4907, 0.0
    %v5465 = vmax.f32 %v5357, 0.0
    %v5466 = vmax.f32 %v5359, 0.0
    %v5467 = vmax.f32 %v4005, 0.0
    %v5468 = vmax.f32 %v4007, 0.0
    %v5469 = vmax.f32 %v4457, 0.0
    %v5470 = vmax.f32 %v4459, 0.0
    %v5471 = vmax.f32 %v4909, 0.0
    %v5472 = vmax.f32 %v4911, 0.0
    %v5473 = vmax.f32 %v5361, 0.0
    %v5474 = vmax.f32 %v5363, 0.0
    %v5475 = vmax.f32 %v4011, 0.0
    %v5476 = vmax.f32 %v4013, 0.0
    %v5477 = vmax.f32 %v4463, 0.0
    %v5478 = vmax.f32 %v4465, 0.0
    %v5479 = vmax.f32 %v4915, 0.0
    %v5480 = vmax.f32 %v4917, 0.0
    %v5481 = vmax.f32 %v5367, 0.0
    %v5482 = vmax.f32 %v5369, 0.0
    %v5483 = vmax.f32 %v4015, 0.0
    %v5484 = vmax.f32 %v4017, 0.0
    %v5485 = vmax.f32 %v4467, 0.0
    %v5486 = vmax.f32 %v4469, 0.0
    %v5487 = vmax.f32 %v4919, 0.0
    %v5488 = vmax.f32 %v4921, 0.0
    %v5489 = vmax.f32 %v5371, 0.0
    %v5490 = vmax.f32 %v5373, 0.0
    %v5491 = vmax.f32 %v4021, 0.0
    %v5492 = vmax.f32 %v4023, 0.0
    %v5493 = vmax.f32 %v4473, 0.0
    %v5494 = vmax.f32 %v4475, 0.0
    %v5495 = vmax.f32 %v4925, 0.0
    %v5496 = vmax.f32 %v4927, 0.0
    %v5497 = vmax.f32 %v5377, 0.0
    %v5498 = vmax.f32 %v5379, 0.0
    %v5499 = vmax.f32 %v4025, 0.0
    %v5500 = vmax.f32 %v4027, 0.0
    %v5501 = vmax.f32 %v4477, 0.0
    %v5502 = vmax.f32 %v4479, 0.0
    %v5503 = vmax.f32 %v4929, 0.0
    %v5504 = vmax.f32 %v4931, 0.0
    %v5505 = vmax.f32 %v5381, 0.0
    %v5506 = vmax.f32 %v5383, 0.0
    %v5507 = vmax.f32 %v4031, 0.0
    %v5508 = vmax.f32 %v4033, 0.0
    %v5509 = vmax.f32 %v4483, 0.0
    %v5510 = vmax.f32 %v4485, 0.0
    %v5511 = vmax.f32 %v4935, 0.0
    %v5512 = vmax.f32 %v4937, 0.0
    %v5513 = vmax.f32 %v5387, 0.0
    %v5514 = vmax.f32 %v5389, 0.0
    %v5515 = vmax.f32 %v4035, 0.0
    %v5516 = vmax.f32 %v4037, 0.0
    %v5517 = vmax.f32 %v4487, 0.0
    %v5518 = vmax.f32 %v4489, 0.0
    %v5519 = vmax.f32 %v4939, 0.0
    %v5520 = vmax.f32 %v4941, 0.0
    %v5521 = vmax.f32 %v5391, 0.0
    %v5522 = vmax.f32 %v5393, 0.0
    %v5523 = vpack.c.bf16 %v5403, %v5395
    %v5524 = vpack.c.bf16 %v5404, %v5396
    %v5525 = vpack.c.bf16 %v5405, %v5397
    %v5526 = vpack.c.bf16 %v5406, %v5398
    %v5527 = vpack.c.bf16 %v5407, %v5399
    %v5528 = vpack.c.bf16 %v5408, %v5400
    %v5529 = vpack.c.bf16 %v5409, %v5401
    %v5530 = vpack.c.bf16 %v5410, %v5402
    %v5531 = vpack.c.bf16 %v5419, %v5411
    %v5532 = vpack.c.bf16 %v5420, %v5412
    %v5533 = vpack.c.bf16 %v5421, %v5413
    %v5534 = vpack.c.bf16 %v5422, %v5414
    %v5535 = vpack.c.bf16 %v5423, %v5415
    %v5536 = vpack.c.bf16 %v5424, %v5416
    %v5537 = vpack.c.bf16 %v5425, %v5417
    %v5538 = vpack.c.bf16 %v5426, %v5418
    %v5539 = vpack.c.bf16 %v5435, %v5427
    %v5540 = vpack.c.bf16 %v5436, %v5428
    %v5541 = vpack.c.bf16 %v5437, %v5429
    %v5542 = vpack.c.bf16 %v5438, %v5430
    %v5543 = vpack.c.bf16 %v5439, %v5431
    %v5544 = vpack.c.bf16 %v5440, %v5432
    %v5545 = vpack.c.bf16 %v5441, %v5433
    %v5546 = vpack.c.bf16 %v5442, %v5434
    %v5547 = vpack.c.bf16 %v5451, %v5443
    %v5548 = vpack.c.bf16 %v5452, %v5444
    %v5549 = vpack.c.bf16 %v5453, %v5445
    %v5550 = vpack.c.bf16 %v5454, %v5446
    %v5551 = vpack.c.bf16 %v5455, %v5447
    %v5552 = vpack.c.bf16 %v5456, %v5448
    %v5553 = vpack.c.bf16 %v5457, %v5449
    %v5554 = vpack.c.bf16 %v5458, %v5450
    %v5555 = vpack.c.bf16 %v5467, %v5459
    %v5556 = vpack.c.bf16 %v5468, %v5460
    %v5557 = vpack.c.bf16 %v5469, %v5461
    %v5558 = vpack.c.bf16 %v5470, %v5462
    %v5559 = vpack.c.bf16 %v5471, %v5463
    %v5560 = vpack.c.bf16 %v5472, %v5464
    %v5561 = vpack.c.bf16 %v5473, %v5465
    %v5562 = vpack.c.bf16 %v5474, %v5466
    %v5563 = vpack.c.bf16 %v5483, %v5475
    %v5564 = vpack.c.bf16 %v5484, %v5476
    %v5565 = vpack.c.bf16 %v5485, %v5477
    %v5566 = vpack.c.bf16 %v5486, %v5478
    %v5567 = vpack.c.bf16 %v5487, %v5479
    %v5568 = vpack.c.bf16 %v5488, %v5480
    %v5569 = vpack.c.bf16 %v5489, %v5481
    %v5570 = vpack.c.bf16 %v5490, %v5482
    %v5571 = vpack.c.bf16 %v5499, %v5491
    %v5572 = vpack.c.bf16 %v5500, %v5492
    %v5573 = vpack.c.bf16 %v5501, %v5493
    %v5574 = vpack.c.bf16 %v5502, %v5494
    %v5575 = vpack.c.bf16 %v5503, %v5495
    %v5576 = vpack.c.bf16 %v5504, %v5496
    %v5577 = vpack.c.bf16 %v5505, %v5497
    %v5578 = vpack.c.bf16 %v5506, %v5498
    %v5579 = vpack.c.bf16 %v5515, %v5507
    %v5580 = vpack.c.bf16 %v5516, %v5508
    %v5581 = vpack.c.bf16 %v5517, %v5509
    %v5582 = vpack.c.bf16 %v5518, %v5510
    %v5583 = vpack.c.bf16 %v5519, %v5511
    %v5584 = vpack.c.bf16 %v5520, %v5512
    %v5585 = vpack.c.bf16 %v5521, %v5513
    %v5586 = vpack.c.bf16 %v5522, %v5514
    %v5651 = vunpack.c.l.b16 %v5523
    %v5652 = vunpack.c.l.b16 %v5524
    %v5653 = vunpack.c.l.b16 %v5525
    %v5654 = vunpack.c.l.b16 %v5526
    %v5655 = vunpack.c.l.b16 %v5527
    %v5656 = vunpack.c.l.b16 %v5528
    %v5657 = vunpack.c.l.b16 %v5529
    %v5658 = vunpack.c.l.b16 %v5530
    %v5659 = vunpack.c.h.b16 %v5523
    %v5660 = vunpack.c.h.b16 %v5524
    %v5661 = vunpack.c.h.b16 %v5525
    %v5662 = vunpack.c.h.b16 %v5526
    %v5663 = vunpack.c.h.b16 %v5527
    %v5664 = vunpack.c.h.b16 %v5528
    %v5665 = vunpack.c.h.b16 %v5529
    %v5666 = vunpack.c.h.b16 %v5530
    %v5667 = vunpack.c.l.b16 %v5531
    %v5668 = vunpack.c.l.b16 %v5532
    %v5669 = vunpack.c.l.b16 %v5533
    %v5670 = vunpack.c.l.b16 %v5534
    %v5671 = vunpack.c.l.b16 %v5535
    %v5672 = vunpack.c.l.b16 %v5536
    %v5673 = vunpack.c.l.b16 %v5537
    %v5674 = vunpack.c.l.b16 %v5538
    %v5675 = vunpack.c.h.b16 %v5531
    %v5676 = vunpack.c.h.b16 %v5532
    %v5677 = vunpack.c.h.b16 %v5533
    %v5678 = vunpack.c.h.b16 %v5534
    %v5679 = vunpack.c.h.b16 %v5535
    %v5680 = vunpack.c.h.b16 %v5536
    %v5681 = vunpack.c.h.b16 %v5537
    %v5682 = vunpack.c.h.b16 %v5538
    %v5683 = vunpack.c.l.b16 %v5539
    %v5684 = vunpack.c.l.b16 %v5540
    %v5685 = vunpack.c.l.b16 %v5541
    %v5686 = vunpack.c.l.b16 %v5542
    %v5687 = vunpack.c.l.b16 %v5543
    %v5688 = vunpack.c.l.b16 %v5544
    %v5689 = vunpack.c.l.b16 %v5545
    %v5690 = vunpack.c.l.b16 %v5546
    %v5691 = vunpack.c.h.b16 %v5539
    %v5692 = vunpack.c.h.b16 %v5540
    %v5693 = vunpack.c.h.b16 %v5541
    %v5694 = vunpack.c.h.b16 %v5542
    %v5695 = vunpack.c.h.b16 %v5543
    %v5696 = vunpack.c.h.b16 %v5544
    %v5697 = vunpack.c.h.b16 %v5545
    %v5698 = vunpack.c.h.b16 %v5546
    %v5699 = vunpack.c.l.b16 %v5547
    %v5700 = vunpack.c.l.b16 %v5548
    %v5701 = vunpack.c.l.b16 %v5549
    %v5702 = vunpack.c.l.b16 %v5550
    %v5703 = vunpack.c.l.b16 %v5551
    %v5704 = vunpack.c.l.b16 %v5552
    %v5705 = vunpack.c.l.b16 %v5553
    %v5706 = vunpack.c.l.b16 %v5554
    %v5707 = vunpack.c.h.b16 %v5547
    %v5708 = vunpack.c.h.b16 %v5548
    %v5709 = vunpack.c.h.b16 %v5549
    %v5710 = vunpack.c.h.b16 %v5550
    %v5711 = vunpack.c.h.b16 %v5551
    %v5712 = vunpack.c.h.b16 %v5552
    %v5713 = vunpack.c.h.b16 %v5553
    %v5714 = vunpack.c.h.b16 %v5554
    %v5715 = vunpack.c.l.b16 %v5555
    %v5716 = vunpack.c.l.b16 %v5556
    %v5717 = vunpack.c.l.b16 %v5557
    %v5718 = vunpack.c.l.b16 %v5558
    %v5719 = vunpack.c.l.b16 %v5559
    %v5720 = vunpack.c.l.b16 %v5560
    %v5721 = vunpack.c.l.b16 %v5561
    %v5722 = vunpack.c.l.b16 %v5562
    %v5723 = vunpack.c.h.b16 %v5555
    %v5724 = vunpack.c.h.b16 %v5556
    %v5725 = vunpack.c.h.b16 %v5557
    %v5726 = vunpack.c.h.b16 %v5558
    %v5727 = vunpack.c.h.b16 %v5559
    %v5728 = vunpack.c.h.b16 %v5560
    %v5729 = vunpack.c.h.b16 %v5561
    %v5730 = vunpack.c.h.b16 %v5562
    %v5731 = vunpack.c.l.b16 %v5563
    %v5732 = vunpack.c.l.b16 %v5564
    %v5733 = vunpack.c.l.b16 %v5565
    %v5734 = vunpack.c.l.b16 %v5566
    %v5735 = vunpack.c.l.b16 %v5567
    %v5736 = vunpack.c.l.b16 %v5568
    %v5737 = vunpack.c.l.b16 %v5569
    %v5738 = vunpack.c.l.b16 %v5570
    %v5739 = vunpack.c.h.b16 %v5563
    %v5740 = vunpack.c.h.b16 %v5564
    %v5741 = vunpack.c.h.b16 %v5565
    %v5742 = vunpack.c.h.b16 %v5566
    %v5743 = vunpack.c.h.b16 %v5567
    %v5744 = vunpack.c.h.b16 %v5568
    %v5745 = vunpack.c.h.b16 %v5569
    %v5746 = vunpack.c.h.b16 %v5570
    %v5747 = vunpack.c.l.b16 %v5571
    %v5748 = vunpack.c.l.b16 %v5572
    %v5749 = vunpack.c.l.b16 %v5573
    %v5750 = vunpack.c.l.b16 %v5574
    %v5751 = vunpack.c.l.b16 %v5575
    %v5752 = vunpack.c.l.b16 %v5576
    %v5753 = vunpack.c.l.b16 %v5577
    %v5754 = vunpack.c.l.b16 %v5578
    %v5755 = vunpack.c.h.b16 %v5571
    %v5756 = vunpack.c.h.b16 %v5572
    %v5757 = vunpack.c.h.b16 %v5573
    %v5758 = vunpack.c.h.b16 %v5574
    %v5759 = vunpack.c.h.b16 %v5575
    %v5760 = vunpack.c.h.b16 %v5576
    %v5761 = vunpack.c.h.b16 %v5577
    %v5762 = vunpack.c.h.b16 %v5578
    %v5763 = vunpack.c.l.b16 %v5579
    %v5764 = vunpack.c.l.b16 %v5580
    %v5765 = vunpack.c.l.b16 %v5581
    %v5766 = vunpack.c.l.b16 %v5582
    %v5767 = vunpack.c.l.b16 %v5583
    %v5768 = vunpack.c.l.b16 %v5584
    %v5769 = vunpack.c.l.b16 %v5585
    %v5770 = vunpack.c.l.b16 %v5586
    %v5771 = vunpack.c.h.b16 %v5579
    %v5772 = vunpack.c.h.b16 %v5580
    %v5773 = vunpack.c.h.b16 %v5581
    %v5774 = vunpack.c.h.b16 %v5582
    %v5775 = vunpack.c.h.b16 %v5583
    %v5776 = vunpack.c.h.b16 %v5584
    %v5777 = vunpack.c.h.b16 %v5585
    %v5778 = vunpack.c.h.b16 %v5586
    %v5779 = vpack.c.b16 %v5652, %v5651
    %v5780 = vpack.c.b16 %v5654, %v5653
    %v5781 = vpack.c.b16 %v5656, %v5655
    %v5782 = vpack.c.b16 %v5658, %v5657
    %v5783 = vpack.c.b16 %v5660, %v5659
    %v5784 = vpack.c.b16 %v5662, %v5661
    %v5785 = vpack.c.b16 %v5664, %v5663
    %v5786 = vpack.c.b16 %v5666, %v5665
    %v5787 = vpack.c.b16 %v5668, %v5667
    %v5788 = vpack.c.b16 %v5670, %v5669
    %v5789 = vpack.c.b16 %v5672, %v5671
    %v5790 = vpack.c.b16 %v5674, %v5673
    %v5791 = vpack.c.b16 %v5676, %v5675
    %v5792 = vpack.c.b16 %v5678, %v5677
    %v5793 = vpack.c.b16 %v5680, %v5679
    %v5794 = vpack.c.b16 %v5682, %v5681
    %v5795 = vpack.c.b16 %v5684, %v5683
    %v5796 = vpack.c.b16 %v5686, %v5685
    %v5797 = vpack.c.b16 %v5688, %v5687
    %v5798 = vpack.c.b16 %v5690, %v5689
    %v5799 = vpack.c.b16 %v5692, %v5691
    %v5800 = vpack.c.b16 %v5694, %v5693
    %v5801 = vpack.c.b16 %v5696, %v5695
    %v5802 = vpack.c.b16 %v5698, %v5697
    %v5803 = vpack.c.b16 %v5700, %v5699
    %v5804 = vpack.c.b16 %v5702, %v5701
    %v5805 = vpack.c.b16 %v5704, %v5703
    %v5806 = vpack.c.b16 %v5706, %v5705
    %v5807 = vpack.c.b16 %v5708, %v5707
    %v5808 = vpack.c.b16 %v5710, %v5709
    %v5809 = vpack.c.b16 %v5712, %v5711
    %v5810 = vpack.c.b16 %v5714, %v5713
    %v5811 = vpack.c.b16 %v5716, %v5715
    %v5812 = vpack.c.b16 %v5718, %v5717
    %v5813 = vpack.c.b16 %v5720, %v5719
    %v5814 = vpack.c.b16 %v5722, %v5721
    %v5815 = vpack.c.b16 %v5724, %v5723
    %v5816 = vpack.c.b16 %v5726, %v5725
    %v5817 = vpack.c.b16 %v5728, %v5727
    %v5818 = vpack.c.b16 %v5730, %v5729
    %v5819 = vpack.c.b16 %v5732, %v5731
    %v5820 = vpack.c.b16 %v5734, %v5733
    %v5821 = vpack.c.b16 %v5736, %v5735
    %v5822 = vpack.c.b16 %v5738, %v5737
    %v5823 = vpack.c.b16 %v5740, %v5739
    %v5824 = vpack.c.b16 %v5742, %v5741
    %v5825 = vpack.c.b16 %v5744, %v5743
    %v5826 = vpack.c.b16 %v5746, %v5745
    %v5827 = vpack.c.b16 %v5748, %v5747
    %v5828 = vpack.c.b16 %v5750, %v5749
    %v5829 = vpack.c.b16 %v5752, %v5751
    %v5830 = vpack.c.b16 %v5754, %v5753
    %v5831 = vpack.c.b16 %v5756, %v5755
    %v5832 = vpack.c.b16 %v5758, %v5757
    %v5833 = vpack.c.b16 %v5760, %v5759
    %v5834 = vpack.c.b16 %v5762, %v5761
    %v5835 = vpack.c.b16 %v5764, %v5763
    %v5836 = vpack.c.b16 %v5766, %v5765
    %v5837 = vpack.c.b16 %v5768, %v5767
    %v5838 = vpack.c.b16 %v5770, %v5769
    %v5839 = vpack.c.b16 %v5772, %v5771
    %v5840 = vpack.c.b16 %v5774, %v5773
    %v5841 = vpack.c.b16 %v5776, %v5775
    %v5842 = vpack.c.b16 %v5778, %v5777
    %5907 = vst [vmem:[#allocation11] sm:$0xff] %v5779
    %5908 = vst [vmem:[#allocation11 + $0x8] sm:$0xff] %v5780
    %5909 = vst [vmem:[#allocation11 + $0x10] sm:$0xff] %v5781
    %5910 = vst [vmem:[#allocation11 + $0x18] sm:$0xff] %v5782
    %5911 = vst [vmem:[#allocation11 + $0x20] sm:$0xff] %v5783
    %5912 = vst [vmem:[#allocation11 + $0x28] sm:$0xff] %v5784
    %5913 = vst [vmem:[#allocation11 + $0x30] sm:$0xff] %v5785
    %5914 = vst [vmem:[#allocation11 + $0x38] sm:$0xff] %v5786
    %5915 = vst [vmem:[#allocation11 + $0x40] sm:$0xff] %v5787
    %5916 = vst [vmem:[#allocation11 + $0x48] sm:$0xff] %v5788
    %5917 = vst [vmem:[#allocation11 + $0x50] sm:$0xff] %v5789
    %5918 = vst [vmem:[#allocation11 + $0x58] sm:$0xff] %v5790
    %5919 = vst [vmem:[#allocation11 + $0x60] sm:$0xff] %v5791
    %5920 = vst [vmem:[#allocation11 + $0x68] sm:$0xff] %v5792
    %5921 = vst [vmem:[#allocation11 + $0x70] sm:$0xff] %v5793
    %5922 = vst [vmem:[#allocation11 + $0x78] sm:$0xff] %v5794
    %5923 = vst [vmem:[#allocation11 + $0x80] sm:$0xff] %v5795
    %5924 = vst [vmem:[#allocation11 + $0x88] sm:$0xff] %v5796
    %5925 = vst [vmem:[#allocation11 + $0x90] sm:$0xff] %v5797
    %5926 = vst [vmem:[#allocation11 + $0x98] sm:$0xff] %v5798
    %5927 = vst [vmem:[#allocation11 + $0xa0] sm:$0xff] %v5799
    %5928 = vst [vmem:[#allocation11 + $0xa8] sm:$0xff] %v5800
    %5929 = vst [vmem:[#allocation11 + $0xb0] sm:$0xff] %v5801
    %5930 = vst [vmem:[#allocation11 + $0xb8] sm:$0xff] %v5802
    %5931 = vst [vmem:[#allocation11 + $0xc0] sm:$0xff] %v5803
    %5932 = vst [vmem:[#allocation11 + $0xc8] sm:$0xff] %v5804
    %5933 = vst [vmem:[#allocation11 + $0xd0] sm:$0xff] %v5805
    %5934 = vst [vmem:[#allocation11 + $0xd8] sm:$0xff] %v5806
    %5935 = vst [vmem:[#allocation11 + $0xe0] sm:$0xff] %v5807
    %5936 = vst [vmem:[#allocation11 + $0xe8] sm:$0xff] %v5808
    %5937 = vst [vmem:[#allocation11 + $0xf0] sm:$0xff] %v5809
    %5938 = vst [vmem:[#allocation11 + $0xf8] sm:$0xff] %v5810
    %5939 = vst [vmem:[#allocation11 + $0x100] sm:$0xff] %v5811
    %5940 = vst [vmem:[#allocation11 + $0x108] sm:$0xff] %v5812
    %5941 = vst [vmem:[#allocation11 + $0x110] sm:$0xff] %v5813
    %5942 = vst [vmem:[#allocation11 + $0x118] sm:$0xff] %v5814
    %5943 = vst [vmem:[#allocation11 + $0x120] sm:$0xff] %v5815
    %5944 = vst [vmem:[#allocation11 + $0x128] sm:$0xff] %v5816
    %5945 = vst [vmem:[#allocation11 + $0x130] sm:$0xff] %v5817
    %5946 = vst [vmem:[#allocation11 + $0x138] sm:$0xff] %v5818
    %5947 = vst [vmem:[#allocation11 + $0x140] sm:$0xff] %v5819
    %5948 = vst [vmem:[#allocation11 + $0x148] sm:$0xff] %v5820
    %5949 = vst [vmem:[#allocation11 + $0x150] sm:$0xff] %v5821
    %5950 = vst [vmem:[#allocation11 + $0x158] sm:$0xff] %v5822
    %5951 = vst [vmem:[#allocation11 + $0x160] sm:$0xff] %v5823
    %5952 = vst [vmem:[#allocation11 + $0x168] sm:$0xff] %v5824
    %5953 = vst [vmem:[#allocation11 + $0x170] sm:$0xff] %v5825
    %5954 = vst [vmem:[#allocation11 + $0x178] sm:$0xff] %v5826
    %5955 = vst [vmem:[#allocation11 + $0x180] sm:$0xff] %v5827
    %5956 = vst [vmem:[#allocation11 + $0x188] sm:$0xff] %v5828
    %5957 = vst [vmem:[#allocation11 + $0x190] sm:$0xff] %v5829
    %5958 = vst [vmem:[#allocation11 + $0x198] sm:$0xff] %v5830
    %5959 = vst [vmem:[#allocation11 + $0x1a0] sm:$0xff] %v5831
    %5960 = vst [vmem:[#allocation11 + $0x1a8] sm:$0xff] %v5832
    %5961 = vst [vmem:[#allocation11 + $0x1b0] sm:$0xff] %v5833
    %5962 = vst [vmem:[#allocation11 + $0x1b8] sm:$0xff] %v5834
    %5963 = vst [vmem:[#allocation11 + $0x1c0] sm:$0xff] %v5835
    %5964 = vst [vmem:[#allocation11 + $0x1c8] sm:$0xff] %v5836
    %5965 = vst [vmem:[#allocation11 + $0x1d0] sm:$0xff] %v5837
    %5966 = vst [vmem:[#allocation11 + $0x1d8] sm:$0xff] %v5838
    %5967 = vst [vmem:[#allocation11 + $0x1e0] sm:$0xff] %v5839
    %5968 = vst [vmem:[#allocation11 + $0x1e8] sm:$0xff] %v5840
    %5969 = vst [vmem:[#allocation11 + $0x1f0] sm:$0xff] %v5841
    %5970 = vst [vmem:[#allocation11 + $0x1f8] sm:$0xff] %v5842
    %v5971 = vld [vmem:[#allocation8] sm:$0xf]
    %v5972 = vld [vmem:[#allocation8 + $0x4] sm:$0xf]
    %v5973 = vld [vmem:[#allocation8 + $0x8] sm:$0xf]
    %v5974 = vld [vmem:[#allocation8 + $0xc] sm:$0xf]
    %v5975 = vld [vmem:[#allocation8 + $0x10] sm:$0xf]
    %v5976 = vld [vmem:[#allocation8 + $0x14] sm:$0xf]
    %v5977 = vld [vmem:[#allocation8 + $0x18] sm:$0xf]
    %v5978 = vld [vmem:[#allocation8 + $0x1c] sm:$0xf]
    %v5979 = vld [vmem:[#allocation8 + $0x20] sm:$0xf]
    %v5980 = vld [vmem:[#allocation8 + $0x24] sm:$0xf]
    %v5981 = vld [vmem:[#allocation8 + $0x28] sm:$0xf]
    %v5982 = vld [vmem:[#allocation8 + $0x2c] sm:$0xf]
    %v5983 = vld [vmem:[#allocation8 + $0x30] sm:$0xf]
    %v5984 = vld [vmem:[#allocation8 + $0x34] sm:$0xf]
    %v5985 = vld [vmem:[#allocation8 + $0x38] sm:$0xf]
    %v5986 = vld [vmem:[#allocation8 + $0x3c] sm:$0xf]
    %v5987 = vld [vmem:[#allocation8 + $0x40] sm:$0xf]
    %v5988 = vld [vmem:[#allocation8 + $0x44] sm:$0xf]
    %v5989 = vld [vmem:[#allocation8 + $0x48] sm:$0xf]
    %v5990 = vld [vmem:[#allocation8 + $0x4c] sm:$0xf]
    %v5991 = vld [vmem:[#allocation8 + $0x50] sm:$0xf]
    %v5992 = vld [vmem:[#allocation8 + $0x54] sm:$0xf]
    %v5993 = vld [vmem:[#allocation8 + $0x58] sm:$0xf]
    %v5994 = vld [vmem:[#allocation8 + $0x5c] sm:$0xf]
    %v5995 = vld [vmem:[#allocation8 + $0x60] sm:$0xf]
    %v5996 = vld [vmem:[#allocation8 + $0x64] sm:$0xf]
    %v5997 = vld [vmem:[#allocation8 + $0x68] sm:$0xf]
    %v5998 = vld [vmem:[#allocation8 + $0x6c] sm:$0xf]
    %v5999 = vld [vmem:[#allocation8 + $0x70] sm:$0xf]
    %v6000 = vld [vmem:[#allocation8 + $0x74] sm:$0xf]
    %v6001 = vld [vmem:[#allocation8 + $0x78] sm:$0xf]
    %v6002 = vld [vmem:[#allocation8 + $0x7c] sm:$0xf]
    %v6003 = vld [vmem:[#allocation8 + $0x80] sm:$0xf]
    %v6004 = vld [vmem:[#allocation8 + $0x84] sm:$0xf]
    %v6005 = vld [vmem:[#allocation8 + $0x88] sm:$0xf]
    %v6006 = vld [vmem:[#allocation8 + $0x8c] sm:$0xf]
    %v6007 = vld [vmem:[#allocation8 + $0x90] sm:$0xf]
    %v6008 = vld [vmem:[#allocation8 + $0x94] sm:$0xf]
    %v6009 = vld [vmem:[#allocation8 + $0x98] sm:$0xf]
    %v6010 = vld [vmem:[#allocation8 + $0x9c] sm:$0xf]
    %v6011 = vld [vmem:[#allocation8 + $0xa0] sm:$0xf]
    %v6012 = vld [vmem:[#allocation8 + $0xa4] sm:$0xf]
    %v6013 = vld [vmem:[#allocation8 + $0xa8] sm:$0xf]
    %v6014 = vld [vmem:[#allocation8 + $0xac] sm:$0xf]
    %v6015 = vld [vmem:[#allocation8 + $0xb0] sm:$0xf]
    %v6016 = vld [vmem:[#allocation8 + $0xb4] sm:$0xf]
    %v6017 = vld [vmem:[#allocation8 + $0xb8] sm:$0xf]
    %v6018 = vld [vmem:[#allocation8 + $0xbc] sm:$0xf]
    %v6019 = vld [vmem:[#allocation8 + $0xc0] sm:$0xf]
    %v6020 = vld [vmem:[#allocation8 + $0xc4] sm:$0xf]
    %v6021 = vld [vmem:[#allocation8 + $0xc8] sm:$0xf]
    %v6022 = vld [vmem:[#allocation8 + $0xcc] sm:$0xf]
    %v6023 = vld [vmem:[#allocation8 + $0xd0] sm:$0xf]
    %v6024 = vld [vmem:[#allocation8 + $0xd4] sm:$0xf]
    %v6025 = vld [vmem:[#allocation8 + $0xd8] sm:$0xf]
    %v6026 = vld [vmem:[#allocation8 + $0xdc] sm:$0xf]
    %v6027 = vld [vmem:[#allocation8 + $0xe0] sm:$0xf]
    %v6028 = vld [vmem:[#allocation8 + $0xe4] sm:$0xf]
    %v6029 = vld [vmem:[#allocation8 + $0xe8] sm:$0xf]
    %v6030 = vld [vmem:[#allocation8 + $0xec] sm:$0xf]
    %v6031 = vld [vmem:[#allocation8 + $0xf0] sm:$0xf]
    %v6032 = vld [vmem:[#allocation8 + $0xf4] sm:$0xf]
    %v6033 = vld [vmem:[#allocation8 + $0xf8] sm:$0xf]
    %v6034 = vld [vmem:[#allocation8 + $0xfc] sm:$0xf]
    %v6035 = vld [vmem:[#allocation8 + $0x100] sm:$0xf]
    %v6036 = vld [vmem:[#allocation8 + $0x104] sm:$0xf]
    %v6037 = vld [vmem:[#allocation8 + $0x108] sm:$0xf]
    %v6038 = vld [vmem:[#allocation8 + $0x10c] sm:$0xf]
    %v6039 = vld [vmem:[#allocation8 + $0x110] sm:$0xf]
    %v6040 = vld [vmem:[#allocation8 + $0x114] sm:$0xf]
    %v6041 = vld [vmem:[#allocation8 + $0x118] sm:$0xf]
    %v6042 = vld [vmem:[#allocation8 + $0x11c] sm:$0xf]
    %v6043 = vld [vmem:[#allocation8 + $0x120] sm:$0xf]
    %v6044 = vld [vmem:[#allocation8 + $0x124] sm:$0xf]
    %v6045 = vld [vmem:[#allocation8 + $0x128] sm:$0xf]
    %v6046 = vld [vmem:[#allocation8 + $0x12c] sm:$0xf]
    %v6047 = vld [vmem:[#allocation8 + $0x130] sm:$0xf]
    %v6048 = vld [vmem:[#allocation8 + $0x134] sm:$0xf]
    %v6049 = vld [vmem:[#allocation8 + $0x138] sm:$0xf]
    %v6050 = vld [vmem:[#allocation8 + $0x13c] sm:$0xf]
    %v6051 = vld [vmem:[#allocation8 + $0x140] sm:$0xf]
    %v6052 = vld [vmem:[#allocation8 + $0x144] sm:$0xf]
    %v6053 = vld [vmem:[#allocation8 + $0x148] sm:$0xf]
    %v6054 = vld [vmem:[#allocation8 + $0x14c] sm:$0xf]
    %v6055 = vld [vmem:[#allocation8 + $0x150] sm:$0xf]
    %v6056 = vld [vmem:[#allocation8 + $0x154] sm:$0xf]
    %v6057 = vld [vmem:[#allocation8 + $0x158] sm:$0xf]
    %v6058 = vld [vmem:[#allocation8 + $0x15c] sm:$0xf]
    %v6059 = vld [vmem:[#allocation8 + $0x160] sm:$0xf]
    %v6060 = vld [vmem:[#allocation8 + $0x164] sm:$0xf]
    %v6061 = vld [vmem:[#allocation8 + $0x168] sm:$0xf]
    %v6062 = vld [vmem:[#allocation8 + $0x16c] sm:$0xf]
    %v6063 = vld [vmem:[#allocation8 + $0x170] sm:$0xf]
    %v6064 = vld [vmem:[#allocation8 + $0x174] sm:$0xf]
    %v6065 = vld [vmem:[#allocation8 + $0x178] sm:$0xf]
    %v6066 = vld [vmem:[#allocation8 + $0x17c] sm:$0xf]
    %v6067 = vld [vmem:[#allocation8 + $0x180] sm:$0xf]
    %v6068 = vld [vmem:[#allocation8 + $0x184] sm:$0xf]
    %v6069 = vld [vmem:[#allocation8 + $0x188] sm:$0xf]
    %v6070 = vld [vmem:[#allocation8 + $0x18c] sm:$0xf]
    %v6071 = vld [vmem:[#allocation8 + $0x190] sm:$0xf]
    %v6072 = vld [vmem:[#allocation8 + $0x194] sm:$0xf]
    %v6073 = vld [vmem:[#allocation8 + $0x198] sm:$0xf]
    %v6074 = vld [vmem:[#allocation8 + $0x19c] sm:$0xf]
    %v6075 = vld [vmem:[#allocation8 + $0x1a0] sm:$0xf]
    %v6076 = vld [vmem:[#allocation8 + $0x1a4] sm:$0xf]
    %v6077 = vld [vmem:[#allocation8 + $0x1a8] sm:$0xf]
    %v6078 = vld [vmem:[#allocation8 + $0x1ac] sm:$0xf]
    %v6079 = vld [vmem:[#allocation8 + $0x1b0] sm:$0xf]
    %v6080 = vld [vmem:[#allocation8 + $0x1b4] sm:$0xf]
    %v6081 = vld [vmem:[#allocation8 + $0x1b8] sm:$0xf]
    %v6082 = vld [vmem:[#allocation8 + $0x1bc] sm:$0xf]
    %v6083 = vld [vmem:[#allocation8 + $0x1c0] sm:$0xf]
    %v6084 = vld [vmem:[#allocation8 + $0x1c4] sm:$0xf]
    %v6085 = vld [vmem:[#allocation8 + $0x1c8] sm:$0xf]
    %v6086 = vld [vmem:[#allocation8 + $0x1cc] sm:$0xf]
    %v6087 = vld [vmem:[#allocation8 + $0x1d0] sm:$0xf]
    %v6088 = vld [vmem:[#allocation8 + $0x1d4] sm:$0xf]
    %v6089 = vld [vmem:[#allocation8 + $0x1d8] sm:$0xf]
    %v6090 = vld [vmem:[#allocation8 + $0x1dc] sm:$0xf]
    %v6091 = vld [vmem:[#allocation8 + $0x1e0] sm:$0xf]
    %v6092 = vld [vmem:[#allocation8 + $0x1e4] sm:$0xf]
    %v6093 = vld [vmem:[#allocation8 + $0x1e8] sm:$0xf]
    %v6094 = vld [vmem:[#allocation8 + $0x1ec] sm:$0xf]
    %v6095 = vld [vmem:[#allocation8 + $0x1f0] sm:$0xf]
    %v6096 = vld [vmem:[#allocation8 + $0x1f4] sm:$0xf]
    %v6097 = vld [vmem:[#allocation8 + $0x1f8] sm:$0xf]
    %v6098 = vld [vmem:[#allocation8 + $0x1fc] sm:$0xf]
    %v6099 = vld [vmem:[#allocation10] sm:$0x1]
    %v6101 = vlaneseq
    %v6102 = vshrl.u32 %v6101, 7
    %v6103 = vsub.s32 0, %v6102
    %v6104 = vrot.slane %v6099, %v6103
    %v6234 = vunpack.c.l.b16 %v5971
    %v6235 = vunpack.c.l.b16 %v5972
    %v6236 = vunpack.c.l.b16 %v5973
    %v6237 = vunpack.c.l.b16 %v5974
    %v6238 = vunpack.c.l.b16 %v5975
    %v6239 = vunpack.c.l.b16 %v5976
    %v6240 = vunpack.c.l.b16 %v5977
    %v6241 = vunpack.c.l.b16 %v5978
    %v6242 = vunpack.c.l.b16 %v5979
    %v6243 = vunpack.c.l.b16 %v5980
    %v6244 = vunpack.c.l.b16 %v5981
    %v6245 = vunpack.c.l.b16 %v5982
    %v6246 = vunpack.c.l.b16 %v5983
    %v6247 = vunpack.c.l.b16 %v5984
    %v6248 = vunpack.c.l.b16 %v5985
    %v6249 = vunpack.c.l.b16 %v5986
    %v6250 = vunpack.c.l.b16 %v5987
    %v6251 = vunpack.c.l.b16 %v5988
    %v6252 = vunpack.c.l.b16 %v5989
    %v6253 = vunpack.c.l.b16 %v5990
    %v6254 = vunpack.c.l.b16 %v5991
    %v6255 = vunpack.c.l.b16 %v5992
    %v6256 = vunpack.c.l.b16 %v5993
    %v6257 = vunpack.c.l.b16 %v5994
    %v6258 = vunpack.c.l.b16 %v5995
    %v6259 = vunpack.c.l.b16 %v5996
    %v6260 = vunpack.c.l.b16 %v5997
    %v6261 = vunpack.c.l.b16 %v5998
    %v6262 = vunpack.c.l.b16 %v5999
    %v6263 = vunpack.c.l.b16 %v6000
    %v6264 = vunpack.c.l.b16 %v6001
    %v6265 = vunpack.c.l.b16 %v6002
    %v6266 = vunpack.c.l.b16 %v6003
    %v6267 = vunpack.c.l.b16 %v6004
    %v6268 = vunpack.c.l.b16 %v6005
    %v6269 = vunpack.c.l.b16 %v6006
    %v6270 = vunpack.c.l.b16 %v6007
    %v6271 = vunpack.c.l.b16 %v6008
    %v6272 = vunpack.c.l.b16 %v6009
    %v6273 = vunpack.c.l.b16 %v6010
    %v6274 = vunpack.c.l.b16 %v6011
    %v6275 = vunpack.c.l.b16 %v6012
    %v6276 = vunpack.c.l.b16 %v6013
    %v6277 = vunpack.c.l.b16 %v6014
    %v6278 = vunpack.c.l.b16 %v6015
    %v6279 = vunpack.c.l.b16 %v6016
    %v6280 = vunpack.c.l.b16 %v6017
    %v6281 = vunpack.c.l.b16 %v6018
    %v6282 = vunpack.c.l.b16 %v6019
    %v6283 = vunpack.c.l.b16 %v6020
    %v6284 = vunpack.c.l.b16 %v6021
    %v6285 = vunpack.c.l.b16 %v6022
    %v6286 = vunpack.c.l.b16 %v6023
    %v6287 = vunpack.c.l.b16 %v6024
    %v6288 = vunpack.c.l.b16 %v6025
    %v6289 = vunpack.c.l.b16 %v6026
    %v6290 = vunpack.c.l.b16 %v6027
    %v6291 = vunpack.c.l.b16 %v6028
    %v6292 = vunpack.c.l.b16 %v6029
    %v6293 = vunpack.c.l.b16 %v6030
    %v6294 = vunpack.c.l.b16 %v6031
    %v6295 = vunpack.c.l.b16 %v6032
    %v6296 = vunpack.c.l.b16 %v6033
    %v6297 = vunpack.c.l.b16 %v6034
    %v6298 = vunpack.c.l.b16 %v6035
    %v6299 = vunpack.c.l.b16 %v6036
    %v6300 = vunpack.c.l.b16 %v6037
    %v6301 = vunpack.c.l.b16 %v6038
    %v6302 = vunpack.c.l.b16 %v6039
    %v6303 = vunpack.c.l.b16 %v6040
    %v6304 = vunpack.c.l.b16 %v6041
    %v6305 = vunpack.c.l.b16 %v6042
    %v6306 = vunpack.c.l.b16 %v6043
    %v6307 = vunpack.c.l.b16 %v6044
    %v6308 = vunpack.c.l.b16 %v6045
    %v6309 = vunpack.c.l.b16 %v6046
    %v6310 = vunpack.c.l.b16 %v6047
    %v6311 = vunpack.c.l.b16 %v6048
    %v6312 = vunpack.c.l.b16 %v6049
    %v6313 = vunpack.c.l.b16 %v6050
    %v6314 = vunpack.c.l.b16 %v6051
    %v6315 = vunpack.c.l.b16 %v6052
    %v6316 = vunpack.c.l.b16 %v6053
    %v6317 = vunpack.c.l.b16 %v6054
    %v6318 = vunpack.c.l.b16 %v6055
    %v6319 = vunpack.c.l.b16 %v6056
    %v6320 = vunpack.c.l.b16 %v6057
    %v6321 = vunpack.c.l.b16 %v6058
    %v6322 = vunpack.c.l.b16 %v6059
    %v6323 = vunpack.c.l.b16 %v6060
    %v6324 = vunpack.c.l.b16 %v6061
    %v6325 = vunpack.c.l.b16 %v6062
    %v6326 = vunpack.c.l.b16 %v6063
    %v6327 = vunpack.c.l.b16 %v6064
    %v6328 = vunpack.c.l.b16 %v6065
    %v6329 = vunpack.c.l.b16 %v6066
    %v6330 = vunpack.c.l.b16 %v6067
    %v6331 = vunpack.c.l.b16 %v6068
    %v6332 = vunpack.c.l.b16 %v6069
    %v6333 = vunpack.c.l.b16 %v6070
    %v6334 = vunpack.c.l.b16 %v6071
    %v6335 = vunpack.c.l.b16 %v6072
    %v6336 = vunpack.c.l.b16 %v6073
    %v6337 = vunpack.c.l.b16 %v6074
    %v6338 = vunpack.c.l.b16 %v6075
    %v6339 = vunpack.c.l.b16 %v6076
    %v6340 = vunpack.c.l.b16 %v6077
    %v6341 = vunpack.c.l.b16 %v6078
    %v6342 = vunpack.c.l.b16 %v6079
    %v6343 = vunpack.c.l.b16 %v6080
    %v6344 = vunpack.c.l.b16 %v6081
    %v6345 = vunpack.c.l.b16 %v6082
    %v6346 = vunpack.c.l.b16 %v6083
    %v6347 = vunpack.c.l.b16 %v6084
    %v6348 = vunpack.c.l.b16 %v6085
    %v6349 = vunpack.c.l.b16 %v6086
    %v6350 = vunpack.c.l.b16 %v6087
    %v6351 = vunpack.c.l.b16 %v6088
    %v6352 = vunpack.c.l.b16 %v6089
    %v6353 = vunpack.c.l.b16 %v6090
    %v6354 = vunpack.c.l.b16 %v6091
    %v6355 = vunpack.c.l.b16 %v6092
    %v6356 = vunpack.c.l.b16 %v6093
    %v6357 = vunpack.c.l.b16 %v6094
    %v6358 = vunpack.c.l.b16 %v6095
    %v6359 = vunpack.c.l.b16 %v6096
    %v6360 = vunpack.c.l.b16 %v6097
    %v6361 = vunpack.c.l.b16 %v6098
    %v6362 = vpack.c.b16 %v6235, %v6234
    %v6363 = vpack.c.b16 %v6237, %v6236
    %v6364 = vpack.c.b16 %v6239, %v6238
    %v6365 = vpack.c.b16 %v6241, %v6240
    %v6366 = vpack.c.b16 %v6243, %v6242
    %v6367 = vpack.c.b16 %v6245, %v6244
    %v6368 = vpack.c.b16 %v6247, %v6246
    %v6369 = vpack.c.b16 %v6249, %v6248
    %v6370 = vpack.c.b16 %v6251, %v6250
    %v6371 = vpack.c.b16 %v6253, %v6252
    %v6372 = vpack.c.b16 %v6255, %v6254
    %v6373 = vpack.c.b16 %v6257, %v6256
    %v6374 = vpack.c.b16 %v6259, %v6258
    %v6375 = vpack.c.b16 %v6261, %v6260
    %v6376 = vpack.c.b16 %v6263, %v6262
    %v6377 = vpack.c.b16 %v6265, %v6264
    %v6378 = vpack.c.b16 %v6267, %v6266
    %v6379 = vpack.c.b16 %v6269, %v6268
    %v6380 = vpack.c.b16 %v6271, %v6270
    %v6381 = vpack.c.b16 %v6273, %v6272
    %v6382 = vpack.c.b16 %v6275, %v6274
    %v6383 = vpack.c.b16 %v6277, %v6276
    %v6384 = vpack.c.b16 %v6279, %v6278
    %v6385 = vpack.c.b16 %v6281, %v6280
    %v6386 = vpack.c.b16 %v6283, %v6282
    %v6387 = vpack.c.b16 %v6285, %v6284
    %v6388 = vpack.c.b16 %v6287, %v6286
    %v6389 = vpack.c.b16 %v6289, %v6288
    %v6390 = vpack.c.b16 %v6291, %v6290
    %v6391 = vpack.c.b16 %v6293, %v6292
    %v6392 = vpack.c.b16 %v6295, %v6294
    %v6393 = vpack.c.b16 %v6297, %v6296
    %v6394 = vpack.c.b16 %v6299, %v6298
    %v6395 = vpack.c.b16 %v6301, %v6300
    %v6396 = vpack.c.b16 %v6303, %v6302
    %v6397 = vpack.c.b16 %v6305, %v6304
    %v6398 = vpack.c.b16 %v6307, %v6306
    %v6399 = vpack.c.b16 %v6309, %v6308
    %v6400 = vpack.c.b16 %v6311, %v6310
    %v6401 = vpack.c.b16 %v6313, %v6312
    %v6402 = vpack.c.b16 %v6315, %v6314
    %v6403 = vpack.c.b16 %v6317, %v6316
    %v6404 = vpack.c.b16 %v6319, %v6318
    %v6405 = vpack.c.b16 %v6321, %v6320
    %v6406 = vpack.c.b16 %v6323, %v6322
    %v6407 = vpack.c.b16 %v6325, %v6324
    %v6408 = vpack.c.b16 %v6327, %v6326
    %v6409 = vpack.c.b16 %v6329, %v6328
    %v6410 = vpack.c.b16 %v6331, %v6330
    %v6411 = vpack.c.b16 %v6333, %v6332
    %v6412 = vpack.c.b16 %v6335, %v6334
    %v6413 = vpack.c.b16 %v6337, %v6336
    %v6414 = vpack.c.b16 %v6339, %v6338
    %v6415 = vpack.c.b16 %v6341, %v6340
    %v6416 = vpack.c.b16 %v6343, %v6342
    %v6417 = vpack.c.b16 %v6345, %v6344
    %v6418 = vpack.c.b16 %v6347, %v6346
    %v6419 = vpack.c.b16 %v6349, %v6348
    %v6420 = vpack.c.b16 %v6351, %v6350
    %v6421 = vpack.c.b16 %v6353, %v6352
    %v6422 = vpack.c.b16 %v6355, %v6354
    %v6423 = vpack.c.b16 %v6357, %v6356
    %v6424 = vpack.c.b16 %v6359, %v6358
    %v6425 = vpack.c.b16 %v6361, %v6360
    %6490 = vmatprep.subr.bf16.mxu0 0
    %6491 = vmatpush1.bf16.msra.mxu0 %v6362
    %6492 = vmatprep.subr.bf16.mxu0 0
    %6493 = vmatpush1.bf16.msra.mxu0 %v6363
    %6494 = vmatprep.subr.bf16.mxu0 0
    %6495 = vmatpush1.bf16.msra.mxu0 %v6364
    %6496 = vmatprep.subr.bf16.mxu0 0
    %6497 = vmatpush1.bf16.msra.mxu0 %v6365
    %6498 = vmatprep.subr.bf16.mxu0 0
    %6499 = vmatpush1.bf16.msra.mxu0 %v6366
    %6500 = vmatprep.subr.bf16.mxu0 0
    %6501 = vmatpush1.bf16.msra.mxu0 %v6367
    %6502 = vmatprep.subr.bf16.mxu0 0
    %6503 = vmatpush1.bf16.msra.mxu0 %v6368
    %6504 = vmatprep.subr.bf16.mxu0 0
    %6505 = vmatpush1.bf16.msra.mxu0 %v6369
    %6506 = vmatprep.subr.bf16.mxu0 0
    %6507 = vmatpush1.bf16.msra.mxu0 %v6370
    %6508 = vmatprep.subr.bf16.mxu0 0
    %6509 = vmatpush1.bf16.msra.mxu0 %v6371
    %6510 = vmatprep.subr.bf16.mxu0 0
    %6511 = vmatpush1.bf16.msra.mxu0 %v6372
    %6512 = vmatprep.subr.bf16.mxu0 0
    %6513 = vmatpush1.bf16.msra.mxu0 %v6373
    %6514 = vmatprep.subr.bf16.mxu0 0
    %6515 = vmatpush1.bf16.msra.mxu0 %v6374
    %6516 = vmatprep.subr.bf16.mxu0 0
    %6517 = vmatpush1.bf16.msra.mxu0 %v6375
    %6518 = vmatprep.subr.bf16.mxu0 0
    %6519 = vmatpush1.bf16.msra.mxu0 %v6376
    %6520 = vmatprep.subr.bf16.mxu0 0
    %6521 = vmatpush1.bf16.msra.mxu0 %v6377
    %6522 = vmatprep.mubr.bf16.mxu0 %v5524
    %6523 = vmatmul.mubr.bf16.gmra.mrb[0].mxu0 %v5523
    %v6524 = vpop.f32.mrb[0].mxu0
    %v6525 = vadd.f32 %v6104, %v6524
    %v6526 = vpop.f32.mrb[0].mxu0
    %v6527 = vpop.f32.mrb[0].mxu0
    %v6528 = vadd.f32 %v6104, %v6527
    %v6529 = vpop.f32.mrb[0].mxu0
    %6530 = vmatprep.mubr.bf16.mxu0 %v5532
    %6531 = vmatmul.mubr.bf16.gmra.mrb[0].mxu0 %v5531
    %v6532 = vpop.f32.mrb[0].mxu0
    %v6533 = vadd.f32 %v6104, %v6532
    %v6534 = vpop.f32.mrb[0].mxu0
    %v6535 = vpop.f32.mrb[0].mxu0
    %v6536 = vadd.f32 %v6104, %v6535
    %v6537 = vpop.f32.mrb[0].mxu0
    %6538 = vmatprep.mubr.bf16.mxu0 %v5540
    %6539 = vmatmul.mubr.bf16.gmra.mrb[0].mxu0 %v5539
    %v6540 = vpop.f32.mrb[0].mxu0
    %v6541 = vadd.f32 %v6104, %v6540
    %v6542 = vpop.f32.mrb[0].mxu0
    %v6543 = vpop.f32.mrb[0].mxu0
    %v6544 = vadd.f32 %v6104, %v6543
    %v6545 = vpop.f32.mrb[0].mxu0
    %6546 = vmatprep.mubr.bf16.mxu0 %v5548
    %6547 = vmatmul.mubr.bf16.gmra.mrb[0].mxu0 %v5547
    %v6548 = vpop.f32.mrb[0].mxu0
    %v6549 = vadd.f32 %v6104, %v6548
    %v6550 = vpop.f32.mrb[0].mxu0
    %v6551 = vpop.f32.mrb[0].mxu0
    %v6552 = vadd.f32 %v6104, %v6551
    %v6553 = vpop.f32.mrb[0].mxu0
    %6554 = vmatprep.mubr.bf16.mxu0 %v5556
    %6555 = vmatmul.mubr.bf16.gmra.mrb[0].mxu0 %v5555
    %v6556 = vpop.f32.mrb[0].mxu0
    %v6557 = vadd.f32 %v6104, %v6556
    %v6558 = vpop.f32.mrb[0].mxu0
    %v6559 = vpop.f32.mrb[0].mxu0
    %v6560 = vadd.f32 %v6104, %v6559
    %v6561 = vpop.f32.mrb[0].mxu0
    %6562 = vmatprep.mubr.bf16.mxu0 %v5564
    %6563 = vmatmul.mubr.bf16.gmra.mrb[0].mxu0 %v5563
    %v6564 = vpop.f32.mrb[0].mxu0
    %v6565 = vadd.f32 %v6104, %v6564
    %v6566 = vpop.f32.mrb[0].mxu0
    %v6567 = vpop.f32.mrb[0].mxu0
    %v6568 = vadd.f32 %v6104, %v6567
    %v6569 = vpop.f32.mrb[0].mxu0
    %6570 = vmatprep.mubr.bf16.mxu0 %v5572
    %6571 = vmatmul.mubr.bf16.gmra.mrb[0].mxu0 %v5571
    %v6572 = vpop.f32.mrb[0].mxu0
    %v6573 = vadd.f32 %v6104, %v6572
    %v6574 = vpop.f32.mrb[0].mxu0
    %v6575 = vpop.f32.mrb[0].mxu0
    %v6576 = vadd.f32 %v6104, %v6575
    %v6577 = vpop.f32.mrb[0].mxu0
    %6578 = vmatprep.mubr.bf16.mxu0 %v5580
    %6579 = vmatmul.mubr.bf16.gmra.mrb[0].mxu0 %v5579
    %v6580 = vpop.f32.mrb[0].mxu0
    %v6581 = vadd.f32 %v6104, %v6580
    %v6582 = vpop.f32.mrb[0].mxu0
    %v6583 = vpop.f32.mrb[0].mxu0
    %v6584 = vadd.f32 %v6104, %v6583
    %v6585 = vpop.f32.mrb[0].mxu0
    %6586 = vdwg.mxu0
    %6587 = vmatprep.subr.bf16.mxu0 0
    %6588 = vmatpush1.bf16.msra.mxu0 %v6378
    %6589 = vmatprep.subr.bf16.mxu0 0
    %6590 = vmatpush1.bf16.msra.mxu0 %v6379
    %6591 = vmatprep.subr.bf16.mxu0 0
    %6592 = vmatpush1.bf16.msra.mxu0 %v6380
    %6593 = vmatprep.subr.bf16.mxu0 0
    %6594 = vmatpush1.bf16.msra.mxu0 %v6381
    %6595 = vmatprep.subr.bf16.mxu0 0
    %6596 = vmatpush1.bf16.msra.mxu0 %v6382
    %6597 = vmatprep.subr.bf16.mxu0 0
    %6598 = vmatpush1.bf16.msra.mxu0 %v6383
    %6599 = vmatprep.subr.bf16.mxu0 0
    %6600 = vmatpush1.bf16.msra.mxu0 %v6384
    %6601 = vmatprep.subr.bf16.mxu0 0
    %6602 = vmatpush1.bf16.msra.mxu0 %v6385
    %6603 = vmatprep.subr.bf16.mxu0 0
    %6604 = vmatpush1.bf16.msra.mxu0 %v6386
    %6605 = vmatprep.subr.bf16.mxu0 0
    %6606 = vmatpush1.bf16.msra.mxu0 %v6387
    %6607 = vmatprep.subr.bf16.mxu0 0
    %6608 = vmatpush1.bf16.msra.mxu0 %v6388
    %6609 = vmatprep.subr.bf16.mxu0 0
    %6610 = vmatpush1.bf16.msra.mxu0 %v6389
    %6611 = vmatprep.subr.bf16.mxu0 0
    %6612 = vmatpush1.bf16.msra.mxu0 %v6390
    %6613 = vmatprep.subr.bf16.mxu0 0
    %6614 = vmatpush1.bf16.msra.mxu0 %v6391
    %6615 = vmatprep.subr.bf16.mxu0 0
    %6616 = vmatpush1.bf16.msra.mxu0 %v6392
    %6617 = vmatprep.subr.bf16.mxu0 0
    %6618 = vmatpush1.bf16.msra.mxu0 %v6393
    %6619 = vmatprep.mubr.bf16.mxu0 %v5526
    %6620 = vmatmul.mubr.bf16.gmra.mrb[0].mxu0 %v5525
    %v6621 = vpop.f32.mrb[0].mxu0
    %v6622 = vadd.f32 %v6525, %v6621
    %v6623 = vpop.f32.mrb[0].mxu0
    %v6624 = vpop.f32.mrb[0].mxu0
    %v6625 = vadd.f32 %v6528, %v6624
    %v6626 = vpop.f32.mrb[0].mxu0
    %6627 = vmatprep.mubr.bf16.mxu0 %v5534
    %6628 = vmatmul.mubr.bf16.gmra.mrb[0].mxu0 %v5533
    %v6629 = vpop.f32.mrb[0].mxu0
    %v6630 = vadd.f32 %v6533, %v6629
    %v6631 = vpop.f32.mrb[0].mxu0
    %v6632 = vpop.f32.mrb[0].mxu0
    %v6633 = vadd.f32 %v6536, %v6632
    %v6634 = vpop.f32.mrb[0].mxu0
    %6635 = vmatprep.mubr.bf16.mxu0 %v5542
    %6636 = vmatmul.mubr.bf16.gmra.mrb[0].mxu0 %v5541
    %v6637 = vpop.f32.mrb[0].mxu0
    %v6638 = vadd.f32 %v6541, %v6637
    %v6639 = vpop.f32.mrb[0].mxu0
    %v6640 = vpop.f32.mrb[0].mxu0
    %v6641 = vadd.f32 %v6544, %v6640
    %v6642 = vpop.f32.mrb[0].mxu0
    %6643 = vmatprep.mubr.bf16.mxu0 %v5550
    %6644 = vmatmul.mubr.bf16.gmra.mrb[0].mxu0 %v5549
    %v6645 = vpop.f32.mrb[0].mxu0
    %v6646 = vadd.f32 %v6549, %v6645
    %v6647 = vpop.f32.mrb[0].mxu0
    %v6648 = vpop.f32.mrb[0].mxu0
    %v6649 = vadd.f32 %v6552, %v6648
    %v6650 = vpop.f32.mrb[0].mxu0
    %6651 = vmatprep.mubr.bf16.mxu0 %v5558
    %6652 = vmatmul.mubr.bf16.gmra.mrb[0].mxu0 %v5557
    %v6653 = vpop.f32.mrb[0].mxu0
    %v6654 = vadd.f32 %v6557, %v6653
    %v6655 = vpop.f32.mrb[0].mxu0
    %v6656 = vpop.f32.mrb[0].mxu0
    %v6657 = vadd.f32 %v6560, %v6656
    %v6658 = vpop.f32.mrb[0].mxu0
    %6659 = vmatprep.mubr.bf16.mxu0 %v5566
    %6660 = vmatmul.mubr.bf16.gmra.mrb[0].mxu0 %v5565
    %v6661 = vpop.f32.mrb[0].mxu0
    %v6662 = vadd.f32 %v6565, %v6661
    %v6663 = vpop.f32.mrb[0].mxu0
    %v6664 = vpop.f32.mrb[0].mxu0
    %v6665 = vadd.f32 %v6568, %v6664
    %v6666 = vpop.f32.mrb[0].mxu0
    %6667 = vmatprep.mubr.bf16.mxu0 %v5574
    %6668 = vmatmul.mubr.bf16.gmra.mrb[0].mxu0 %v5573
    %v6669 = vpop.f32.mrb[0].mxu0
    %v6670 = vadd.f32 %v6573, %v6669
    %v6671 = vpop.f32.mrb[0].mxu0
    %v6672 = vpop.f32.mrb[0].mxu0
    %v6673 = vadd.f32 %v6576, %v6672
    %v6674 = vpop.f32.mrb[0].mxu0
    %6675 = vmatprep.mubr.bf16.mxu0 %v5582
    %6676 = vmatmul.mubr.bf16.gmra.mrb[0].mxu0 %v5581
    %v6677 = vpop.f32.mrb[0].mxu0
    %v6678 = vadd.f32 %v6581, %v6677
    %v6679 = vpop.f32.mrb[0].mxu0
    %v6680 = vpop.f32.mrb[0].mxu0
    %v6681 = vadd.f32 %v6584, %v6680
    %v6682 = vpop.f32.mrb[0].mxu0
    %6683 = vdwg.mxu0
    %6684 = vmatprep.subr.bf16.mxu0 0
    %6685 = vmatpush1.bf16.msra.mxu0 %v6394
    %6686 = vmatprep.subr.bf16.mxu0 0
    %6687 = vmatpush1.bf16.msra.mxu0 %v6395
    %6688 = vmatprep.subr.bf16.mxu0 0
    %6689 = vmatpush1.bf16.msra.mxu0 %v6396
    %6690 = vmatprep.subr.bf16.mxu0 0
    %6691 = vmatpush1.bf16.msra.mxu0 %v6397
    %6692 = vmatprep.subr.bf16.mxu0 0
    %6693 = vmatpush1.bf16.msra.mxu0 %v6398
    %6694 = vmatprep.subr.bf16.mxu0 0
    %6695 = vmatpush1.bf16.msra.mxu0 %v6399
    %6696 = vmatprep.subr.bf16.mxu0 0
    %6697 = vmatpush1.bf16.msra.mxu0 %v6400
    %6698 = vmatprep.subr.bf16.mxu0 0
    %6699 = vmatpush1.bf16.msra.mxu0 %v6401
    %6700 = vmatprep.subr.bf16.mxu0 0
    %6701 = vmatpush1.bf16.msra.mxu0 %v6402
    %6702 = vmatprep.subr.bf16.mxu0 0
    %6703 = vmatpush1.bf16.msra.mxu0 %v6403
    %6704 = vmatprep.subr.bf16.mxu0 0
    %6705 = vmatpush1.bf16.msra.mxu0 %v6404
    %6706 = vmatprep.subr.bf16.mxu0 0
    %6707 = vmatpush1.bf16.msra.mxu0 %v6405
    %6708 = vmatprep.subr.bf16.mxu0 0
    %6709 = vmatpush1.bf16.msra.mxu0 %v6406
    %6710 = vmatprep.subr.bf16.mxu0 0
    %6711 = vmatpush1.bf16.msra.mxu0 %v6407
    %6712 = vmatprep.subr.bf16.mxu0 0
    %6713 = vmatpush1.bf16.msra.mxu0 %v6408
    %6714 = vmatprep.subr.bf16.mxu0 0
    %6715 = vmatpush1.bf16.msra.mxu0 %v6409
    %6716 = vmatprep.mubr.bf16.mxu0 %v5528
    %6717 = vmatmul.mubr.bf16.gmra.mrb[0].mxu0 %v5527
    %v6718 = vpop.f32.mrb[0].mxu0
    %v6719 = vadd.f32 %v6622, %v6718
    %v6720 = vpop.f32.mrb[0].mxu0
    %v6721 = vpop.f32.mrb[0].mxu0
    %v6722 = vadd.f32 %v6625, %v6721
    %v6723 = vpop.f32.mrb[0].mxu0
    %6724 = vmatprep.mubr.bf16.mxu0 %v5536
    %6725 = vmatmul.mubr.bf16.gmra.mrb[0].mxu0 %v5535
    %v6726 = vpop.f32.mrb[0].mxu0
    %v6727 = vadd.f32 %v6630, %v6726
    %v6728 = vpop.f32.mrb[0].mxu0
    %v6729 = vpop.f32.mrb[0].mxu0
    %v6730 = vadd.f32 %v6633, %v6729
    %v6731 = vpop.f32.mrb[0].mxu0
    %6732 = vmatprep.mubr.bf16.mxu0 %v5544
    %6733 = vmatmul.mubr.bf16.gmra.mrb[0].mxu0 %v5543
    %v6734 = vpop.f32.mrb[0].mxu0
    %v6735 = vadd.f32 %v6638, %v6734
    %v6736 = vpop.f32.mrb[0].mxu0
    %v6737 = vpop.f32.mrb[0].mxu0
    %v6738 = vadd.f32 %v6641, %v6737
    %v6739 = vpop.f32.mrb[0].mxu0
    %6740 = vmatprep.mubr.bf16.mxu0 %v5552
    %6741 = vmatmul.mubr.bf16.gmra.mrb[0].mxu0 %v5551
    %v6742 = vpop.f32.mrb[0].mxu0
    %v6743 = vadd.f32 %v6646, %v6742
    %v6744 = vpop.f32.mrb[0].mxu0
    %v6745 = vpop.f32.mrb[0].mxu0
    %v6746 = vadd.f32 %v6649, %v6745
    %v6747 = vpop.f32.mrb[0].mxu0
    %6748 = vmatprep.mubr.bf16.mxu0 %v5560
    %6749 = vmatmul.mubr.bf16.gmra.mrb[0].mxu0 %v5559
    %v6750 = vpop.f32.mrb[0].mxu0
    %v6751 = vadd.f32 %v6654, %v6750
    %v6752 = vpop.f32.mrb[0].mxu0
    %v6753 = vpop.f32.mrb[0].mxu0
    %v6754 = vadd.f32 %v6657, %v6753
    %v6755 = vpop.f32.mrb[0].mxu0
    %6756 = vmatprep.mubr.bf16.mxu0 %v5568
    %6757 = vmatmul.mubr.bf16.gmra.mrb[0].mxu0 %v5567
    %v6758 = vpop.f32.mrb[0].mxu0
    %v6759 = vadd.f32 %v6662, %v6758
    %v6760 = vpop.f32.mrb[0].mxu0
    %v6761 = vpop.f32.mrb[0].mxu0
    %v6762 = vadd.f32 %v6665, %v6761
    %v6763 = vpop.f32.mrb[0].mxu0
    %6764 = vmatprep.mubr.bf16.mxu0 %v5576
    %6765 = vmatmul.mubr.bf16.gmra.mrb[0].mxu0 %v5575
    %v6766 = vpop.f32.mrb[0].mxu0
    %v6767 = vadd.f32 %v6670, %v6766
    %v6768 = vpop.f32.mrb[0].mxu0
    %v6769 = vpop.f32.mrb[0].mxu0
    %v6770 = vadd.f32 %v6673, %v6769
    %v6771 = vpop.f32.mrb[0].mxu0
    %6772 = vmatprep.mubr.bf16.mxu0 %v5584
    %6773 = vmatmul.mubr.bf16.gmra.mrb[0].mxu0 %v5583
    %v6774 = vpop.f32.mrb[0].mxu0
    %v6775 = vadd.f32 %v6678, %v6774
    %v6776 = vpop.f32.mrb[0].mxu0
    %v6777 = vpop.f32.mrb[0].mxu0
    %v6778 = vadd.f32 %v6681, %v6777
    %v6779 = vpop.f32.mrb[0].mxu0
    %6780 = vdwg.mxu0
    %6781 = vmatprep.subr.bf16.mxu0 0
    %6782 = vmatpush1.bf16.msra.mxu0 %v6410
    %6783 = vmatprep.subr.bf16.mxu0 0
    %6784 = vmatpush1.bf16.msra.mxu0 %v6411
    %6785 = vmatprep.subr.bf16.mxu0 0
    %6786 = vmatpush1.bf16.msra.mxu0 %v6412
    %6787 = vmatprep.subr.bf16.mxu0 0
    %6788 = vmatpush1.bf16.msra.mxu0 %v6413
    %6789 = vmatprep.subr.bf16.mxu0 0
    %6790 = vmatpush1.bf16.msra.mxu0 %v6414
    %6791 = vmatprep.subr.bf16.mxu0 0
    %6792 = vmatpush1.bf16.msra.mxu0 %v6415
    %6793 = vmatprep.subr.bf16.mxu0 0
    %6794 = vmatpush1.bf16.msra.mxu0 %v6416
    %6795 = vmatprep.subr.bf16.mxu0 0
    %6796 = vmatpush1.bf16.msra.mxu0 %v6417
    %6797 = vmatprep.subr.bf16.mxu0 0
    %6798 = vmatpush1.bf16.msra.mxu0 %v6418
    %6799 = vmatprep.subr.bf16.mxu0 0
    %6800 = vmatpush1.bf16.msra.mxu0 %v6419
    %6801 = vmatprep.subr.bf16.mxu0 0
    %6802 = vmatpush1.bf16.msra.mxu0 %v6420
    %6803 = vmatprep.subr.bf16.mxu0 0
    %6804 = vmatpush1.bf16.msra.mxu0 %v6421
    %6805 = vmatprep.subr.bf16.mxu0 0
    %6806 = vmatpush1.bf16.msra.mxu0 %v6422
    %6807 = vmatprep.subr.bf16.mxu0 0
    %6808 = vmatpush1.bf16.msra.mxu0 %v6423
    %6809 = vmatprep.subr.bf16.mxu0 0
    %6810 = vmatpush1.bf16.msra.mxu0 %v6424
    %6811 = vmatprep.subr.bf16.mxu0 0
    %6812 = vmatpush1.bf16.msra.mxu0 %v6425
    %6813 = vmatprep.mubr.bf16.mxu0 %v5530
    %6814 = vmatmul.mubr.bf16.gmra.mrb[0].mxu0 %v5529
    %v6815 = vpop.f32.mrb[0].mxu0
    %v6816 = vadd.f32 %v6719, %v6815
    %v6817 = vpop.f32.mrb[0].mxu0
    %v6818 = vpop.f32.mrb[0].mxu0
    %v6819 = vadd.f32 %v6722, %v6818
    %v6820 = vpop.f32.mrb[0].mxu0
    %6821 = vmatprep.mubr.bf16.mxu0 %v5538
    %6822 = vmatmul.mubr.bf16.gmra.mrb[0].mxu0 %v5537
    %v6823 = vpop.f32.mrb[0].mxu0
    %v6824 = vadd.f32 %v6727, %v6823
    %v6825 = vpop.f32.mrb[0].mxu0
    %v6826 = vpop.f32.mrb[0].mxu0
    %v6827 = vadd.f32 %v6730, %v6826
    %v6828 = vpop.f32.mrb[0].mxu0
    %6829 = vmatprep.mubr.bf16.mxu0 %v5546
    %6830 = vmatmul.mubr.bf16.gmra.mrb[0].mxu0 %v5545
    %v6831 = vpop.f32.mrb[0].mxu0
    %v6832 = vadd.f32 %v6735, %v6831
    %v6833 = vpop.f32.mrb[0].mxu0
    %v6834 = vpop.f32.mrb[0].mxu0
    %v6835 = vadd.f32 %v6738, %v6834
    %v6836 = vpop.f32.mrb[0].mxu0
    %6837 = vmatprep.mubr.bf16.mxu0 %v5554
    %6838 = vmatmul.mubr.bf16.gmra.mrb[0].mxu0 %v5553
    %v6839 = vpop.f32.mrb[0].mxu0
    %v6840 = vadd.f32 %v6743, %v6839
    %v6841 = vpop.f32.mrb[0].mxu0
    %v6842 = vpop.f32.mrb[0].mxu0
    %v6843 = vadd.f32 %v6746, %v6842
    %v6844 = vpop.f32.mrb[0].mxu0
    %6845 = vmatprep.mubr.bf16.mxu0 %v5562
    %6846 = vmatmul.mubr.bf16.gmra.mrb[0].mxu0 %v5561
    %v6847 = vpop.f32.mrb[0].mxu0
    %v6848 = vadd.f32 %v6751, %v6847
    %v6849 = vpop.f32.mrb[0].mxu0
    %v6850 = vpop.f32.mrb[0].mxu0
    %v6851 = vadd.f32 %v6754, %v6850
    %v6852 = vpop.f32.mrb[0].mxu0
    %6853 = vmatprep.mubr.bf16.mxu0 %v5570
    %6854 = vmatmul.mubr.bf16.gmra.mrb[0].mxu0 %v5569
    %v6855 = vpop.f32.mrb[0].mxu0
    %v6856 = vadd.f32 %v6759, %v6855
    %v6857 = vpop.f32.mrb[0].mxu0
    %v6858 = vpop.f32.mrb[0].mxu0
    %v6859 = vadd.f32 %v6762, %v6858
    %v6860 = vpop.f32.mrb[0].mxu0
    %6861 = vmatprep.mubr.bf16.mxu0 %v5578
    %6862 = vmatmul.mubr.bf16.gmra.mrb[0].mxu0 %v5577
    %v6863 = vpop.f32.mrb[0].mxu0
    %v6864 = vadd.f32 %v6767, %v6863
    %v6865 = vpop.f32.mrb[0].mxu0
    %v6866 = vpop.f32.mrb[0].mxu0
    %v6867 = vadd.f32 %v6770, %v6866
    %v6868 = vpop.f32.mrb[0].mxu0
    %6869 = vmatprep.mubr.bf16.mxu0 %v5586
    %6870 = vmatmul.mubr.bf16.gmra.mrb[0].mxu0 %v5585
    %v6871 = vpop.f32.mrb[0].mxu0
    %v6872 = vadd.f32 %v6775, %v6871
    %v6873 = vpop.f32.mrb[0].mxu0
    %v6874 = vpop.f32.mrb[0].mxu0
    %v6875 = vadd.f32 %v6778, %v6874
    %v6876 = vpop.f32.mrb[0].mxu0
    %6877 = vdwg.mxu0
    %6878 = vmax.xlane.f32.xlu0 %v6816
    %v6879 = vpop.xlane.xlu0 %6878
    %6880 = vmax.xlane.f32.xlu0 %v6819
    %v6881 = vpop.xlane.xlu0 %6880
    %6882 = vmax.xlane.f32.xlu0 %v6824
    %v6883 = vpop.xlane.xlu0 %6882
    %6884 = vmax.xlane.f32.xlu0 %v6827
    %v6885 = vpop.xlane.xlu0 %6884
    %6886 = vmax.xlane.f32.xlu0 %v6832
    %v6887 = vpop.xlane.xlu0 %6886
    %6888 = vmax.xlane.f32.xlu0 %v6835
    %v6889 = vpop.xlane.xlu0 %6888
    %6890 = vmax.xlane.f32.xlu0 %v6840
    %v6891 = vpop.xlane.xlu0 %6890
    %6892 = vmax.xlane.f32.xlu0 %v6843
    %v6893 = vpop.xlane.xlu0 %6892
    %6894 = vmax.xlane.f32.xlu0 %v6848
    %v6895 = vpop.xlane.xlu0 %6894
    %6896 = vmax.xlane.f32.xlu0 %v6851
    %v6897 = vpop.xlane.xlu0 %6896
    %6898 = vmax.xlane.f32.xlu0 %v6856
    %v6899 = vpop.xlane.xlu0 %6898
    %6900 = vmax.xlane.f32.xlu0 %v6859
    %v6901 = vpop.xlane.xlu0 %6900
    %6902 = vmax.xlane.f32.xlu0 %v6864
    %v6903 = vpop.xlane.xlu0 %6902
    %6904 = vmax.xlane.f32.xlu0 %v6867
    %v6905 = vpop.xlane.xlu0 %6904
    %6906 = vmax.xlane.f32.xlu0 %v6872
    %v6907 = vpop.xlane.xlu0 %6906
    %6908 = vmax.xlane.f32.xlu0 %v6875
    %v6909 = vpop.xlane.xlu0 %6908
    %v6910 = vsub.f32 %v6816, %v6879
    %v6911 = vsub.f32 %v6819, %v6881
    %v6912 = vsub.f32 %v6824, %v6883
    %v6913 = vsub.f32 %v6827, %v6885
    %v6914 = vsub.f32 %v6832, %v6887
    %v6915 = vsub.f32 %v6835, %v6889
    %v6916 = vsub.f32 %v6840, %v6891
    %v6917 = vsub.f32 %v6843, %v6893
    %v6918 = vsub.f32 %v6848, %v6895
    %v6919 = vsub.f32 %v6851, %v6897
    %v6920 = vsub.f32 %v6856, %v6899
    %v6921 = vsub.f32 %v6859, %v6901
    %v6922 = vsub.f32 %v6864, %v6903
    %v6923 = vsub.f32 %v6867, %v6905
    %v6924 = vsub.f32 %v6872, %v6907
    %v6925 = vsub.f32 %v6875, %v6909
    %v6926 = vmul.f32 %v6910, 1.442695
    %v6927 = vpow.pop %v6926
    %v6928 = vmul.f32 %v6911, 1.442695
    %v6929 = vpow.pop %v6928
    %v6930 = vmul.f32 %v6912, 1.442695
    %v6931 = vpow.pop %v6930
    %v6932 = vmul.f32 %v6913, 1.442695
    %v6933 = vpow.pop %v6932
    %v6934 = vmul.f32 %v6914, 1.442695
    %v6935 = vpow.pop %v6934
    %v6936 = vmul.f32 %v6915, 1.442695
    %v6937 = vpow.pop %v6936
    %v6938 = vmul.f32 %v6916, 1.442695
    %v6939 = vpow.pop %v6938
    %v6940 = vmul.f32 %v6917, 1.442695
    %v6941 = vpow.pop %v6940
    %v6942 = vmul.f32 %v6918, 1.442695
    %v6943 = vpow.pop %v6942
    %v6944 = vmul.f32 %v6919, 1.442695
    %v6945 = vpow.pop %v6944
    %v6946 = vmul.f32 %v6920, 1.442695
    %v6947 = vpow.pop %v6946
    %v6948 = vmul.f32 %v6921, 1.442695
    %v6949 = vpow.pop %v6948
    %v6950 = vmul.f32 %v6922, 1.442695
    %v6951 = vpow.pop %v6950
    %v6952 = vmul.f32 %v6923, 1.442695
    %v6953 = vpow.pop %v6952
    %v6954 = vmul.f32 %v6924, 1.442695
    %v6955 = vpow.pop %v6954
    %v6956 = vmul.f32 %v6925, 1.442695
    %v6957 = vpow.pop %v6956
    %6958 = vadd.xlane.f32.xlu0 %v6927
    %v6959 = vpop.xlane.xlu0 %6958
    %6960 = vadd.xlane.f32.xlu0 %v6929
    %v6961 = vpop.xlane.xlu0 %6960
    %6962 = vadd.xlane.f32.xlu0 %v6931
    %v6963 = vpop.xlane.xlu0 %6962
    %6964 = vadd.xlane.f32.xlu0 %v6933
    %v6965 = vpop.xlane.xlu0 %6964
    %6966 = vadd.xlane.f32.xlu0 %v6935
    %v6967 = vpop.xlane.xlu0 %6966
    %6968 = vadd.xlane.f32.xlu0 %v6937
    %v6969 = vpop.xlane.xlu0 %6968
    %6970 = vadd.xlane.f32.xlu0 %v6939
    %v6971 = vpop.xlane.xlu0 %6970
    %6972 = vadd.xlane.f32.xlu0 %v6941
    %v6973 = vpop.xlane.xlu0 %6972
    %6974 = vadd.xlane.f32.xlu0 %v6943
    %v6975 = vpop.xlane.xlu0 %6974
    %6976 = vadd.xlane.f32.xlu0 %v6945
    %v6977 = vpop.xlane.xlu0 %6976
    %6978 = vadd.xlane.f32.xlu0 %v6947
    %v6979 = vpop.xlane.xlu0 %6978
    %6980 = vadd.xlane.f32.xlu0 %v6949
    %v6981 = vpop.xlane.xlu0 %6980
    %6982 = vadd.xlane.f32.xlu0 %v6951
    %v6983 = vpop.xlane.xlu0 %6982
    %6984 = vadd.xlane.f32.xlu0 %v6953
    %v6985 = vpop.xlane.xlu0 %6984
    %6986 = vadd.xlane.f32.xlu0 %v6955
    %v6987 = vpop.xlane.xlu0 %6986
    %6988 = vadd.xlane.f32.xlu0 %v6957
    %v6989 = vpop.xlane.xlu0 %6988
    %v6990 = vrcp.pop %v6959
    %v6991 = vrcp.pop %v6961
    %v6992 = vrcp.pop %v6963
    %v6993 = vrcp.pop %v6965
    %v6994 = vrcp.pop %v6967
    %v6995 = vrcp.pop %v6969
    %v6996 = vrcp.pop %v6971
    %v6997 = vrcp.pop %v6973
    %v6998 = vrcp.pop %v6975
    %v6999 = vrcp.pop %v6977
    %v7000 = vrcp.pop %v6979
    %v7001 = vrcp.pop %v6981
    %v7002 = vrcp.pop %v6983
    %v7003 = vrcp.pop %v6985
    %v7004 = vrcp.pop %v6987
    %v7005 = vrcp.pop %v6989
    %v7006 = vmul.f32 %v6927, %v6990
    %v7007 = vmul.f32 %v6929, %v6991
    %v7008 = vmul.f32 %v6931, %v6992
    %v7009 = vmul.f32 %v6933, %v6993
    %v7010 = vmul.f32 %v6935, %v6994
    %v7011 = vmul.f32 %v6937, %v6995
    %v7012 = vmul.f32 %v6939, %v6996
    %v7013 = vmul.f32 %v6941, %v6997
    %v7014 = vmul.f32 %v6943, %v6998
    %v7015 = vmul.f32 %v6945, %v6999
    %v7016 = vmul.f32 %v6947, %v7000
    %v7017 = vmul.f32 %v6949, %v7001
    %v7018 = vmul.f32 %v6951, %v7002
    %v7019 = vmul.f32 %v6953, %v7003
    %v7020 = vmul.f32 %v6955, %v7004
    %v7021 = vmul.f32 %v6957, %v7005
    %7022 = vst [vmem:[#allocation12] sm:$0xff] %v7006
    %7023 = vst [vmem:[#allocation12 + $0x8] sm:$0xff] %v7007
    %7024 = vst [vmem:[#allocation12 + $0x10] sm:$0xff] %v7008
    %7025 = vst [vmem:[#allocation12 + $0x18] sm:$0xff] %v7009
    %7026 = vst [vmem:[#allocation12 + $0x20] sm:$0xff] %v7010
    %7027 = vst [vmem:[#allocation12 + $0x28] sm:$0xff] %v7011
    %7028 = vst [vmem:[#allocation12 + $0x30] sm:$0xff] %v7012
    %7029 = vst [vmem:[#allocation12 + $0x38] sm:$0xff] %v7013
    %7030 = vst [vmem:[#allocation12 + $0x40] sm:$0xff] %v7014
    %7031 = vst [vmem:[#allocation12 + $0x48] sm:$0xff] %v7015
    %7032 = vst [vmem:[#allocation12 + $0x50] sm:$0xff] %v7016
    %7033 = vst [vmem:[#allocation12 + $0x58] sm:$0xff] %v7017
    %7034 = vst [vmem:[#allocation12 + $0x60] sm:$0xff] %v7018
    %7035 = vst [vmem:[#allocation12 + $0x68] sm:$0xff] %v7019
    %7036 = vst [vmem:[#allocation12 + $0x70] sm:$0xff] %v7020
    %7037 = vst [vmem:[#allocation12 + $0x78] sm:$0xff] %v7021
    // Predicated region
    $region42: #{instance_encoder_pallas.1} parent=1 // pred_check
      _
    $region43: #{instance_encoder_pallas.1} parent=1 // pred_check_branch
      %7039 = sbr.rel (0) target = $region45
    $region44: #{instance_encoder_pallas.1} parent=1 // pred_region
      %s7041 = ssub.s32 8192, 8192
      %7042 = vsyncadd [#allocation4], %s7041
      %s7043 = sshll.u32 [#allocation11], 4
      %s7044 = int_to_ptr.vmem [resolvable:$true] %s7043
      %7049 = dma.vmem_to_hbm [thread:$0]  %s7044, 8192, %s5, [#allocation4], 512, 512, 32
    $region45: #{instance_encoder_pallas.1} parent=1 // pred_fallthru
      _
    // Predicated region
    $region46: #{instance_encoder_pallas.1} parent=1 // pred_check
      _
    $region47: #{instance_encoder_pallas.1} parent=1 // pred_check_branch
      %7051 = sbr.rel (0) target = $region49
    $region48: #{instance_encoder_pallas.1} parent=1 // pred_region
      %s7053 = ssub.s32 2048, 2048
      %7054 = vsyncadd [#allocation13], %s7053
      %s7055 = sshll.u32 [#allocation12], 4
      %s7056 = int_to_ptr.vmem [resolvable:$true] %s7055
      %7061 = dma.vmem_to_hbm [thread:$0]  %s7056, 2048, %s6, [#allocation13], 128, 128, 8
    $region49: #{instance_encoder_pallas.1} parent=1 // pred_fallthru
      _
    // Predicated region
    $region50: #{instance_encoder_pallas.1} parent=1 // pred_check
      _
    $region51: #{instance_encoder_pallas.1} parent=1 // pred_check_branch
      %7063 = sbr.rel (0) target = $region53
    $region52: #{instance_encoder_pallas.1} parent=1 // pred_region
      %7064 = dma.done [#allocation4], 8192
    $region53: #{instance_encoder_pallas.1} parent=1 // pred_fallthru
      _
    // Predicated region
    $region54: #{instance_encoder_pallas.1} parent=1 // pred_check
      _
    $region55: #{instance_encoder_pallas.1} parent=1 // pred_check_branch
      %7066 = sbr.rel (0) target = $region57
    $region56: #{instance_encoder_pallas.1} parent=1 // pred_region
      %7067 = dma.done [#allocation13], 2048
    $region57: #{instance_encoder_pallas.1} parent=1 // pred_fallthru
      _
    %7068 = vsyncpa [#allocation3], 1
    %7069 = vsyncpa [#allocation6], 1
    %7070 = vsyncpa [#allocation9], 1
    %7071 = vsyncpa [#allocation4], 1
    %7072 = vsyncpa [#allocation13], 1

</llo_original>
